<compile_context>
chip_gen: v6e
topology: v6e:2x2x1
jax: 0.10.0
libtpu: 0.0.40
codegen_flags: <defaults>
</compile_context>

<pallas_src>
import functools

import numpy as np
import jax
import jax.numpy as jnp
from jax import lax
from jax.experimental import pallas as pl
from jax.experimental.pallas import tpu as pltpu


def _round_up(x, m):
    return (x + m - 1) // m * m


# ----------------------------------------------------------------------------
# The single fused Pallas kernel: entire Critic forward pass.
# ----------------------------------------------------------------------------
def _critic_fused_kernel(x0_ref, act_ref,
                         m1_ref, b1_ref,
                         m2_ref, b2_ref,
                         m3_ref, b3_ref,
                         wf1a_ref, wf1b_ref, bf1_ref,
                         wf2_ref, bf2_ref,
                         o_ref):
    f32 = jnp.float32
    # conv1 (as folded matmul) + bias + ReLU
    a1 = jnp.dot(x0_ref[...], m1_ref[...], preferred_element_type=f32) + b1_ref[...]
    a1 = jnp.maximum(a1, 0.0)
    # conv2 + bias + ReLU
    a2 = jnp.dot(a1, m2_ref[...], preferred_element_type=f32) + b2_ref[...]
    a2 = jnp.maximum(a2, 0.0)
    # conv3 + bias (no ReLU — matches the PyTorch Sequential)
    a3 = jnp.dot(a2, m3_ref[...], preferred_element_type=f32) + b3_ref[...]
    # fc1 over [features ++ action], concat replaced by split-K accumulation
    h = (jnp.dot(a3, wf1a_ref[...], preferred_element_type=f32)
         + jnp.dot(act_ref[...], wf1b_ref[...], preferred_element_type=f32)
         + bf1_ref[...])
    h = jnp.maximum(h, 0.0)
    # fc2
    o = jnp.dot(h, wf2_ref[...], preferred_element_type=f32) + bf2_ref[...]
    o_ref[...] = o.astype(o_ref.dtype)


# ----------------------------------------------------------------------------
# Parameter init (PyTorch layouts) and one-time folding into kernel operands.
# ----------------------------------------------------------------------------
def _conv_out(s):
    return (s - 3) // 2 + 1


def init_critic_params(key, input_shape, action_shape):
    c, h, w = input_shape
    h1, w1 = _conv_out(h), _conv_out(w)
    h2, w2 = _conv_out(h1), _conv_out(w1)
    h3, w3 = _conv_out(h2), _conv_out(w2)
    feature_size = 16 * h3 * w3
    ks = jax.random.split(key, 10)
    scale = 0.1

    def rnd(k, shape):
        return (scale * jax.random.normal(k, shape)).astype(jnp.float32)

    params = {
        # conv weights in PyTorch OIHW layout
        "w1": rnd(ks[0], (16, c, 3, 3)),  "b1": rnd(ks[1], (16,)),
        "w2": rnd(ks[2], (32, 16, 3, 3)), "b2": rnd(ks[3], (32,)),
        "w3": rnd(ks[4], (16, 32, 3, 3)), "b3": rnd(ks[5], (16,)),
        # fc weights stored as (in, out) == torch weight.T
        "wf1": rnd(ks[6], (feature_size + action_shape, 512)),
        "bf1": rnd(ks[7], (512,)),
        "wf2": rnd(ks[8], (512, 1)),
        "bf2": rnd(ks[9], (1,)),
    }
    return params, feature_size


def _conv_as_matrix(w_oihw, b, H, W, stride):
    """Fold Conv2d(k, stride, VALID) into a dense matrix on NCHW-flat rows."""
    w_np = np.asarray(w_oihw, np.float32)
    Cout, Cin, kh, kw = w_np.shape
    Ho = (H - kh) // stride + 1
    Wo = (W - kw) // stride + 1
    M = np.zeros((Cin * H * W, Cout * Ho * Wo), np.float32)
    ci_idx = np.arange(Cin)
    co_idx = np.arange(Cout)
    for ki in range(kh):
        for kj in range(kw):
            wt = w_np[:, :, ki, kj].T                      # (Cin, Cout)
            for ho in range(Ho):
                hh = stride * ho + ki
                for wo in range(Wo):
                    ww = stride * wo + kj
                    rows = ci_idx * (H * W) + hh * W + ww
                    cols = co_idx * (Ho * Wo) + ho * Wo + wo
                    M[np.ix_(rows, cols)] = wt
    bias = np.repeat(np.asarray(b, np.float32), Ho * Wo)   # NCHW-flat bias
    return M, bias, Ho, Wo


def _pad2(a, rows, cols):
    return np.pad(a, ((0, rows - a.shape[0]), (0, cols - a.shape[1])))


def prepare_kernel_params(params, input_shape, action_shape):
    """One-time: fold convs to matmuls, zero-pad everything to lane-dense
    (multiple-of-128) widths and matching K dims.  Not in the hot path."""
    c, h, w = input_shape
    m1, bb1, h1, w1 = _conv_as_matrix(params["w1"], params["b1"], h, w, 2)
    m2, bb2, h2, w2 = _conv_as_matrix(params["w2"], params["b2"], h1, w1, 2)
    m3, bb3, h3, w3 = _conv_as_matrix(params["w3"], params["b3"], h2, w2, 2)
    feat = 16 * h3 * w3

    k0 = c * h * w
    k0p = _round_up(k0, 128)
    n1p = _round_up(m1.shape[1], 128)
    n2p = _round_up(m2.shape[1], 128)
    n3p = _round_up(m3.shape[1], 128)
    ap = _round_up(action_shape, 128)
    n4 = _round_up(512, 128)
    n5p = _round_up(1, 128)

    wf1 = np.asarray(params["wf1"], np.float32)
    wf1a = wf1[:feat]          # rows multiplying the conv features
    wf1b = wf1[feat:]          # rows multiplying the action

    kp_np = {
        "m1": _pad2(m1, k0p, n1p),
        "b1": _pad2(bb1[None, :], 1, n1p),
        "m2": _pad2(m2, n1p, n2p),
        "b2": _pad2(bb2[None, :], 1, n2p),
        "m3": _pad2(m3, n2p, n3p),
        "b3": _pad2(bb3[None, :], 1, n3p),
        "wf1a": _pad2(wf1a, n3p, n4),
        "wf1b": _pad2(wf1b, ap, n4),
        "bf1": _pad2(np.asarray(params["bf1"], np.float32)[None, :], 1, n4),
        "wf2": _pad2(np.asarray(params["wf2"], np.float32), n4, n5p),
        "bf2": _pad2(np.asarray(params["bf2"], np.float32)[None, :], 1, n5p),
    }
    kparams = {k: jnp.asarray(v) for k, v in kp_np.items()}
    dims = {"k0": k0, "k0p": k0p, "a": action_shape, "ap": ap}
    return kparams, dims


# ----------------------------------------------------------------------------
# Forward pass: pad inputs, launch ONE fused pallas_call, slice result.
# ----------------------------------------------------------------------------
def critic_forward(kparams, dims, state_nchw, action):
    B = state_nchw.shape[0]
    x0 = jnp.asarray(state_nchw, jnp.float32).reshape(B, -1)   # NCHW flatten
    act = jnp.asarray(action, jnp.float32)

    # pad batch rows to sublane multiple; tile rows for large batches
    mp = _round_up(B, 8)
    if mp > 128:
        mp = _round_up(mp, 128)
        tm = 128
    else:
        tm = mp

    k0, k0p, ap = dims["k0"], dims["k0p"], dims["ap"]
    n1p = kparams["m1"].shape[1]
    n2p = kparams["m2"].shape[1]
    n3p = kparams["m3"].shape[1]
    n4 = kparams["wf1a"].shape[1]
    n5p = kparams["wf2"].shape[1]

    x0p = jnp.zeros((mp, k0p), jnp.float32).at[:B, :k0].set(x0)
    actp = jnp.zeros((mp, ap), jnp.float32).at[:B, :dims["a"]].set(act)

    def row_spec(cols):
        return pl.BlockSpec((tm, cols), lambda i: (i, 0))

    def full_spec(rows, cols):
        return pl.BlockSpec((rows, cols), lambda i: (0, 0))

    flops = 2 * mp * (k0p * n1p + n1p * n2p + n2p * n3p
                      + (n3p + ap) * n4 + n4 * n5p)
    bytes_accessed = 4 * (mp * (k0p + ap + n5p)
                          + k0p * n1p + n1p * n2p + n2p * n3p
                          + (n3p + ap) * n4 + n4 * n5p
                          + n1p + n2p + n3p + n4 + n5p)

    out = pl.pallas_call(
        _critic_fused_kernel,
        out_shape=jax.ShapeDtypeStruct((mp, n5p), jnp.float32),
        grid=(mp // tm,),
        in_specs=[
            row_spec(k0p),            # x0 (state, NCHW-flat, padded)
            row_spec(ap),             # action (padded)
            full_spec(k0p, n1p),      # conv1 matrix
            full_spec(1, n1p),        # conv1 bias
            full_spec(n1p, n2p),      # conv2 matrix
            full_spec(1, n2p),        # conv2 bias
            full_spec(n2p, n3p),      # conv3 matrix
            full_spec(1, n3p),        # conv3 bias
            full_spec(n3p, n4),       # fc1 weight (feature rows)
            full_spec(ap, n4),        # fc1 weight (action rows)
            full_spec(1, n4),         # fc1 bias
            full_spec(n4, n5p),       # fc2 weight
            full_spec(1, n5p),        # fc2 bias
        ],
        out_specs=row_spec(n5p),
        compiler_params=pltpu.CompilerParams(
            dimension_semantics=("parallel",),
            vmem_limit_bytes=64 * 1024 * 1024),
        cost_estimate=pl.CostEstimate(
            flops=flops, transcendentals=0, bytes_accessed=bytes_accessed),
    )(x0p, actp,
      kparams["m1"], kparams["b1"],
      kparams["m2"], kparams["b2"],
      kparams["m3"], kparams["b3"],
      kparams["wf1a"], kparams["wf1b"], kparams["bf1"],
      kparams["wf2"], kparams["bf2"])

    return out[:B, :1]


# ----------------------------------------------------------------------------
# Pure-JAX reference (PyTorch semantics) for a silent correctness check.
# ----------------------------------------------------------------------------
def critic_forward_ref(params, state_nchw, action):
    def conv_ref(x, w_oihw, b, relu):
        y = lax.conv_general_dilated(
            x, w_oihw, window_strides=(2, 2), padding="VALID",
            dimension_numbers=("NCHW", "OIHW", "NCHW"))
        y = y + b[None, :, None, None]
        return jnp.maximum(y, 0.0) if relu else y

    x = conv_ref(state_nchw, params["w1"], params["b1"], True)
    x = conv_ref(x, params["w2"], params["b2"], True)
    x = conv_ref(x, params["w3"], params["b3"], False)
    x = x.reshape(x.shape[0], -1)
    x = jnp.concatenate([x, action], axis=1)
    x = jnp.maximum(x @ params["wf1"] + params["bf1"], 0.0)
    x = x @ params["wf2"] + params["bf2"]
    return x


if __name__ == "__main__":
    input_shape = (4, 16, 16)   # (C, H, W)
    action_shape = 8
    batch = 2

    key = jax.random.PRNGKey(0)
    kparam_key, kstate, kaction = jax.random.split(key, 3)
    params, feat = init_critic_params(kparam_key, input_shape, action_shape)
    kparams, dims = prepare_kernel_params(params, input_shape, action_shape)

    state = jax.random.normal(kstate, (batch, *input_shape), dtype=jnp.float32)
    action = jax.random.normal(kaction, (batch, action_shape), dtype=jnp.float32)

    out = jax.block_until_ready(critic_forward(kparams, dims, state, action))
    ref = jax.block_until_ready(critic_forward_ref(params, state, action))

    assert out.shape == (batch, 1), out.shape
    assert jnp.allclose(out, ref, atol=1e-4, rtol=1e-4), (out, ref)

    print("KERNEL_OK")
</pallas_src>

<mosaic_0001>
module attributes {stable_mosaic.version = 11 : i64} {
  func.func @_critic_fused_kernel(%arg0: i32, %arg1: memref<8x1024xf32, #tpu.memory_space<vmem>>, %arg2: memref<8x128xf32, #tpu.memory_space<vmem>>, %arg3: memref<1024x896xf32, #tpu.memory_space<vmem>>, %arg4: memref<1x896xf32, #tpu.memory_space<vmem>>, %arg5: memref<896x384xf32, #tpu.memory_space<vmem>>, %arg6: memref<1x384xf32, #tpu.memory_space<vmem>>, %arg7: memref<384x128xf32, #tpu.memory_space<vmem>>, %arg8: memref<1x128xf32, #tpu.memory_space<vmem>>, %arg9: memref<128x512xf32, #tpu.memory_space<vmem>>, %arg10: memref<128x512xf32, #tpu.memory_space<vmem>>, %arg11: memref<1x512xf32, #tpu.memory_space<vmem>>, %arg12: memref<512x128xf32, #tpu.memory_space<vmem>>, %arg13: memref<1x128xf32, #tpu.memory_space<vmem>>, %arg14: memref<8x128xf32, #tpu.memory_space<vmem>>) attributes {dimension_semantics = [#tpu.dimension_semantics<parallel>], iteration_bounds = array<i64: 1>, scalar_prefetch = 0 : i64, scratch_operands = 0 : i64, tpu.core_type = #tpu.core_type<tc>, window_params = [{transform_indices = @transform_0, window_bounds = array<i64: 8, 1024>}, {transform_indices = @transform_1, window_bounds = array<i64: 8, 128>}, {pipeline_mode = #tpu.pipeline_mode<synchronous>, transform_indices = @transform_2, window_bounds = array<i64: 1024, 896>}, {pipeline_mode = #tpu.pipeline_mode<synchronous>, transform_indices = @transform_3, window_bounds = array<i64: 1, 896>}, {pipeline_mode = #tpu.pipeline_mode<synchronous>, transform_indices = @transform_4, window_bounds = array<i64: 896, 384>}, {pipeline_mode = #tpu.pipeline_mode<synchronous>, transform_indices = @transform_5, window_bounds = array<i64: 1, 384>}, {pipeline_mode = #tpu.pipeline_mode<synchronous>, transform_indices = @transform_6, window_bounds = array<i64: 384, 128>}, {pipeline_mode = #tpu.pipeline_mode<synchronous>, transform_indices = @transform_7, window_bounds = array<i64: 1, 128>}, {pipeline_mode = #tpu.pipeline_mode<synchronous>, transform_indices = @transform_8, window_bounds = array<i64: 128, 512>}, {pipeline_mode = #tpu.pipeline_mode<synchronous>, transform_indices = @transform_9, window_bounds = array<i64: 128, 512>}, {pipeline_mode = #tpu.pipeline_mode<synchronous>, transform_indices = @transform_10, window_bounds = array<i64: 1, 512>}, {pipeline_mode = #tpu.pipeline_mode<synchronous>, transform_indices = @transform_11, window_bounds = array<i64: 512, 128>}, {pipeline_mode = #tpu.pipeline_mode<synchronous>, transform_indices = @transform_12, window_bounds = array<i64: 1, 128>}, {transform_indices = @transform_13, window_bounds = array<i64: 8, 128>}]} {
    %c0 = arith.constant 0 : index
    %c0_0 = arith.constant 0 : index
    %0 = vector.load %arg1[%c0, %c0_0] : memref<8x1024xf32, #tpu.memory_space<vmem>>, vector<8x1024xf32>
    %c0_1 = arith.constant 0 : index
    %c0_2 = arith.constant 0 : index
    %1 = vector.load %arg3[%c0_1, %c0_2] : memref<1024x896xf32, #tpu.memory_space<vmem>>, vector<1024x896xf32>
    %cst = arith.constant dense<0.000000e+00> : vector<8x896xf32>
    %2 = tpu.matmul %0, %1, %cst {dimension_numbers = #tpu.dot_dimension_numbers<[1], [0], [0], [1], [0, 0, 1, 1], [], []>} : vector<8x1024xf32>, vector<1024x896xf32>, vector<8x896xf32> -> vector<8x896xf32>
    %c0_3 = arith.constant 0 : index
    %c0_4 = arith.constant 0 : index
    %3 = vector.load %arg4[%c0_3, %c0_4] : memref<1x896xf32, #tpu.memory_space<vmem>>, vector<1x896xf32>
    %4 = vector.broadcast %3 : vector<1x896xf32> to vector<8x896xf32>
    %5 = arith.addf %2, %4 : vector<8x896xf32>
    %cst_5 = arith.constant 0.000000e+00 : f32
    %6 = vector.broadcast %cst_5 : f32 to vector<8x896xf32>
    %7 = arith.maximumf %5, %6 : vector<8x896xf32>
    %c0_6 = arith.constant 0 : index
    %c0_7 = arith.constant 0 : index
    %8 = vector.load %arg5[%c0_6, %c0_7] : memref<896x384xf32, #tpu.memory_space<vmem>>, vector<896x384xf32>
    %cst_8 = arith.constant dense<0.000000e+00> : vector<8x384xf32>
    %9 = tpu.matmul %7, %8, %cst_8 {dimension_numbers = #tpu.dot_dimension_numbers<[1], [0], [0], [1], [0, 0, 1, 1], [], []>} : vector<8x896xf32>, vector<896x384xf32>, vector<8x384xf32> -> vector<8x384xf32>
    %c0_9 = arith.constant 0 : index
    %c0_10 = arith.constant 0 : index
    %10 = vector.load %arg6[%c0_9, %c0_10] : memref<1x384xf32, #tpu.memory_space<vmem>>, vector<1x384xf32>
    %11 = vector.broadcast %10 : vector<1x384xf32> to vector<8x384xf32>
    %12 = arith.addf %9, %11 : vector<8x384xf32>
    %cst_11 = arith.constant 0.000000e+00 : f32
    %13 = vector.broadcast %cst_11 : f32 to vector<8x384xf32>
    %14 = arith.maximumf %12, %13 : vector<8x384xf32>
    %c0_12 = arith.constant 0 : index
    %c0_13 = arith.constant 0 : index
    %15 = vector.load %arg7[%c0_12, %c0_13] : memref<384x128xf32, #tpu.memory_space<vmem>>, vector<384x128xf32>
    %cst_14 = arith.constant dense<0.000000e+00> : vector<8x128xf32>
    %16 = tpu.matmul %14, %15, %cst_14 {dimension_numbers = #tpu.dot_dimension_numbers<[1], [0], [0], [1], [0, 0, 1, 1], [], []>} : vector<8x384xf32>, vector<384x128xf32>, vector<8x128xf32> -> vector<8x128xf32>
    %c0_15 = arith.constant 0 : index
    %c0_16 = arith.constant 0 : index
    %17 = vector.load %arg8[%c0_15, %c0_16] : memref<1x128xf32, #tpu.memory_space<vmem>>, vector<1x128xf32>
    %18 = vector.broadcast %17 : vector<1x128xf32> to vector<8x128xf32>
    %19 = arith.addf %16, %18 : vector<8x128xf32>
    %c0_17 = arith.constant 0 : index
    %c0_18 = arith.constant 0 : index
    %20 = vector.load %arg9[%c0_17, %c0_18] : memref<128x512xf32, #tpu.memory_space<vmem>>, vector<128x512xf32>
    %cst_19 = arith.constant dense<0.000000e+00> : vector<8x512xf32>
    %21 = tpu.matmul %19, %20, %cst_19 {dimension_numbers = #tpu.dot_dimension_numbers<[1], [0], [0], [1], [0, 0, 1, 1], [], []>} : vector<8x128xf32>, vector<128x512xf32>, vector<8x512xf32> -> vector<8x512xf32>
    %c0_20 = arith.constant 0 : index
    %c0_21 = arith.constant 0 : index
    %22 = vector.load %arg2[%c0_20, %c0_21] : memref<8x128xf32, #tpu.memory_space<vmem>>, vector<8x128xf32>
    %c0_22 = arith.constant 0 : index
    %c0_23 = arith.constant 0 : index
    %23 = vector.load %arg10[%c0_22, %c0_23] : memref<128x512xf32, #tpu.memory_space<vmem>>, vector<128x512xf32>
    %cst_24 = arith.constant dense<0.000000e+00> : vector<8x512xf32>
    %24 = tpu.matmul %22, %23, %cst_24 {dimension_numbers = #tpu.dot_dimension_numbers<[1], [0], [0], [1], [0, 0, 1, 1], [], []>} : vector<8x128xf32>, vector<128x512xf32>, vector<8x512xf32> -> vector<8x512xf32>
    %25 = arith.addf %21, %24 : vector<8x512xf32>
    %c0_25 = arith.constant 0 : index
    %c0_26 = arith.constant 0 : index
    %26 = vector.load %arg11[%c0_25, %c0_26] : memref<1x512xf32, #tpu.memory_space<vmem>>, vector<1x512xf32>
    %27 = vector.broadcast %26 : vector<1x512xf32> to vector<8x512xf32>
    %28 = arith.addf %25, %27 : vector<8x512xf32>
    %cst_27 = arith.constant 0.000000e+00 : f32
    %29 = vector.broadcast %cst_27 : f32 to vector<8x512xf32>
    %30 = arith.maximumf %28, %29 : vector<8x512xf32>
    %c0_28 = arith.constant 0 : index
    %c0_29 = arith.constant 0 : index
    %31 = vector.load %arg12[%c0_28, %c0_29] : memref<512x128xf32, #tpu.memory_space<vmem>>, vector<512x128xf32>
    %cst_30 = arith.constant dense<0.000000e+00> : vector<8x128xf32>
    %32 = tpu.matmul %30, %31, %cst_30 {dimension_numbers = #tpu.dot_dimension_numbers<[1], [0], [0], [1], [0, 0, 1, 1], [], []>} : vector<8x512xf32>, vector<512x128xf32>, vector<8x128xf32> -> vector<8x128xf32>
    %c0_31 = arith.constant 0 : index
    %c0_32 = arith.constant 0 : index
    %33 = vector.load %arg13[%c0_31, %c0_32] : memref<1x128xf32, #tpu.memory_space<vmem>>, vector<1x128xf32>
    %34 = vector.broadcast %33 : vector<1x128xf32> to vector<8x128xf32>
    %35 = arith.addf %32, %34 : vector<8x128xf32>
    %c0_33 = arith.constant 0 : index
    %c0_34 = arith.constant 0 : index
    %36 = vector.load %arg14[%c0_33, %c0_34] : memref<8x128xf32, #tpu.memory_space<vmem>>, vector<8x128xf32>
    tpu.vector_store %arg14[%c0_33, %c0_34], %35 {strides = array<i32>} : memref<8x128xf32, #tpu.memory_space<vmem>>, vector<8x128xf32>,
    return
  }
  func.func @transform_0(%arg0: i32) -> (i32, i32) {
    %c0_i32 = arith.constant 0 : i32
    %c0_i32_0 = arith.constant 0 : i32
    return %arg0, %c0_i32 : i32, i32
  }
  func.func @transform_1(%arg0: i32) -> (i32, i32) {
    %c0_i32 = arith.constant 0 : i32
    %c0_i32_0 = arith.constant 0 : i32
    return %arg0, %c0_i32 : i32, i32
  }
  func.func @transform_2(%arg0: i32) -> (i32, i32) {
    %c0_i32 = arith.constant 0 : i32
    %c0_i32_0 = arith.constant 0 : i32
    %c0_i32_1 = arith.constant 0 : i32
    return %c0_i32, %c0_i32_0 : i32, i32
  }
  func.func @transform_3(%arg0: i32) -> (i32, i32) {
    %c0_i32 = arith.constant 0 : i32
    %c0_i32_0 = arith.constant 0 : i32
    %c0_i32_1 = arith.constant 0 : i32
    return %c0_i32, %c0_i32_0 : i32, i32
  }
  func.func @transform_4(%arg0: i32) -> (i32, i32) {
    %c0_i32 = arith.constant 0 : i32
    %c0_i32_0 = arith.constant 0 : i32
    %c0_i32_1 = arith.constant 0 : i32
    return %c0_i32, %c0_i32_0 : i32, i32
  }
  func.func @transform_5(%arg0: i32) -> (i32, i32) {
    %c0_i32 = arith.constant 0 : i32
    %c0_i32_0 = arith.constant 0 : i32
    %c0_i32_1 = arith.constant 0 : i32
    return %c0_i32, %c0_i32_0 : i32, i32
  }
  func.func @transform_6(%arg0: i32) -> (i32, i32) {
    %c0_i32 = arith.constant 0 : i32
    %c0_i32_0 = arith.constant 0 : i32
    %c0_i32_1 = arith.constant 0 : i32
    return %c0_i32, %c0_i32_0 : i32, i32
  }
  func.func @transform_7(%arg0: i32) -> (i32, i32) {
    %c0_i32 = arith.constant 0 : i32
    %c0_i32_0 = arith.constant 0 : i32
    %c0_i32_1 = arith.constant 0 : i32
    return %c0_i32, %c0_i32_0 : i32, i32
  }
  func.func @transform_8(%arg0: i32) -> (i32, i32) {
    %c0_i32 = arith.constant 0 : i32
    %c0_i32_0 = arith.constant 0 : i32
    %c0_i32_1 = arith.constant 0 : i32
    return %c0_i32, %c0_i32_0 : i32, i32
  }
  func.func @transform_9(%arg0: i32) -> (i32, i32) {
    %c0_i32 = arith.constant 0 : i32
    %c0_i32_0 = arith.constant 0 : i32
    %c0_i32_1 = arith.constant 0 : i32
    return %c0_i32, %c0_i32_0 : i32, i32
  }
  func.func @transform_10(%arg0: i32) -> (i32, i32) {
    %c0_i32 = arith.constant 0 : i32
    %c0_i32_0 = arith.constant 0 : i32
    %c0_i32_1 = arith.constant 0 : i32
    return %c0_i32, %c0_i32_0 : i32, i32
  }
  func.func @transform_11(%arg0: i32) -> (i32, i32) {
    %c0_i32 = arith.constant 0 : i32
    %c0_i32_0 = arith.constant 0 : i32
    %c0_i32_1 = arith.constant 0 : i32
    return %c0_i32, %c0_i32_0 : i32, i32
  }
  func.func @transform_12(%arg0: i32) -> (i32, i32) {
    %c0_i32 = arith.constant 0 : i32
    %c0_i32_0 = arith.constant 0 : i32
    %c0_i32_1 = arith.constant 0 : i32
    return %c0_i32, %c0_i32_0 : i32, i32
  }
  func.func @transform_13(%arg0: i32) -> (i32, i32) {
    %c0_i32 = arith.constant 0 : i32
    %c0_i32_0 = arith.constant 0 : i32
    return %arg0, %c0_i32 : i32, i32
  }
}

</mosaic_0001>

<llo_original>
// kernel: tpu_custom_call.1
$region0: #{tpu_custom_call.1}
  #allocation0 [shape = 'u32[]', space=smem, size = 0x4, offset = 0x4, fixed_abs, tag = 'smem constant byte address 0x4 - core index']
  #allocation1 [shape = 'u32[144,128]{1,0:T(1,128)}', space=vmem, size = 0x12000, scoped, tag = 'internal scratch']
  %s0 = inlined_call_operand.hbm [shape: f32[8,1024], index: 0, kind: input, shape index: {}]
  %s1 = inlined_call_operand.hbm [shape: f32[8,128], index: 1, kind: input, shape index: {}]
  %s2 = inlined_call_operand.hbm [shape: f32[1024,896], index: 2, kind: input, shape index: {}]
  %s3 = inlined_call_operand.hbm [shape: f32[1,896], index: 3, kind: input, shape index: {}]
  %s4 = inlined_call_operand.hbm [shape: f32[896,384], index: 4, kind: input, shape index: {}]
  %s5 = inlined_call_operand.hbm [shape: f32[1,384], index: 5, kind: input, shape index: {}]
  %s6 = inlined_call_operand.hbm [shape: f32[384,128], index: 6, kind: input, shape index: {}]
  %s7 = inlined_call_operand.hbm [shape: f32[1,128], index: 7, kind: input, shape index: {}]
  %s8 = inlined_call_operand.hbm [shape: f32[128,512], index: 8, kind: input, shape index: {}]
  %s9 = inlined_call_operand.hbm [shape: f32[128,512], index: 9, kind: input, shape index: {}]
  %s10 = inlined_call_operand.hbm [shape: f32[1,512], index: 10, kind: input, shape index: {}]
  %s11 = inlined_call_operand.hbm [shape: f32[512,128], index: 11, kind: input, shape index: {}]
  %s12 = inlined_call_operand.hbm [shape: f32[1,128], index: 12, kind: input, shape index: {}]
  %s13 = inlined_call_operand.hbm [shape: f32[8,128], index: 13, kind: output, shape index: {}]
  %s14 = sld [smem:[#allocation0]]
  $region114: #{tpu_custom_call.1} parent=0
    _
  %s16 = ssub.s32 1, %s14
  %s17 = scalar_select 0, %s16, %s14
  $region1: #{tpu_custom_call.1} parent=0
    #allocation2 [shape = 'u8[32768]{0}', space=vmem, size = 0x8000, scoped, tag = 'input window, operand 0, single buffered']
    #allocation3 [shape = 's32[1]{0}', space=sflag, size = 0x4, scoped, tag = 'scoped memory for tpu_custom_call.1']
    #allocation4 [shape = 's32[1]{0}', space=sflag, size = 0x4, scoped, tag = 'scoped memory for tpu_custom_call.1']
    #allocation5 [shape = 'u8[4096]{0}', space=vmem, size = 0x1000, scoped, tag = 'input window, operand 1, single buffered']
    #allocation6 [shape = 's32[1]{0}', space=sflag, size = 0x4, scoped, tag = 'scoped memory for tpu_custom_call.1']
    #allocation7 [shape = 'u8[3670016]{0}', space=vmem, size = 0x380000, scoped, tag = 'input window, operand 2, single buffered']
    #allocation8 [shape = 'u8[3584]{0}', space=vmem, size = 0x1000, scoped, tag = 'input window, operand 3, single buffered']
    #allocation9 [shape = 's32[1]{0}', space=sflag, size = 0x4, scoped, tag = 'scoped memory for tpu_custom_call.1']
    #allocation10 [shape = 'u8[1376256]{0}', space=vmem, size = 0x150000, scoped, tag = 'input window, operand 4, single buffered']
    #allocation11 [shape = 'u8[1536]{0}', space=vmem, size = 0x800, scoped, tag = 'input window, operand 5, single buffered']
    #allocation12 [shape = 's32[1]{0}', space=sflag, size = 0x4, scoped, tag = 'scoped memory for tpu_custom_call.1']
    #allocation13 [shape = 'u8[196608]{0}', space=vmem, size = 0x30000, scoped, tag = 'input window, operand 6, single buffered']
    #allocation14 [shape = 'u8[512]{0}', space=vmem, size = 0x400, scoped, tag = 'input window, operand 7, single buffered']
    #allocation15 [shape = 's32[1]{0}', space=sflag, size = 0x4, scoped, tag = 'scoped memory for tpu_custom_call.1']
    #allocation16 [shape = 'u8[262144]{0}', space=vmem, size = 0x40000, scoped, tag = 'input window, operand 8, single buffered']
    #allocation17 [shape = 'u8[262144]{0}', space=vmem, size = 0x40000, scoped, tag = 'input window, operand 9, single buffered']
    #allocation18 [shape = 's32[1]{0}', space=sflag, size = 0x4, scoped, tag = 'scoped memory for tpu_custom_call.1']
    #allocation19 [shape = 'u8[2048]{0}', space=vmem, size = 0x800, scoped, tag = 'input window, operand 10, single buffered']
    #allocation20 [shape = 'u8[262144]{0}', space=vmem, size = 0x40000, scoped, tag = 'input window, operand 11, single buffered']
    #allocation21 [shape = 's32[1]{0}', space=sflag, size = 0x4, scoped, tag = 'scoped memory for tpu_custom_call.1']
    #allocation22 [shape = 'u8[512]{0}', space=vmem, size = 0x400, scoped, tag = 'input window, operand 12, single buffered']
    #allocation23 [shape = 'u8[4096]{0}', space=vmem, size = 0x1000, scoped, tag = 'output window, operand 0, single buffered']
    %18 = vsyncpa [#allocation3], 0
    %19 = vsyncpa [#allocation6], 0
    %20 = vsyncpa [#allocation9], 0
    %21 = vsyncpa [#allocation12], 0
    %22 = vsyncpa [#allocation15], 0
    %23 = vsyncpa [#allocation18], 0
    %24 = vsyncpa [#allocation21], 0
    %25 = vsyncpa [#allocation4], 0
    // Predicated region
    $region2: #{tpu_custom_call.1} parent=1 // pred_check
      _
    $region3: #{tpu_custom_call.1} parent=1 // pred_check_branch
      %27 = sbr.rel (0) target = $region5
    $region4: #{tpu_custom_call.1} parent=1 // pred_region
      %s29 = ssub.s32 1024, 1024
      %30 = vsyncadd [#allocation3], %s29
      %s32 = sshll.u32 [#allocation2], 4
      %s33 = int_to_ptr.vmem [resolvable:$true] %s32
      %35 = dma.hbm_to_vmem [thread:$0]  %s0, 1024, %s33, [#allocation3]
    $region5: #{tpu_custom_call.1} parent=1 // pred_fallthru
      _
    // Predicated region
    $region6: #{tpu_custom_call.1} parent=1 // pred_check
      _
    $region7: #{tpu_custom_call.1} parent=1 // pred_check_branch
      %37 = sbr.rel (0) target = $region9
    $region8: #{tpu_custom_call.1} parent=1 // pred_region
      %s39 = ssub.s32 128, 128
      %40 = vsyncadd [#allocation6], %s39
      %s42 = sshll.u32 [#allocation5], 4
      %s43 = int_to_ptr.vmem [resolvable:$true] %s42
      %45 = dma.hbm_to_vmem [thread:$0]  %s1, 128, %s43, [#allocation6]
    $region9: #{tpu_custom_call.1} parent=1 // pred_fallthru
      _
    // Predicated region
    $region10: #{tpu_custom_call.1} parent=1 // pred_check
      _
    $region11: #{tpu_custom_call.1} parent=1 // pred_check_branch
      %47 = sbr.rel (0) target = $region13
    $region12: #{tpu_custom_call.1} parent=1 // pred_region
      %s49 = ssub.s32 114688, 114688
      %50 = vsyncadd [#allocation6], %s49
      %s51 = sshll.u32 [#allocation7], 4
      %s52 = int_to_ptr.vmem [resolvable:$true] %s51
      %57 = dma.hbm_to_vmem [thread:$0]  %s2, 114688, %s52, [#allocation6], 896, 896, 56
    $region13: #{tpu_custom_call.1} parent=1 // pred_fallthru
      _
    // Predicated region
    $region14: #{tpu_custom_call.1} parent=1 // pred_check
      _
    $region15: #{tpu_custom_call.1} parent=1 // pred_check_branch
      %59 = sbr.rel (0) target = $region17
    $region16: #{tpu_custom_call.1} parent=1 // pred_region
      %s61 = ssub.s32 112, 112
      %62 = vsyncadd [#allocation9], %s61
      %s64 = sshll.u32 [#allocation8], 4
      %s65 = int_to_ptr.vmem [resolvable:$true] %s64
      %67 = dma.hbm_to_vmem [thread:$0]  %s3, 112, %s65, [#allocation9]
    $region17: #{tpu_custom_call.1} parent=1 // pred_fallthru
      _
    // Predicated region
    $region18: #{tpu_custom_call.1} parent=1 // pred_check
      _
    $region19: #{tpu_custom_call.1} parent=1 // pred_check_branch
      %69 = sbr.rel (0) target = $region21
    $region20: #{tpu_custom_call.1} parent=1 // pred_region
      %s71 = ssub.s32 43008, 43008
      %72 = vsyncadd [#allocation9], %s71
      %s73 = sshll.u32 [#allocation10], 4
      %s74 = int_to_ptr.vmem [resolvable:$true] %s73
      %79 = dma.hbm_to_vmem [thread:$0]  %s4, 43008, %s74, [#allocation9], 384, 384, 24
    $region21: #{tpu_custom_call.1} parent=1 // pred_fallthru
      _
    // Predicated region
    $region22: #{tpu_custom_call.1} parent=1 // pred_check
      _
    $region23: #{tpu_custom_call.1} parent=1 // pred_check_branch
      %81 = sbr.rel (0) target = $region25
    $region24: #{tpu_custom_call.1} parent=1 // pred_region
      %s83 = ssub.s32 48, 48
      %84 = vsyncadd [#allocation12], %s83
      %s86 = sshll.u32 [#allocation11], 4
      %s87 = int_to_ptr.vmem [resolvable:$true] %s86
      %89 = dma.hbm_to_vmem [thread:$0]  %s5, 48, %s87, [#allocation12]
    $region25: #{tpu_custom_call.1} parent=1 // pred_fallthru
      _
    // Predicated region
    $region26: #{tpu_custom_call.1} parent=1 // pred_check
      _
    $region27: #{tpu_custom_call.1} parent=1 // pred_check_branch
      %91 = sbr.rel (0) target = $region29
    $region28: #{tpu_custom_call.1} parent=1 // pred_region
      %s93 = ssub.s32 6144, 6144
      %94 = vsyncadd [#allocation12], %s93
      %s95 = sshll.u32 [#allocation13], 4
      %s96 = int_to_ptr.vmem [resolvable:$true] %s95
      %101 = dma.hbm_to_vmem [thread:$0]  %s6, 6144, %s96, [#allocation12], 128, 128, 8
    $region29: #{tpu_custom_call.1} parent=1 // pred_fallthru
      _
    // Predicated region
    $region30: #{tpu_custom_call.1} parent=1 // pred_check
      _
    $region31: #{tpu_custom_call.1} parent=1 // pred_check_branch
      %103 = sbr.rel (0) target = $region33
    $region32: #{tpu_custom_call.1} parent=1 // pred_region
      %s105 = ssub.s32 16, 16
      %106 = vsyncadd [#allocation15], %s105
      %s108 = sshll.u32 [#allocation14], 4
      %s109 = int_to_ptr.vmem [resolvable:$true] %s108
      %111 = dma.hbm_to_vmem [thread:$0]  %s7, 16, %s109, [#allocation15]
    $region33: #{tpu_custom_call.1} parent=1 // pred_fallthru
      _
    // Predicated region
    $region34: #{tpu_custom_call.1} parent=1 // pred_check
      _
    $region35: #{tpu_custom_call.1} parent=1 // pred_check_branch
      %113 = sbr.rel (0) target = $region37
    $region36: #{tpu_custom_call.1} parent=1 // pred_region
      %s115 = ssub.s32 8192, 8192
      %116 = vsyncadd [#allocation15], %s115
      %s117 = sshll.u32 [#allocation16], 4
      %s118 = int_to_ptr.vmem [resolvable:$true] %s117
      %123 = dma.hbm_to_vmem [thread:$0]  %s8, 8192, %s118, [#allocation15], 512, 512, 32
    $region37: #{tpu_custom_call.1} parent=1 // pred_fallthru
      _
    // Predicated region
    $region38: #{tpu_custom_call.1} parent=1 // pred_check
      _
    $region39: #{tpu_custom_call.1} parent=1 // pred_check_branch
      %125 = sbr.rel (0) target = $region41
    $region40: #{tpu_custom_call.1} parent=1 // pred_region
      %s127 = ssub.s32 8192, 8192
      %128 = vsyncadd [#allocation18], %s127
      %s129 = sshll.u32 [#allocation17], 4
      %s130 = int_to_ptr.vmem [resolvable:$true] %s129
      %135 = dma.hbm_to_vmem [thread:$0]  %s9, 8192, %s130, [#allocation18], 512, 512, 32
    $region41: #{tpu_custom_call.1} parent=1 // pred_fallthru
      _
    // Predicated region
    $region42: #{tpu_custom_call.1} parent=1 // pred_check
      _
    $region43: #{tpu_custom_call.1} parent=1 // pred_check_branch
      %137 = sbr.rel (0) target = $region45
    $region44: #{tpu_custom_call.1} parent=1 // pred_region
      %s139 = ssub.s32 64, 64
      %140 = vsyncadd [#allocation18], %s139
      %s142 = sshll.u32 [#allocation19], 4
      %s143 = int_to_ptr.vmem [resolvable:$true] %s142
      %145 = dma.hbm_to_vmem [thread:$0]  %s10, 64, %s143, [#allocation18]
    $region45: #{tpu_custom_call.1} parent=1 // pred_fallthru
      _
    // Predicated region
    $region46: #{tpu_custom_call.1} parent=1 // pred_check
      _
    $region47: #{tpu_custom_call.1} parent=1 // pred_check_branch
      %147 = sbr.rel (0) target = $region49
    $region48: #{tpu_custom_call.1} parent=1 // pred_region
      %s149 = ssub.s32 8192, 8192
      %150 = vsyncadd [#allocation21], %s149
      %s151 = sshll.u32 [#allocation20], 4
      %s152 = int_to_ptr.vmem [resolvable:$true] %s151
      %157 = dma.hbm_to_vmem [thread:$0]  %s11, 8192, %s152, [#allocation21], 128, 128, 8
    $region49: #{tpu_custom_call.1} parent=1 // pred_fallthru
      _
    // Predicated region
    $region50: #{tpu_custom_call.1} parent=1 // pred_check
      _
    $region51: #{tpu_custom_call.1} parent=1 // pred_check_branch
      %159 = sbr.rel (0) target = $region53
    $region52: #{tpu_custom_call.1} parent=1 // pred_region
      %s161 = ssub.s32 16, 16
      %162 = vsyncadd [#allocation21], %s161
      %s164 = sshll.u32 [#allocation22], 4
      %s165 = int_to_ptr.vmem [resolvable:$true] %s164
      %167 = dma.hbm_to_vmem [thread:$0]  %s12, 16, %s165, [#allocation21]
    $region53: #{tpu_custom_call.1} parent=1 // pred_fallthru
      _
    // Predicated region
    $region54: #{tpu_custom_call.1} parent=1 // pred_check
      _
    $region55: #{tpu_custom_call.1} parent=1 // pred_check_branch
      %169 = sbr.rel (0) target = $region57
    $region56: #{tpu_custom_call.1} parent=1 // pred_region
      %170 = dma.done [#allocation3], 1024
    $region57: #{tpu_custom_call.1} parent=1 // pred_fallthru
      _
    // Predicated region
    $region58: #{tpu_custom_call.1} parent=1 // pred_check
      _
    $region59: #{tpu_custom_call.1} parent=1 // pred_check_branch
      %172 = sbr.rel (0) target = $region61
    $region60: #{tpu_custom_call.1} parent=1 // pred_region
      %173 = dma.done [#allocation6], 128
    $region61: #{tpu_custom_call.1} parent=1 // pred_fallthru
      _
    // Predicated region
    $region62: #{tpu_custom_call.1} parent=1 // pred_check
      _
    $region63: #{tpu_custom_call.1} parent=1 // pred_check_branch
      %175 = sbr.rel (0) target = $region65
    $region64: #{tpu_custom_call.1} parent=1 // pred_region
      %176 = dma.done [#allocation6], 114688
    $region65: #{tpu_custom_call.1} parent=1 // pred_fallthru
      _
    // Predicated region
    $region66: #{tpu_custom_call.1} parent=1 // pred_check
      _
    $region67: #{tpu_custom_call.1} parent=1 // pred_check_branch
      %178 = sbr.rel (0) target = $region69
    $region68: #{tpu_custom_call.1} parent=1 // pred_region
      %179 = dma.done [#allocation9], 112
    $region69: #{tpu_custom_call.1} parent=1 // pred_fallthru
      _
    // Predicated region
    $region70: #{tpu_custom_call.1} parent=1 // pred_check
      _
    $region71: #{tpu_custom_call.1} parent=1 // pred_check_branch
      %181 = sbr.rel (0) target = $region73
    $region72: #{tpu_custom_call.1} parent=1 // pred_region
      %182 = dma.done [#allocation9], 43008
    $region73: #{tpu_custom_call.1} parent=1 // pred_fallthru
      _
    // Predicated region
    $region74: #{tpu_custom_call.1} parent=1 // pred_check
      _
    $region75: #{tpu_custom_call.1} parent=1 // pred_check_branch
      %184 = sbr.rel (0) target = $region77
    $region76: #{tpu_custom_call.1} parent=1 // pred_region
      %185 = dma.done [#allocation12], 48
    $region77: #{tpu_custom_call.1} parent=1 // pred_fallthru
      _
    // Predicated region
    $region78: #{tpu_custom_call.1} parent=1 // pred_check
      _
    $region79: #{tpu_custom_call.1} parent=1 // pred_check_branch
      %187 = sbr.rel (0) target = $region81
    $region80: #{tpu_custom_call.1} parent=1 // pred_region
      %188 = dma.done [#allocation12], 6144
    $region81: #{tpu_custom_call.1} parent=1 // pred_fallthru
      _
    // Predicated region
    $region82: #{tpu_custom_call.1} parent=1 // pred_check
      _
    $region83: #{tpu_custom_call.1} parent=1 // pred_check_branch
      %190 = sbr.rel (0) target = $region85
    $region84: #{tpu_custom_call.1} parent=1 // pred_region
      %191 = dma.done [#allocation15], 16
    $region85: #{tpu_custom_call.1} parent=1 // pred_fallthru
      _
    // Predicated region
    $region86: #{tpu_custom_call.1} parent=1 // pred_check
      _
    $region87: #{tpu_custom_call.1} parent=1 // pred_check_branch
      %193 = sbr.rel (0) target = $region89
    $region88: #{tpu_custom_call.1} parent=1 // pred_region
      %194 = dma.done [#allocation15], 8192
    $region89: #{tpu_custom_call.1} parent=1 // pred_fallthru
      _
    // Predicated region
    $region90: #{tpu_custom_call.1} parent=1 // pred_check
      _
    $region91: #{tpu_custom_call.1} parent=1 // pred_check_branch
      %196 = sbr.rel (0) target = $region93
    $region92: #{tpu_custom_call.1} parent=1 // pred_region
      %197 = dma.done [#allocation18], 8192
    $region93: #{tpu_custom_call.1} parent=1 // pred_fallthru
      _
    // Predicated region
    $region94: #{tpu_custom_call.1} parent=1 // pred_check
      _
    $region95: #{tpu_custom_call.1} parent=1 // pred_check_branch
      %199 = sbr.rel (0) target = $region97
    $region96: #{tpu_custom_call.1} parent=1 // pred_region
      %200 = dma.done [#allocation18], 64
    $region97: #{tpu_custom_call.1} parent=1 // pred_fallthru
      _
    // Predicated region
    $region98: #{tpu_custom_call.1} parent=1 // pred_check
      _
    $region99: #{tpu_custom_call.1} parent=1 // pred_check_branch
      %202 = sbr.rel (0) target = $region101
    $region100: #{tpu_custom_call.1} parent=1 // pred_region
      %203 = dma.done [#allocation21], 8192
    $region101: #{tpu_custom_call.1} parent=1 // pred_fallthru
      _
    // Predicated region
    $region102: #{tpu_custom_call.1} parent=1 // pred_check
      _
    $region103: #{tpu_custom_call.1} parent=1 // pred_check_branch
      %205 = sbr.rel (0) target = $region105
    $region104: #{tpu_custom_call.1} parent=1 // pred_region
      %206 = dma.done [#allocation21], 16
    $region105: #{tpu_custom_call.1} parent=1 // pred_fallthru
      _
    %v207 = vld [vmem:[#allocation2] sm:$0xff]
    %v208 = vld [vmem:[#allocation2 + $0x8] sm:$0xff]
    %v209 = vld [vmem:[#allocation2 + $0x10] sm:$0xff]
    %v210 = vld [vmem:[#allocation2 + $0x18] sm:$0xff]
    %v211 = vld [vmem:[#allocation2 + $0x20] sm:$0xff]
    %v212 = vld [vmem:[#allocation2 + $0x28] sm:$0xff]
    %v213 = vld [vmem:[#allocation2 + $0x30] sm:$0xff]
    %v214 = vld [vmem:[#allocation2 + $0x38] sm:$0xff]
    %v215 = vld [vmem:[#allocation7] sm:$0xff]
    %v216 = vld [vmem:[#allocation7 + $0x8] sm:$0xff]
    %v217 = vld [vmem:[#allocation7 + $0x10] sm:$0xff]
    %v218 = vld [vmem:[#allocation7 + $0x18] sm:$0xff]
    %v219 = vld [vmem:[#allocation7 + $0x20] sm:$0xff]
    %v220 = vld [vmem:[#allocation7 + $0x28] sm:$0xff]
    %v221 = vld [vmem:[#allocation7 + $0x30] sm:$0xff]
    %v222 = vld [vmem:[#allocation7 + $0x38] sm:$0xff]
    %v223 = vld [vmem:[#allocation7 + $0x40] sm:$0xff]
    %v224 = vld [vmem:[#allocation7 + $0x48] sm:$0xff]
    %v225 = vld [vmem:[#allocation7 + $0x50] sm:$0xff]
    %v226 = vld [vmem:[#allocation7 + $0x58] sm:$0xff]
    %v227 = vld [vmem:[#allocation7 + $0x60] sm:$0xff]
    %v228 = vld [vmem:[#allocation7 + $0x68] sm:$0xff]
    %v229 = vld [vmem:[#allocation7 + $0x70] sm:$0xff]
    %v230 = vld [vmem:[#allocation7 + $0x78] sm:$0xff]
    %v231 = vld [vmem:[#allocation7 + $0x80] sm:$0xff]
    %v232 = vld [vmem:[#allocation7 + $0x88] sm:$0xff]
    %v233 = vld [vmem:[#allocation7 + $0x90] sm:$0xff]
    %v234 = vld [vmem:[#allocation7 + $0x98] sm:$0xff]
    %v235 = vld [vmem:[#allocation7 + $0xa0] sm:$0xff]
    %v236 = vld [vmem:[#allocation7 + $0xa8] sm:$0xff]
    %v237 = vld [vmem:[#allocation7 + $0xb0] sm:$0xff]
    %v238 = vld [vmem:[#allocation7 + $0xb8] sm:$0xff]
    %v239 = vld [vmem:[#allocation7 + $0xc0] sm:$0xff]
    %v240 = vld [vmem:[#allocation7 + $0xc8] sm:$0xff]
    %v241 = vld [vmem:[#allocation7 + $0xd0] sm:$0xff]
    %v242 = vld [vmem:[#allocation7 + $0xd8] sm:$0xff]
    %v243 = vld [vmem:[#allocation7 + $0xe0] sm:$0xff]
    %v244 = vld [vmem:[#allocation7 + $0xe8] sm:$0xff]
    %v245 = vld [vmem:[#allocation7 + $0xf0] sm:$0xff]
    %v246 = vld [vmem:[#allocation7 + $0xf8] sm:$0xff]
    %v247 = vld [vmem:[#allocation7 + $0x100] sm:$0xff]
    %v248 = vld [vmem:[#allocation7 + $0x108] sm:$0xff]
    %v249 = vld [vmem:[#allocation7 + $0x110] sm:$0xff]
    %v250 = vld [vmem:[#allocation7 + $0x118] sm:$0xff]
    %v251 = vld [vmem:[#allocation7 + $0x120] sm:$0xff]
    %v252 = vld [vmem:[#allocation7 + $0x128] sm:$0xff]
    %v253 = vld [vmem:[#allocation7 + $0x130] sm:$0xff]
    %v254 = vld [vmem:[#allocation7 + $0x138] sm:$0xff]
    %v255 = vld [vmem:[#allocation7 + $0x140] sm:$0xff]
    %v256 = vld [vmem:[#allocation7 + $0x148] sm:$0xff]
    %v257 = vld [vmem:[#allocation7 + $0x150] sm:$0xff]
    %v258 = vld [vmem:[#allocation7 + $0x158] sm:$0xff]
    %v259 = vld [vmem:[#allocation7 + $0x160] sm:$0xff]
    %v260 = vld [vmem:[#allocation7 + $0x168] sm:$0xff]
    %v261 = vld [vmem:[#allocation7 + $0x170] sm:$0xff]
    %v262 = vld [vmem:[#allocation7 + $0x178] sm:$0xff]
    %v263 = vld [vmem:[#allocation7 + $0x180] sm:$0xff]
    %v264 = vld [vmem:[#allocation7 + $0x188] sm:$0xff]
    %v265 = vld [vmem:[#allocation7 + $0x190] sm:$0xff]
    %v266 = vld [vmem:[#allocation7 + $0x198] sm:$0xff]
    %v267 = vld [vmem:[#allocation7 + $0x1a0] sm:$0xff]
    %v268 = vld [vmem:[#allocation7 + $0x1a8] sm:$0xff]
    %v269 = vld [vmem:[#allocation7 + $0x1b0] sm:$0xff]
    %v270 = vld [vmem:[#allocation7 + $0x1b8] sm:$0xff]
    %v271 = vld [vmem:[#allocation7 + $0x1c0] sm:$0xff]
    %v272 = vld [vmem:[#allocation7 + $0x1c8] sm:$0xff]
    %v273 = vld [vmem:[#allocation7 + $0x1d0] sm:$0xff]
    %v274 = vld [vmem:[#allocation7 + $0x1d8] sm:$0xff]
    %v275 = vld [vmem:[#allocation7 + $0x1e0] sm:$0xff]
    %v276 = vld [vmem:[#allocation7 + $0x1e8] sm:$0xff]
    %v277 = vld [vmem:[#allocation7 + $0x1f0] sm:$0xff]
    %v278 = vld [vmem:[#allocation7 + $0x1f8] sm:$0xff]
    %v279 = vld [vmem:[#allocation7 + $0x200] sm:$0xff]
    %v280 = vld [vmem:[#allocation7 + $0x208] sm:$0xff]
    %v281 = vld [vmem:[#allocation7 + $0x210] sm:$0xff]
    %v282 = vld [vmem:[#allocation7 + $0x218] sm:$0xff]
    %v283 = vld [vmem:[#allocation7 + $0x220] sm:$0xff]
    %v284 = vld [vmem:[#allocation7 + $0x228] sm:$0xff]
    %v285 = vld [vmem:[#allocation7 + $0x230] sm:$0xff]
    %v286 = vld [vmem:[#allocation7 + $0x238] sm:$0xff]
    %v287 = vld [vmem:[#allocation7 + $0x240] sm:$0xff]
    %v288 = vld [vmem:[#allocation7 + $0x248] sm:$0xff]
    %v289 = vld [vmem:[#allocation7 + $0x250] sm:$0xff]
    %v290 = vld [vmem:[#allocation7 + $0x258] sm:$0xff]
    %v291 = vld [vmem:[#allocation7 + $0x260] sm:$0xff]
    %v292 = vld [vmem:[#allocation7 + $0x268] sm:$0xff]
    %v293 = vld [vmem:[#allocation7 + $0x270] sm:$0xff]
    %v294 = vld [vmem:[#allocation7 + $0x278] sm:$0xff]
    %v295 = vld [vmem:[#allocation7 + $0x280] sm:$0xff]
    %v296 = vld [vmem:[#allocation7 + $0x288] sm:$0xff]
    %v297 = vld [vmem:[#allocation7 + $0x290] sm:$0xff]
    %v298 = vld [vmem:[#allocation7 + $0x298] sm:$0xff]
    %v299 = vld [vmem:[#allocation7 + $0x2a0] sm:$0xff]
    %v300 = vld [vmem:[#allocation7 + $0x2a8] sm:$0xff]
    %v301 = vld [vmem:[#allocation7 + $0x2b0] sm:$0xff]
    %v302 = vld [vmem:[#allocation7 + $0x2b8] sm:$0xff]
    %v303 = vld [vmem:[#allocation7 + $0x2c0] sm:$0xff]
    %v304 = vld [vmem:[#allocation7 + $0x2c8] sm:$0xff]
    %v305 = vld [vmem:[#allocation7 + $0x2d0] sm:$0xff]
    %v306 = vld [vmem:[#allocation7 + $0x2d8] sm:$0xff]
    %v307 = vld [vmem:[#allocation7 + $0x2e0] sm:$0xff]
    %v308 = vld [vmem:[#allocation7 + $0x2e8] sm:$0xff]
    %v309 = vld [vmem:[#allocation7 + $0x2f0] sm:$0xff]
    %v310 = vld [vmem:[#allocation7 + $0x2f8] sm:$0xff]
    %v311 = vld [vmem:[#allocation7 + $0x300] sm:$0xff]
    %v312 = vld [vmem:[#allocation7 + $0x308] sm:$0xff]
    %v313 = vld [vmem:[#allocation7 + $0x310] sm:$0xff]
    %v314 = vld [vmem:[#allocation7 + $0x318] sm:$0xff]
    %v315 = vld [vmem:[#allocation7 + $0x320] sm:$0xff]
    %v316 = vld [vmem:[#allocation7 + $0x328] sm:$0xff]
    %v317 = vld [vmem:[#allocation7 + $0x330] sm:$0xff]
    %v318 = vld [vmem:[#allocation7 + $0x338] sm:$0xff]
    %v319 = vld [vmem:[#allocation7 + $0x340] sm:$0xff]
    %v320 = vld [vmem:[#allocation7 + $0x348] sm:$0xff]
    %v321 = vld [vmem:[#allocation7 + $0x350] sm:$0xff]
    %v322 = vld [vmem:[#allocation7 + $0x358] sm:$0xff]
    %v323 = vld [vmem:[#allocation7 + $0x360] sm:$0xff]
    %v324 = vld [vmem:[#allocation7 + $0x368] sm:$0xff]
    %v325 = vld [vmem:[#allocation7 + $0x370] sm:$0xff]
    %v326 = vld [vmem:[#allocation7 + $0x378] sm:$0xff]
    %v327 = vld [vmem:[#allocation7 + $0x380] sm:$0xff]
    %v328 = vld [vmem:[#allocation7 + $0x388] sm:$0xff]
    %v329 = vld [vmem:[#allocation7 + $0x390] sm:$0xff]
    %v330 = vld [vmem:[#allocation7 + $0x398] sm:$0xff]
    %v331 = vld [vmem:[#allocation7 + $0x3a0] sm:$0xff]
    %v332 = vld [vmem:[#allocation7 + $0x3a8] sm:$0xff]
    %v333 = vld [vmem:[#allocation7 + $0x3b0] sm:$0xff]
    %v334 = vld [vmem:[#allocation7 + $0x3b8] sm:$0xff]
    %v335 = vld [vmem:[#allocation7 + $0x3c0] sm:$0xff]
    %v336 = vld [vmem:[#allocation7 + $0x3c8] sm:$0xff]
    %v337 = vld [vmem:[#allocation7 + $0x3d0] sm:$0xff]
    %v338 = vld [vmem:[#allocation7 + $0x3d8] sm:$0xff]
    %v339 = vld [vmem:[#allocation7 + $0x3e0] sm:$0xff]
    %v340 = vld [vmem:[#allocation7 + $0x3e8] sm:$0xff]
    %v341 = vld [vmem:[#allocation7 + $0x3f0] sm:$0xff]
    %v342 = vld [vmem:[#allocation7 + $0x3f8] sm:$0xff]
    %v343 = vld [vmem:[#allocation7 + $0x400] sm:$0xff]
    %v344 = vld [vmem:[#allocation7 + $0x408] sm:$0xff]
    %v345 = vld [vmem:[#allocation7 + $0x410] sm:$0xff]
    %v346 = vld [vmem:[#allocation7 + $0x418] sm:$0xff]
    %v347 = vld [vmem:[#allocation7 + $0x420] sm:$0xff]
    %v348 = vld [vmem:[#allocation7 + $0x428] sm:$0xff]
    %v349 = vld [vmem:[#allocation7 + $0x430] sm:$0xff]
    %v350 = vld [vmem:[#allocation7 + $0x438] sm:$0xff]
    %v351 = vld [vmem:[#allocation7 + $0x440] sm:$0xff]
    %v352 = vld [vmem:[#allocation7 + $0x448] sm:$0xff]
    %v353 = vld [vmem:[#allocation7 + $0x450] sm:$0xff]
    %v354 = vld [vmem:[#allocation7 + $0x458] sm:$0xff]
    %v355 = vld [vmem:[#allocation7 + $0x460] sm:$0xff]
    %v356 = vld [vmem:[#allocation7 + $0x468] sm:$0xff]
    %v357 = vld [vmem:[#allocation7 + $0x470] sm:$0xff]
    %v358 = vld [vmem:[#allocation7 + $0x478] sm:$0xff]
    %v359 = vld [vmem:[#allocation7 + $0x480] sm:$0xff]
    %v360 = vld [vmem:[#allocation7 + $0x488] sm:$0xff]
    %v361 = vld [vmem:[#allocation7 + $0x490] sm:$0xff]
    %v362 = vld [vmem:[#allocation7 + $0x498] sm:$0xff]
    %v363 = vld [vmem:[#allocation7 + $0x4a0] sm:$0xff]
    %v364 = vld [vmem:[#allocation7 + $0x4a8] sm:$0xff]
    %v365 = vld [vmem:[#allocation7 + $0x4b0] sm:$0xff]
    %v366 = vld [vmem:[#allocation7 + $0x4b8] sm:$0xff]
    %v367 = vld [vmem:[#allocation7 + $0x4c0] sm:$0xff]
    %v368 = vld [vmem:[#allocation7 + $0x4c8] sm:$0xff]
    %v369 = vld [vmem:[#allocation7 + $0x4d0] sm:$0xff]
    %v370 = vld [vmem:[#allocation7 + $0x4d8] sm:$0xff]
    %v371 = vld [vmem:[#allocation7 + $0x4e0] sm:$0xff]
    %v372 = vld [vmem:[#allocation7 + $0x4e8] sm:$0xff]
    %v373 = vld [vmem:[#allocation7 + $0x4f0] sm:$0xff]
    %v374 = vld [vmem:[#allocation7 + $0x4f8] sm:$0xff]
    %v375 = vld [vmem:[#allocation7 + $0x500] sm:$0xff]
    %v376 = vld [vmem:[#allocation7 + $0x508] sm:$0xff]
    %v377 = vld [vmem:[#allocation7 + $0x510] sm:$0xff]
    %v378 = vld [vmem:[#allocation7 + $0x518] sm:$0xff]
    %v379 = vld [vmem:[#allocation7 + $0x520] sm:$0xff]
    %v380 = vld [vmem:[#allocation7 + $0x528] sm:$0xff]
    %v381 = vld [vmem:[#allocation7 + $0x530] sm:$0xff]
    %v382 = vld [vmem:[#allocation7 + $0x538] sm:$0xff]
    %v383 = vld [vmem:[#allocation7 + $0x540] sm:$0xff]
    %v384 = vld [vmem:[#allocation7 + $0x548] sm:$0xff]
    %v385 = vld [vmem:[#allocation7 + $0x550] sm:$0xff]
    %v386 = vld [vmem:[#allocation7 + $0x558] sm:$0xff]
    %v387 = vld [vmem:[#allocation7 + $0x560] sm:$0xff]
    %v388 = vld [vmem:[#allocation7 + $0x568] sm:$0xff]
    %v389 = vld [vmem:[#allocation7 + $0x570] sm:$0xff]
    %v390 = vld [vmem:[#allocation7 + $0x578] sm:$0xff]
    %v391 = vld [vmem:[#allocation7 + $0x580] sm:$0xff]
    %v392 = vld [vmem:[#allocation7 + $0x588] sm:$0xff]
    %v393 = vld [vmem:[#allocation7 + $0x590] sm:$0xff]
    %v394 = vld [vmem:[#allocation7 + $0x598] sm:$0xff]
    %v395 = vld [vmem:[#allocation7 + $0x5a0] sm:$0xff]
    %v396 = vld [vmem:[#allocation7 + $0x5a8] sm:$0xff]
    %v397 = vld [vmem:[#allocation7 + $0x5b0] sm:$0xff]
    %v398 = vld [vmem:[#allocation7 + $0x5b8] sm:$0xff]
    %v399 = vld [vmem:[#allocation7 + $0x5c0] sm:$0xff]
    %v400 = vld [vmem:[#allocation7 + $0x5c8] sm:$0xff]
    %v401 = vld [vmem:[#allocation7 + $0x5d0] sm:$0xff]
    %v402 = vld [vmem:[#allocation7 + $0x5d8] sm:$0xff]
    %v403 = vld [vmem:[#allocation7 + $0x5e0] sm:$0xff]
    %v404 = vld [vmem:[#allocation7 + $0x5e8] sm:$0xff]
    %v405 = vld [vmem:[#allocation7 + $0x5f0] sm:$0xff]
    %v406 = vld [vmem:[#allocation7 + $0x5f8] sm:$0xff]
    %v407 = vld [vmem:[#allocation7 + $0x600] sm:$0xff]
    %v408 = vld [vmem:[#allocation7 + $0x608] sm:$0xff]
    %v409 = vld [vmem:[#allocation7 + $0x610] sm:$0xff]
    %v410 = vld [vmem:[#allocation7 + $0x618] sm:$0xff]
    %v411 = vld [vmem:[#allocation7 + $0x620] sm:$0xff]
    %v412 = vld [vmem:[#allocation7 + $0x628] sm:$0xff]
    %v413 = vld [vmem:[#allocation7 + $0x630] sm:$0xff]
    %v414 = vld [vmem:[#allocation7 + $0x638] sm:$0xff]
    %v415 = vld [vmem:[#allocation7 + $0x640] sm:$0xff]
    %v416 = vld [vmem:[#allocation7 + $0x648] sm:$0xff]
    %v417 = vld [vmem:[#allocation7 + $0x650] sm:$0xff]
    %v418 = vld [vmem:[#allocation7 + $0x658] sm:$0xff]
    %v419 = vld [vmem:[#allocation7 + $0x660] sm:$0xff]
    %v420 = vld [vmem:[#allocation7 + $0x668] sm:$0xff]
    %v421 = vld [vmem:[#allocation7 + $0x670] sm:$0xff]
    %v422 = vld [vmem:[#allocation7 + $0x678] sm:$0xff]
    %v423 = vld [vmem:[#allocation7 + $0x680] sm:$0xff]
    %v424 = vld [vmem:[#allocation7 + $0x688] sm:$0xff]
    %v425 = vld [vmem:[#allocation7 + $0x690] sm:$0xff]
    %v426 = vld [vmem:[#allocation7 + $0x698] sm:$0xff]
    %v427 = vld [vmem:[#allocation7 + $0x6a0] sm:$0xff]
    %v428 = vld [vmem:[#allocation7 + $0x6a8] sm:$0xff]
    %v429 = vld [vmem:[#allocation7 + $0x6b0] sm:$0xff]
    %v430 = vld [vmem:[#allocation7 + $0x6b8] sm:$0xff]
    %v431 = vld [vmem:[#allocation7 + $0x6c0] sm:$0xff]
    %v432 = vld [vmem:[#allocation7 + $0x6c8] sm:$0xff]
    %v433 = vld [vmem:[#allocation7 + $0x6d0] sm:$0xff]
    %v434 = vld [vmem:[#allocation7 + $0x6d8] sm:$0xff]
    %v435 = vld [vmem:[#allocation7 + $0x6e0] sm:$0xff]
    %v436 = vld [vmem:[#allocation7 + $0x6e8] sm:$0xff]
    %v437 = vld [vmem:[#allocation7 + $0x6f0] sm:$0xff]
    %v438 = vld [vmem:[#allocation7 + $0x6f8] sm:$0xff]
    %v439 = vld [vmem:[#allocation7 + $0x700] sm:$0xff]
    %v440 = vld [vmem:[#allocation7 + $0x708] sm:$0xff]
    %v441 = vld [vmem:[#allocation7 + $0x710] sm:$0xff]
    %v442 = vld [vmem:[#allocation7 + $0x718] sm:$0xff]
    %v443 = vld [vmem:[#allocation7 + $0x720] sm:$0xff]
    %v444 = vld [vmem:[#allocation7 + $0x728] sm:$0xff]
    %v445 = vld [vmem:[#allocation7 + $0x730] sm:$0xff]
    %v446 = vld [vmem:[#allocation7 + $0x738] sm:$0xff]
    %v447 = vld [vmem:[#allocation7 + $0x740] sm:$0xff]
    %v448 = vld [vmem:[#allocation7 + $0x748] sm:$0xff]
    %v449 = vld [vmem:[#allocation7 + $0x750] sm:$0xff]
    %v450 = vld [vmem:[#allocation7 + $0x758] sm:$0xff]
    %v451 = vld [vmem:[#allocation7 + $0x760] sm:$0xff]
    %v452 = vld [vmem:[#allocation7 + $0x768] sm:$0xff]
    %v453 = vld [vmem:[#allocation7 + $0x770] sm:$0xff]
    %v454 = vld [vmem:[#allocation7 + $0x778] sm:$0xff]
    %v455 = vld [vmem:[#allocation7 + $0x780] sm:$0xff]
    %v456 = vld [vmem:[#allocation7 + $0x788] sm:$0xff]
    %v457 = vld [vmem:[#allocation7 + $0x790] sm:$0xff]
    %v458 = vld [vmem:[#allocation7 + $0x798] sm:$0xff]
    %v459 = vld [vmem:[#allocation7 + $0x7a0] sm:$0xff]
    %v460 = vld [vmem:[#allocation7 + $0x7a8] sm:$0xff]
    %v461 = vld [vmem:[#allocation7 + $0x7b0] sm:$0xff]
    %v462 = vld [vmem:[#allocation7 + $0x7b8] sm:$0xff]
    %v463 = vld [vmem:[#allocation7 + $0x7c0] sm:$0xff]
    %v464 = vld [vmem:[#allocation7 + $0x7c8] sm:$0xff]
    %v465 = vld [vmem:[#allocation7 + $0x7d0] sm:$0xff]
    %v466 = vld [vmem:[#allocation7 + $0x7d8] sm:$0xff]
    %v467 = vld [vmem:[#allocation7 + $0x7e0] sm:$0xff]
    %v468 = vld [vmem:[#allocation7 + $0x7e8] sm:$0xff]
    %v469 = vld [vmem:[#allocation7 + $0x7f0] sm:$0xff]
    %v470 = vld [vmem:[#allocation7 + $0x7f8] sm:$0xff]
    %v471 = vld [vmem:[#allocation7 + $0x800] sm:$0xff]
    %v472 = vld [vmem:[#allocation7 + $0x808] sm:$0xff]
    %v473 = vld [vmem:[#allocation7 + $0x810] sm:$0xff]
    %v474 = vld [vmem:[#allocation7 + $0x818] sm:$0xff]
    %v475 = vld [vmem:[#allocation7 + $0x820] sm:$0xff]
    %v476 = vld [vmem:[#allocation7 + $0x828] sm:$0xff]
    %v477 = vld [vmem:[#allocation7 + $0x830] sm:$0xff]
    %v478 = vld [vmem:[#allocation7 + $0x838] sm:$0xff]
    %v479 = vld [vmem:[#allocation7 + $0x840] sm:$0xff]
    %v480 = vld [vmem:[#allocation7 + $0x848] sm:$0xff]
    %v481 = vld [vmem:[#allocation7 + $0x850] sm:$0xff]
    %v482 = vld [vmem:[#allocation7 + $0x858] sm:$0xff]
    %v483 = vld [vmem:[#allocation7 + $0x860] sm:$0xff]
    %v484 = vld [vmem:[#allocation7 + $0x868] sm:$0xff]
    %v485 = vld [vmem:[#allocation7 + $0x870] sm:$0xff]
    %v486 = vld [vmem:[#allocation7 + $0x878] sm:$0xff]
    %v487 = vld [vmem:[#allocation7 + $0x880] sm:$0xff]
    %v488 = vld [vmem:[#allocation7 + $0x888] sm:$0xff]
    %v489 = vld [vmem:[#allocation7 + $0x890] sm:$0xff]
    %v490 = vld [vmem:[#allocation7 + $0x898] sm:$0xff]
    %v491 = vld [vmem:[#allocation7 + $0x8a0] sm:$0xff]
    %v492 = vld [vmem:[#allocation7 + $0x8a8] sm:$0xff]
    %v493 = vld [vmem:[#allocation7 + $0x8b0] sm:$0xff]
    %v494 = vld [vmem:[#allocation7 + $0x8b8] sm:$0xff]
    %v495 = vld [vmem:[#allocation7 + $0x8c0] sm:$0xff]
    %v496 = vld [vmem:[#allocation7 + $0x8c8] sm:$0xff]
    %v497 = vld [vmem:[#allocation7 + $0x8d0] sm:$0xff]
    %v498 = vld [vmem:[#allocation7 + $0x8d8] sm:$0xff]
    %v499 = vld [vmem:[#allocation7 + $0x8e0] sm:$0xff]
    %v500 = vld [vmem:[#allocation7 + $0x8e8] sm:$0xff]
    %v501 = vld [vmem:[#allocation7 + $0x8f0] sm:$0xff]
    %v502 = vld [vmem:[#allocation7 + $0x8f8] sm:$0xff]
    %v503 = vld [vmem:[#allocation7 + $0x900] sm:$0xff]
    %v504 = vld [vmem:[#allocation7 + $0x908] sm:$0xff]
    %v505 = vld [vmem:[#allocation7 + $0x910] sm:$0xff]
    %v506 = vld [vmem:[#allocation7 + $0x918] sm:$0xff]
    %v507 = vld [vmem:[#allocation7 + $0x920] sm:$0xff]
    %v508 = vld [vmem:[#allocation7 + $0x928] sm:$0xff]
    %v509 = vld [vmem:[#allocation7 + $0x930] sm:$0xff]
    %v510 = vld [vmem:[#allocation7 + $0x938] sm:$0xff]
    %v511 = vld [vmem:[#allocation7 + $0x940] sm:$0xff]
    %v512 = vld [vmem:[#allocation7 + $0x948] sm:$0xff]
    %v513 = vld [vmem:[#allocation7 + $0x950] sm:$0xff]
    %v514 = vld [vmem:[#allocation7 + $0x958] sm:$0xff]
    %v515 = vld [vmem:[#allocation7 + $0x960] sm:$0xff]
    %v516 = vld [vmem:[#allocation7 + $0x968] sm:$0xff]
    %v517 = vld [vmem:[#allocation7 + $0x970] sm:$0xff]
    %v518 = vld [vmem:[#allocation7 + $0x978] sm:$0xff]
    %v519 = vld [vmem:[#allocation7 + $0x980] sm:$0xff]
    %v520 = vld [vmem:[#allocation7 + $0x988] sm:$0xff]
    %v521 = vld [vmem:[#allocation7 + $0x990] sm:$0xff]
    %v522 = vld [vmem:[#allocation7 + $0x998] sm:$0xff]
    %v523 = vld [vmem:[#allocation7 + $0x9a0] sm:$0xff]
    %v524 = vld [vmem:[#allocation7 + $0x9a8] sm:$0xff]
    %v525 = vld [vmem:[#allocation7 + $0x9b0] sm:$0xff]
    %v526 = vld [vmem:[#allocation7 + $0x9b8] sm:$0xff]
    %v527 = vld [vmem:[#allocation7 + $0x9c0] sm:$0xff]
    %v528 = vld [vmem:[#allocation7 + $0x9c8] sm:$0xff]
    %v529 = vld [vmem:[#allocation7 + $0x9d0] sm:$0xff]
    %v530 = vld [vmem:[#allocation7 + $0x9d8] sm:$0xff]
    %v531 = vld [vmem:[#allocation7 + $0x9e0] sm:$0xff]
    %v532 = vld [vmem:[#allocation7 + $0x9e8] sm:$0xff]
    %v533 = vld [vmem:[#allocation7 + $0x9f0] sm:$0xff]
    %v534 = vld [vmem:[#allocation7 + $0x9f8] sm:$0xff]
    %v535 = vld [vmem:[#allocation7 + $0xa00] sm:$0xff]
    %v536 = vld [vmem:[#allocation7 + $0xa08] sm:$0xff]
    %v537 = vld [vmem:[#allocation7 + $0xa10] sm:$0xff]
    %v538 = vld [vmem:[#allocation7 + $0xa18] sm:$0xff]
    %v539 = vld [vmem:[#allocation7 + $0xa20] sm:$0xff]
    %v540 = vld [vmem:[#allocation7 + $0xa28] sm:$0xff]
    %v541 = vld [vmem:[#allocation7 + $0xa30] sm:$0xff]
    %v542 = vld [vmem:[#allocation7 + $0xa38] sm:$0xff]
    %v543 = vld [vmem:[#allocation7 + $0xa40] sm:$0xff]
    %v544 = vld [vmem:[#allocation7 + $0xa48] sm:$0xff]
    %v545 = vld [vmem:[#allocation7 + $0xa50] sm:$0xff]
    %v546 = vld [vmem:[#allocation7 + $0xa58] sm:$0xff]
    %v547 = vld [vmem:[#allocation7 + $0xa60] sm:$0xff]
    %v548 = vld [vmem:[#allocation7 + $0xa68] sm:$0xff]
    %v549 = vld [vmem:[#allocation7 + $0xa70] sm:$0xff]
    %v550 = vld [vmem:[#allocation7 + $0xa78] sm:$0xff]
    %v551 = vld [vmem:[#allocation7 + $0xa80] sm:$0xff]
    %v552 = vld [vmem:[#allocation7 + $0xa88] sm:$0xff]
    %v553 = vld [vmem:[#allocation7 + $0xa90] sm:$0xff]
    %v554 = vld [vmem:[#allocation7 + $0xa98] sm:$0xff]
    %v555 = vld [vmem:[#allocation7 + $0xaa0] sm:$0xff]
    %v556 = vld [vmem:[#allocation7 + $0xaa8] sm:$0xff]
    %v557 = vld [vmem:[#allocation7 + $0xab0] sm:$0xff]
    %v558 = vld [vmem:[#allocation7 + $0xab8] sm:$0xff]
    %v559 = vld [vmem:[#allocation7 + $0xac0] sm:$0xff]
    %v560 = vld [vmem:[#allocation7 + $0xac8] sm:$0xff]
    %v561 = vld [vmem:[#allocation7 + $0xad0] sm:$0xff]
    %v562 = vld [vmem:[#allocation7 + $0xad8] sm:$0xff]
    %v563 = vld [vmem:[#allocation7 + $0xae0] sm:$0xff]
    %v564 = vld [vmem:[#allocation7 + $0xae8] sm:$0xff]
    %v565 = vld [vmem:[#allocation7 + $0xaf0] sm:$0xff]
    %v566 = vld [vmem:[#allocation7 + $0xaf8] sm:$0xff]
    %v567 = vld [vmem:[#allocation7 + $0xb00] sm:$0xff]
    %v568 = vld [vmem:[#allocation7 + $0xb08] sm:$0xff]
    %v569 = vld [vmem:[#allocation7 + $0xb10] sm:$0xff]
    %v570 = vld [vmem:[#allocation7 + $0xb18] sm:$0xff]
    %v571 = vld [vmem:[#allocation7 + $0xb20] sm:$0xff]
    %v572 = vld [vmem:[#allocation7 + $0xb28] sm:$0xff]
    %v573 = vld [vmem:[#allocation7 + $0xb30] sm:$0xff]
    %v574 = vld [vmem:[#allocation7 + $0xb38] sm:$0xff]
    %v575 = vld [vmem:[#allocation7 + $0xb40] sm:$0xff]
    %v576 = vld [vmem:[#allocation7 + $0xb48] sm:$0xff]
    %v577 = vld [vmem:[#allocation7 + $0xb50] sm:$0xff]
    %v578 = vld [vmem:[#allocation7 + $0xb58] sm:$0xff]
    %v579 = vld [vmem:[#allocation7 + $0xb60] sm:$0xff]
    %v580 = vld [vmem:[#allocation7 + $0xb68] sm:$0xff]
    %v581 = vld [vmem:[#allocation7 + $0xb70] sm:$0xff]
    %v582 = vld [vmem:[#allocation7 + $0xb78] sm:$0xff]
    %v583 = vld [vmem:[#allocation7 + $0xb80] sm:$0xff]
    %v584 = vld [vmem:[#allocation7 + $0xb88] sm:$0xff]
    %v585 = vld [vmem:[#allocation7 + $0xb90] sm:$0xff]
    %v586 = vld [vmem:[#allocation7 + $0xb98] sm:$0xff]
    %v587 = vld [vmem:[#allocation7 + $0xba0] sm:$0xff]
    %v588 = vld [vmem:[#allocation7 + $0xba8] sm:$0xff]
    %v589 = vld [vmem:[#allocation7 + $0xbb0] sm:$0xff]
    %v590 = vld [vmem:[#allocation7 + $0xbb8] sm:$0xff]
    %v591 = vld [vmem:[#allocation7 + $0xbc0] sm:$0xff]
    %v592 = vld [vmem:[#allocation7 + $0xbc8] sm:$0xff]
    %v593 = vld [vmem:[#allocation7 + $0xbd0] sm:$0xff]
    %v594 = vld [vmem:[#allocation7 + $0xbd8] sm:$0xff]
    %v595 = vld [vmem:[#allocation7 + $0xbe0] sm:$0xff]
    %v596 = vld [vmem:[#allocation7 + $0xbe8] sm:$0xff]
    %v597 = vld [vmem:[#allocation7 + $0xbf0] sm:$0xff]
    %v598 = vld [vmem:[#allocation7 + $0xbf8] sm:$0xff]
    %v599 = vld [vmem:[#allocation7 + $0xc00] sm:$0xff]
    %v600 = vld [vmem:[#allocation7 + $0xc08] sm:$0xff]
    %v601 = vld [vmem:[#allocation7 + $0xc10] sm:$0xff]
    %v602 = vld [vmem:[#allocation7 + $0xc18] sm:$0xff]
    %v603 = vld [vmem:[#allocation7 + $0xc20] sm:$0xff]
    %v604 = vld [vmem:[#allocation7 + $0xc28] sm:$0xff]
    %v605 = vld [vmem:[#allocation7 + $0xc30] sm:$0xff]
    %v606 = vld [vmem:[#allocation7 + $0xc38] sm:$0xff]
    %v607 = vld [vmem:[#allocation7 + $0xc40] sm:$0xff]
    %v608 = vld [vmem:[#allocation7 + $0xc48] sm:$0xff]
    %v609 = vld [vmem:[#allocation7 + $0xc50] sm:$0xff]
    %v610 = vld [vmem:[#allocation7 + $0xc58] sm:$0xff]
    %v611 = vld [vmem:[#allocation7 + $0xc60] sm:$0xff]
    %v612 = vld [vmem:[#allocation7 + $0xc68] sm:$0xff]
    %v613 = vld [vmem:[#allocation7 + $0xc70] sm:$0xff]
    %v614 = vld [vmem:[#allocation7 + $0xc78] sm:$0xff]
    %v615 = vld [vmem:[#allocation7 + $0xc80] sm:$0xff]
    %v616 = vld [vmem:[#allocation7 + $0xc88] sm:$0xff]
    %v617 = vld [vmem:[#allocation7 + $0xc90] sm:$0xff]
    %v618 = vld [vmem:[#allocation7 + $0xc98] sm:$0xff]
    %v619 = vld [vmem:[#allocation7 + $0xca0] sm:$0xff]
    %v620 = vld [vmem:[#allocation7 + $0xca8] sm:$0xff]
    %v621 = vld [vmem:[#allocation7 + $0xcb0] sm:$0xff]
    %v622 = vld [vmem:[#allocation7 + $0xcb8] sm:$0xff]
    %v623 = vld [vmem:[#allocation7 + $0xcc0] sm:$0xff]
    %v624 = vld [vmem:[#allocation7 + $0xcc8] sm:$0xff]
    %v625 = vld [vmem:[#allocation7 + $0xcd0] sm:$0xff]
    %v626 = vld [vmem:[#allocation7 + $0xcd8] sm:$0xff]
    %v627 = vld [vmem:[#allocation7 + $0xce0] sm:$0xff]
    %v628 = vld [vmem:[#allocation7 + $0xce8] sm:$0xff]
    %v629 = vld [vmem:[#allocation7 + $0xcf0] sm:$0xff]
    %v630 = vld [vmem:[#allocation7 + $0xcf8] sm:$0xff]
    %v631 = vld [vmem:[#allocation7 + $0xd00] sm:$0xff]
    %v632 = vld [vmem:[#allocation7 + $0xd08] sm:$0xff]
    %v633 = vld [vmem:[#allocation7 + $0xd10] sm:$0xff]
    %v634 = vld [vmem:[#allocation7 + $0xd18] sm:$0xff]
    %v635 = vld [vmem:[#allocation7 + $0xd20] sm:$0xff]
    %v636 = vld [vmem:[#allocation7 + $0xd28] sm:$0xff]
    %v637 = vld [vmem:[#allocation7 + $0xd30] sm:$0xff]
    %v638 = vld [vmem:[#allocation7 + $0xd38] sm:$0xff]
    %v639 = vld [vmem:[#allocation7 + $0xd40] sm:$0xff]
    %v640 = vld [vmem:[#allocation7 + $0xd48] sm:$0xff]
    %v641 = vld [vmem:[#allocation7 + $0xd50] sm:$0xff]
    %v642 = vld [vmem:[#allocation7 + $0xd58] sm:$0xff]
    %v643 = vld [vmem:[#allocation7 + $0xd60] sm:$0xff]
    %v644 = vld [vmem:[#allocation7 + $0xd68] sm:$0xff]
    %v645 = vld [vmem:[#allocation7 + $0xd70] sm:$0xff]
    %v646 = vld [vmem:[#allocation7 + $0xd78] sm:$0xff]
    %v647 = vld [vmem:[#allocation7 + $0xd80] sm:$0xff]
    %v648 = vld [vmem:[#allocation7 + $0xd88] sm:$0xff]
    %v649 = vld [vmem:[#allocation7 + $0xd90] sm:$0xff]
    %v650 = vld [vmem:[#allocation7 + $0xd98] sm:$0xff]
    %v651 = vld [vmem:[#allocation7 + $0xda0] sm:$0xff]
    %v652 = vld [vmem:[#allocation7 + $0xda8] sm:$0xff]
    %v653 = vld [vmem:[#allocation7 + $0xdb0] sm:$0xff]
    %v654 = vld [vmem:[#allocation7 + $0xdb8] sm:$0xff]
    %v655 = vld [vmem:[#allocation7 + $0xdc0] sm:$0xff]
    %v656 = vld [vmem:[#allocation7 + $0xdc8] sm:$0xff]
    %v657 = vld [vmem:[#allocation7 + $0xdd0] sm:$0xff]
    %v658 = vld [vmem:[#allocation7 + $0xdd8] sm:$0xff]
    %v659 = vld [vmem:[#allocation7 + $0xde0] sm:$0xff]
    %v660 = vld [vmem:[#allocation7 + $0xde8] sm:$0xff]
    %v661 = vld [vmem:[#allocation7 + $0xdf0] sm:$0xff]
    %v662 = vld [vmem:[#allocation7 + $0xdf8] sm:$0xff]
    %v663 = vld [vmem:[#allocation7 + $0xe00] sm:$0xff]
    %v664 = vld [vmem:[#allocation7 + $0xe08] sm:$0xff]
    %v665 = vld [vmem:[#allocation7 + $0xe10] sm:$0xff]
    %v666 = vld [vmem:[#allocation7 + $0xe18] sm:$0xff]
    %v667 = vld [vmem:[#allocation7 + $0xe20] sm:$0xff]
    %v668 = vld [vmem:[#allocation7 + $0xe28] sm:$0xff]
    %v669 = vld [vmem:[#allocation7 + $0xe30] sm:$0xff]
    %v670 = vld [vmem:[#allocation7 + $0xe38] sm:$0xff]
    %v671 = vld [vmem:[#allocation7 + $0xe40] sm:$0xff]
    %v672 = vld [vmem:[#allocation7 + $0xe48] sm:$0xff]
    %v673 = vld [vmem:[#allocation7 + $0xe50] sm:$0xff]
    %v674 = vld [vmem:[#allocation7 + $0xe58] sm:$0xff]
    %v675 = vld [vmem:[#allocation7 + $0xe60] sm:$0xff]
    %v676 = vld [vmem:[#allocation7 + $0xe68] sm:$0xff]
    %v677 = vld [vmem:[#allocation7 + $0xe70] sm:$0xff]
    %v678 = vld [vmem:[#allocation7 + $0xe78] sm:$0xff]
    %v679 = vld [vmem:[#allocation7 + $0xe80] sm:$0xff]
    %v680 = vld [vmem:[#allocation7 + $0xe88] sm:$0xff]
    %v681 = vld [vmem:[#allocation7 + $0xe90] sm:$0xff]
    %v682 = vld [vmem:[#allocation7 + $0xe98] sm:$0xff]
    %v683 = vld [vmem:[#allocation7 + $0xea0] sm:$0xff]
    %v684 = vld [vmem:[#allocation7 + $0xea8] sm:$0xff]
    %v685 = vld [vmem:[#allocation7 + $0xeb0] sm:$0xff]
    %v686 = vld [vmem:[#allocation7 + $0xeb8] sm:$0xff]
    %v687 = vld [vmem:[#allocation7 + $0xec0] sm:$0xff]
    %v688 = vld [vmem:[#allocation7 + $0xec8] sm:$0xff]
    %v689 = vld [vmem:[#allocation7 + $0xed0] sm:$0xff]
    %v690 = vld [vmem:[#allocation7 + $0xed8] sm:$0xff]
    %v691 = vld [vmem:[#allocation7 + $0xee0] sm:$0xff]
    %v692 = vld [vmem:[#allocation7 + $0xee8] sm:$0xff]
    %v693 = vld [vmem:[#allocation7 + $0xef0] sm:$0xff]
    %v694 = vld [vmem:[#allocation7 + $0xef8] sm:$0xff]
    %v695 = vld [vmem:[#allocation7 + $0xf00] sm:$0xff]
    %v696 = vld [vmem:[#allocation7 + $0xf08] sm:$0xff]
    %v697 = vld [vmem:[#allocation7 + $0xf10] sm:$0xff]
    %v698 = vld [vmem:[#allocation7 + $0xf18] sm:$0xff]
    %v699 = vld [vmem:[#allocation7 + $0xf20] sm:$0xff]
    %v700 = vld [vmem:[#allocation7 + $0xf28] sm:$0xff]
    %v701 = vld [vmem:[#allocation7 + $0xf30] sm:$0xff]
    %v702 = vld [vmem:[#allocation7 + $0xf38] sm:$0xff]
    %v703 = vld [vmem:[#allocation7 + $0xf40] sm:$0xff]
    %v704 = vld [vmem:[#allocation7 + $0xf48] sm:$0xff]
    %v705 = vld [vmem:[#allocation7 + $0xf50] sm:$0xff]
    %v706 = vld [vmem:[#allocation7 + $0xf58] sm:$0xff]
    %v707 = vld [vmem:[#allocation7 + $0xf60] sm:$0xff]
    %v708 = vld [vmem:[#allocation7 + $0xf68] sm:$0xff]
    %v709 = vld [vmem:[#allocation7 + $0xf70] sm:$0xff]
    %v710 = vld [vmem:[#allocation7 + $0xf78] sm:$0xff]
    %v711 = vld [vmem:[#allocation7 + $0xf80] sm:$0xff]
    %v712 = vld [vmem:[#allocation7 + $0xf88] sm:$0xff]
    %v713 = vld [vmem:[#allocation7 + $0xf90] sm:$0xff]
    %v714 = vld [vmem:[#allocation7 + $0xf98] sm:$0xff]
    %v715 = vld [vmem:[#allocation7 + $0xfa0] sm:$0xff]
    %v716 = vld [vmem:[#allocation7 + $0xfa8] sm:$0xff]
    %v717 = vld [vmem:[#allocation7 + $0xfb0] sm:$0xff]
    %v718 = vld [vmem:[#allocation7 + $0xfb8] sm:$0xff]
    %v719 = vld [vmem:[#allocation7 + $0xfc0] sm:$0xff]
    %v720 = vld [vmem:[#allocation7 + $0xfc8] sm:$0xff]
    %v721 = vld [vmem:[#allocation7 + $0xfd0] sm:$0xff]
    %v722 = vld [vmem:[#allocation7 + $0xfd8] sm:$0xff]
    %v723 = vld [vmem:[#allocation7 + $0xfe0] sm:$0xff]
    %v724 = vld [vmem:[#allocation7 + $0xfe8] sm:$0xff]
    %v725 = vld [vmem:[#allocation7 + $0xff0] sm:$0xff]
    %v726 = vld [vmem:[#allocation7 + $0xff8] sm:$0xff]
    %v727 = vld [vmem:[#allocation7 + $0x1000] sm:$0xff]
    %v728 = vld [vmem:[#allocation7 + $0x1008] sm:$0xff]
    %v729 = vld [vmem:[#allocation7 + $0x1010] sm:$0xff]
    %v730 = vld [vmem:[#allocation7 + $0x1018] sm:$0xff]
    %v731 = vld [vmem:[#allocation7 + $0x1020] sm:$0xff]
    %v732 = vld [vmem:[#allocation7 + $0x1028] sm:$0xff]
    %v733 = vld [vmem:[#allocation7 + $0x1030] sm:$0xff]
    %v734 = vld [vmem:[#allocation7 + $0x1038] sm:$0xff]
    %v735 = vld [vmem:[#allocation7 + $0x1040] sm:$0xff]
    %v736 = vld [vmem:[#allocation7 + $0x1048] sm:$0xff]
    %v737 = vld [vmem:[#allocation7 + $0x1050] sm:$0xff]
    %v738 = vld [vmem:[#allocation7 + $0x1058] sm:$0xff]
    %v739 = vld [vmem:[#allocation7 + $0x1060] sm:$0xff]
    %v740 = vld [vmem:[#allocation7 + $0x1068] sm:$0xff]
    %v741 = vld [vmem:[#allocation7 + $0x1070] sm:$0xff]
    %v742 = vld [vmem:[#allocation7 + $0x1078] sm:$0xff]
    %v743 = vld [vmem:[#allocation7 + $0x1080] sm:$0xff]
    %v744 = vld [vmem:[#allocation7 + $0x1088] sm:$0xff]
    %v745 = vld [vmem:[#allocation7 + $0x1090] sm:$0xff]
    %v746 = vld [vmem:[#allocation7 + $0x1098] sm:$0xff]
    %v747 = vld [vmem:[#allocation7 + $0x10a0] sm:$0xff]
    %v748 = vld [vmem:[#allocation7 + $0x10a8] sm:$0xff]
    %v749 = vld [vmem:[#allocation7 + $0x10b0] sm:$0xff]
    %v750 = vld [vmem:[#allocation7 + $0x10b8] sm:$0xff]
    %v751 = vld [vmem:[#allocation7 + $0x10c0] sm:$0xff]
    %v752 = vld [vmem:[#allocation7 + $0x10c8] sm:$0xff]
    %v753 = vld [vmem:[#allocation7 + $0x10d0] sm:$0xff]
    %v754 = vld [vmem:[#allocation7 + $0x10d8] sm:$0xff]
    %v755 = vld [vmem:[#allocation7 + $0x10e0] sm:$0xff]
    %v756 = vld [vmem:[#allocation7 + $0x10e8] sm:$0xff]
    %v757 = vld [vmem:[#allocation7 + $0x10f0] sm:$0xff]
    %v758 = vld [vmem:[#allocation7 + $0x10f8] sm:$0xff]
    %v759 = vld [vmem:[#allocation7 + $0x1100] sm:$0xff]
    %v760 = vld [vmem:[#allocation7 + $0x1108] sm:$0xff]
    %v761 = vld [vmem:[#allocation7 + $0x1110] sm:$0xff]
    %v762 = vld [vmem:[#allocation7 + $0x1118] sm:$0xff]
    %v763 = vld [vmem:[#allocation7 + $0x1120] sm:$0xff]
    %v764 = vld [vmem:[#allocation7 + $0x1128] sm:$0xff]
    %v765 = vld [vmem:[#allocation7 + $0x1130] sm:$0xff]
    %v766 = vld [vmem:[#allocation7 + $0x1138] sm:$0xff]
    %v767 = vld [vmem:[#allocation7 + $0x1140] sm:$0xff]
    %v768 = vld [vmem:[#allocation7 + $0x1148] sm:$0xff]
    %v769 = vld [vmem:[#allocation7 + $0x1150] sm:$0xff]
    %v770 = vld [vmem:[#allocation7 + $0x1158] sm:$0xff]
    %v771 = vld [vmem:[#allocation7 + $0x1160] sm:$0xff]
    %v772 = vld [vmem:[#allocation7 + $0x1168] sm:$0xff]
    %v773 = vld [vmem:[#allocation7 + $0x1170] sm:$0xff]
    %v774 = vld [vmem:[#allocation7 + $0x1178] sm:$0xff]
    %v775 = vld [vmem:[#allocation7 + $0x1180] sm:$0xff]
    %v776 = vld [vmem:[#allocation7 + $0x1188] sm:$0xff]
    %v777 = vld [vmem:[#allocation7 + $0x1190] sm:$0xff]
    %v778 = vld [vmem:[#allocation7 + $0x1198] sm:$0xff]
    %v779 = vld [vmem:[#allocation7 + $0x11a0] sm:$0xff]
    %v780 = vld [vmem:[#allocation7 + $0x11a8] sm:$0xff]
    %v781 = vld [vmem:[#allocation7 + $0x11b0] sm:$0xff]
    %v782 = vld [vmem:[#allocation7 + $0x11b8] sm:$0xff]
    %v783 = vld [vmem:[#allocation7 + $0x11c0] sm:$0xff]
    %v784 = vld [vmem:[#allocation7 + $0x11c8] sm:$0xff]
    %v785 = vld [vmem:[#allocation7 + $0x11d0] sm:$0xff]
    %v786 = vld [vmem:[#allocation7 + $0x11d8] sm:$0xff]
    %v787 = vld [vmem:[#allocation7 + $0x11e0] sm:$0xff]
    %v788 = vld [vmem:[#allocation7 + $0x11e8] sm:$0xff]
    %v789 = vld [vmem:[#allocation7 + $0x11f0] sm:$0xff]
    %v790 = vld [vmem:[#allocation7 + $0x11f8] sm:$0xff]
    %v791 = vld [vmem:[#allocation7 + $0x1200] sm:$0xff]
    %v792 = vld [vmem:[#allocation7 + $0x1208] sm:$0xff]
    %v793 = vld [vmem:[#allocation7 + $0x1210] sm:$0xff]
    %v794 = vld [vmem:[#allocation7 + $0x1218] sm:$0xff]
    %v795 = vld [vmem:[#allocation7 + $0x1220] sm:$0xff]
    %v796 = vld [vmem:[#allocation7 + $0x1228] sm:$0xff]
    %v797 = vld [vmem:[#allocation7 + $0x1230] sm:$0xff]
    %v798 = vld [vmem:[#allocation7 + $0x1238] sm:$0xff]
    %v799 = vld [vmem:[#allocation7 + $0x1240] sm:$0xff]
    %v800 = vld [vmem:[#allocation7 + $0x1248] sm:$0xff]
    %v801 = vld [vmem:[#allocation7 + $0x1250] sm:$0xff]
    %v802 = vld [vmem:[#allocation7 + $0x1258] sm:$0xff]
    %v803 = vld [vmem:[#allocation7 + $0x1260] sm:$0xff]
    %v804 = vld [vmem:[#allocation7 + $0x1268] sm:$0xff]
    %v805 = vld [vmem:[#allocation7 + $0x1270] sm:$0xff]
    %v806 = vld [vmem:[#allocation7 + $0x1278] sm:$0xff]
    %v807 = vld [vmem:[#allocation7 + $0x1280] sm:$0xff]
    %v808 = vld [vmem:[#allocation7 + $0x1288] sm:$0xff]
    %v809 = vld [vmem:[#allocation7 + $0x1290] sm:$0xff]
    %v810 = vld [vmem:[#allocation7 + $0x1298] sm:$0xff]
    %v811 = vld [vmem:[#allocation7 + $0x12a0] sm:$0xff]
    %v812 = vld [vmem:[#allocation7 + $0x12a8] sm:$0xff]
    %v813 = vld [vmem:[#allocation7 + $0x12b0] sm:$0xff]
    %v814 = vld [vmem:[#allocation7 + $0x12b8] sm:$0xff]
    %v815 = vld [vmem:[#allocation7 + $0x12c0] sm:$0xff]
    %v816 = vld [vmem:[#allocation7 + $0x12c8] sm:$0xff]
    %v817 = vld [vmem:[#allocation7 + $0x12d0] sm:$0xff]
    %v818 = vld [vmem:[#allocation7 + $0x12d8] sm:$0xff]
    %v819 = vld [vmem:[#allocation7 + $0x12e0] sm:$0xff]
    %v820 = vld [vmem:[#allocation7 + $0x12e8] sm:$0xff]
    %v821 = vld [vmem:[#allocation7 + $0x12f0] sm:$0xff]
    %v822 = vld [vmem:[#allocation7 + $0x12f8] sm:$0xff]
    %v823 = vld [vmem:[#allocation7 + $0x1300] sm:$0xff]
    %v824 = vld [vmem:[#allocation7 + $0x1308] sm:$0xff]
    %v825 = vld [vmem:[#allocation7 + $0x1310] sm:$0xff]
    %v826 = vld [vmem:[#allocation7 + $0x1318] sm:$0xff]
    %v827 = vld [vmem:[#allocation7 + $0x1320] sm:$0xff]
    %v828 = vld [vmem:[#allocation7 + $0x1328] sm:$0xff]
    %v829 = vld [vmem:[#allocation7 + $0x1330] sm:$0xff]
    %v830 = vld [vmem:[#allocation7 + $0x1338] sm:$0xff]
    %v831 = vld [vmem:[#allocation7 + $0x1340] sm:$0xff]
    %v832 = vld [vmem:[#allocation7 + $0x1348] sm:$0xff]
    %v833 = vld [vmem:[#allocation7 + $0x1350] sm:$0xff]
    %v834 = vld [vmem:[#allocation7 + $0x1358] sm:$0xff]
    %v835 = vld [vmem:[#allocation7 + $0x1360] sm:$0xff]
    %v836 = vld [vmem:[#allocation7 + $0x1368] sm:$0xff]
    %v837 = vld [vmem:[#allocation7 + $0x1370] sm:$0xff]
    %v838 = vld [vmem:[#allocation7 + $0x1378] sm:$0xff]
    %v839 = vld [vmem:[#allocation7 + $0x1380] sm:$0xff]
    %v840 = vld [vmem:[#allocation7 + $0x1388] sm:$0xff]
    %v841 = vld [vmem:[#allocation7 + $0x1390] sm:$0xff]
    %v842 = vld [vmem:[#allocation7 + $0x1398] sm:$0xff]
    %v843 = vld [vmem:[#allocation7 + $0x13a0] sm:$0xff]
    %v844 = vld [vmem:[#allocation7 + $0x13a8] sm:$0xff]
    %v845 = vld [vmem:[#allocation7 + $0x13b0] sm:$0xff]
    %v846 = vld [vmem:[#allocation7 + $0x13b8] sm:$0xff]
    %v847 = vld [vmem:[#allocation7 + $0x13c0] sm:$0xff]
    %v848 = vld [vmem:[#allocation7 + $0x13c8] sm:$0xff]
    %v849 = vld [vmem:[#allocation7 + $0x13d0] sm:$0xff]
    %v850 = vld [vmem:[#allocation7 + $0x13d8] sm:$0xff]
    %v851 = vld [vmem:[#allocation7 + $0x13e0] sm:$0xff]
    %v852 = vld [vmem:[#allocation7 + $0x13e8] sm:$0xff]
    %v853 = vld [vmem:[#allocation7 + $0x13f0] sm:$0xff]
    %v854 = vld [vmem:[#allocation7 + $0x13f8] sm:$0xff]
    %v855 = vld [vmem:[#allocation7 + $0x1400] sm:$0xff]
    %v856 = vld [vmem:[#allocation7 + $0x1408] sm:$0xff]
    %v857 = vld [vmem:[#allocation7 + $0x1410] sm:$0xff]
    %v858 = vld [vmem:[#allocation7 + $0x1418] sm:$0xff]
    %v859 = vld [vmem:[#allocation7 + $0x1420] sm:$0xff]
    %v860 = vld [vmem:[#allocation7 + $0x1428] sm:$0xff]
    %v861 = vld [vmem:[#allocation7 + $0x1430] sm:$0xff]
    %v862 = vld [vmem:[#allocation7 + $0x1438] sm:$0xff]
    %v863 = vld [vmem:[#allocation7 + $0x1440] sm:$0xff]
    %v864 = vld [vmem:[#allocation7 + $0x1448] sm:$0xff]
    %v865 = vld [vmem:[#allocation7 + $0x1450] sm:$0xff]
    %v866 = vld [vmem:[#allocation7 + $0x1458] sm:$0xff]
    %v867 = vld [vmem:[#allocation7 + $0x1460] sm:$0xff]
    %v868 = vld [vmem:[#allocation7 + $0x1468] sm:$0xff]
    %v869 = vld [vmem:[#allocation7 + $0x1470] sm:$0xff]
    %v870 = vld [vmem:[#allocation7 + $0x1478] sm:$0xff]
    %v871 = vld [vmem:[#allocation7 + $0x1480] sm:$0xff]
    %v872 = vld [vmem:[#allocation7 + $0x1488] sm:$0xff]
    %v873 = vld [vmem:[#allocation7 + $0x1490] sm:$0xff]
    %v874 = vld [vmem:[#allocation7 + $0x1498] sm:$0xff]
    %v875 = vld [vmem:[#allocation7 + $0x14a0] sm:$0xff]
    %v876 = vld [vmem:[#allocation7 + $0x14a8] sm:$0xff]
    %v877 = vld [vmem:[#allocation7 + $0x14b0] sm:$0xff]
    %v878 = vld [vmem:[#allocation7 + $0x14b8] sm:$0xff]
    %v879 = vld [vmem:[#allocation7 + $0x14c0] sm:$0xff]
    %v880 = vld [vmem:[#allocation7 + $0x14c8] sm:$0xff]
    %v881 = vld [vmem:[#allocation7 + $0x14d0] sm:$0xff]
    %v882 = vld [vmem:[#allocation7 + $0x14d8] sm:$0xff]
    %v883 = vld [vmem:[#allocation7 + $0x14e0] sm:$0xff]
    %v884 = vld [vmem:[#allocation7 + $0x14e8] sm:$0xff]
    %v885 = vld [vmem:[#allocation7 + $0x14f0] sm:$0xff]
    %v886 = vld [vmem:[#allocation7 + $0x14f8] sm:$0xff]
    %v887 = vld [vmem:[#allocation7 + $0x1500] sm:$0xff]
    %v888 = vld [vmem:[#allocation7 + $0x1508] sm:$0xff]
    %v889 = vld [vmem:[#allocation7 + $0x1510] sm:$0xff]
    %v890 = vld [vmem:[#allocation7 + $0x1518] sm:$0xff]
    %v891 = vld [vmem:[#allocation7 + $0x1520] sm:$0xff]
    %v892 = vld [vmem:[#allocation7 + $0x1528] sm:$0xff]
    %v893 = vld [vmem:[#allocation7 + $0x1530] sm:$0xff]
    %v894 = vld [vmem:[#allocation7 + $0x1538] sm:$0xff]
    %v895 = vld [vmem:[#allocation7 + $0x1540] sm:$0xff]
    %v896 = vld [vmem:[#allocation7 + $0x1548] sm:$0xff]
    %v897 = vld [vmem:[#allocation7 + $0x1550] sm:$0xff]
    %v898 = vld [vmem:[#allocation7 + $0x1558] sm:$0xff]
    %v899 = vld [vmem:[#allocation7 + $0x1560] sm:$0xff]
    %v900 = vld [vmem:[#allocation7 + $0x1568] sm:$0xff]
    %v901 = vld [vmem:[#allocation7 + $0x1570] sm:$0xff]
    %v902 = vld [vmem:[#allocation7 + $0x1578] sm:$0xff]
    %v903 = vld [vmem:[#allocation7 + $0x1580] sm:$0xff]
    %v904 = vld [vmem:[#allocation7 + $0x1588] sm:$0xff]
    %v905 = vld [vmem:[#allocation7 + $0x1590] sm:$0xff]
    %v906 = vld [vmem:[#allocation7 + $0x1598] sm:$0xff]
    %v907 = vld [vmem:[#allocation7 + $0x15a0] sm:$0xff]
    %v908 = vld [vmem:[#allocation7 + $0x15a8] sm:$0xff]
    %v909 = vld [vmem:[#allocation7 + $0x15b0] sm:$0xff]
    %v910 = vld [vmem:[#allocation7 + $0x15b8] sm:$0xff]
    %v911 = vld [vmem:[#allocation7 + $0x15c0] sm:$0xff]
    %v912 = vld [vmem:[#allocation7 + $0x15c8] sm:$0xff]
    %v913 = vld [vmem:[#allocation7 + $0x15d0] sm:$0xff]
    %v914 = vld [vmem:[#allocation7 + $0x15d8] sm:$0xff]
    %v915 = vld [vmem:[#allocation7 + $0x15e0] sm:$0xff]
    %v916 = vld [vmem:[#allocation7 + $0x15e8] sm:$0xff]
    %v917 = vld [vmem:[#allocation7 + $0x15f0] sm:$0xff]
    %v918 = vld [vmem:[#allocation7 + $0x15f8] sm:$0xff]
    %v919 = vld [vmem:[#allocation7 + $0x1600] sm:$0xff]
    %v920 = vld [vmem:[#allocation7 + $0x1608] sm:$0xff]
    %v921 = vld [vmem:[#allocation7 + $0x1610] sm:$0xff]
    %v922 = vld [vmem:[#allocation7 + $0x1618] sm:$0xff]
    %v923 = vld [vmem:[#allocation7 + $0x1620] sm:$0xff]
    %v924 = vld [vmem:[#allocation7 + $0x1628] sm:$0xff]
    %v925 = vld [vmem:[#allocation7 + $0x1630] sm:$0xff]
    %v926 = vld [vmem:[#allocation7 + $0x1638] sm:$0xff]
    %v927 = vld [vmem:[#allocation7 + $0x1640] sm:$0xff]
    %v928 = vld [vmem:[#allocation7 + $0x1648] sm:$0xff]
    %v929 = vld [vmem:[#allocation7 + $0x1650] sm:$0xff]
    %v930 = vld [vmem:[#allocation7 + $0x1658] sm:$0xff]
    %v931 = vld [vmem:[#allocation7 + $0x1660] sm:$0xff]
    %v932 = vld [vmem:[#allocation7 + $0x1668] sm:$0xff]
    %v933 = vld [vmem:[#allocation7 + $0x1670] sm:$0xff]
    %v934 = vld [vmem:[#allocation7 + $0x1678] sm:$0xff]
    %v935 = vld [vmem:[#allocation7 + $0x1680] sm:$0xff]
    %v936 = vld [vmem:[#allocation7 + $0x1688] sm:$0xff]
    %v937 = vld [vmem:[#allocation7 + $0x1690] sm:$0xff]
    %v938 = vld [vmem:[#allocation7 + $0x1698] sm:$0xff]
    %v939 = vld [vmem:[#allocation7 + $0x16a0] sm:$0xff]
    %v940 = vld [vmem:[#allocation7 + $0x16a8] sm:$0xff]
    %v941 = vld [vmem:[#allocation7 + $0x16b0] sm:$0xff]
    %v942 = vld [vmem:[#allocation7 + $0x16b8] sm:$0xff]
    %v943 = vld [vmem:[#allocation7 + $0x16c0] sm:$0xff]
    %v944 = vld [vmem:[#allocation7 + $0x16c8] sm:$0xff]
    %v945 = vld [vmem:[#allocation7 + $0x16d0] sm:$0xff]
    %v946 = vld [vmem:[#allocation7 + $0x16d8] sm:$0xff]
    %v947 = vld [vmem:[#allocation7 + $0x16e0] sm:$0xff]
    %v948 = vld [vmem:[#allocation7 + $0x16e8] sm:$0xff]
    %v949 = vld [vmem:[#allocation7 + $0x16f0] sm:$0xff]
    %v950 = vld [vmem:[#allocation7 + $0x16f8] sm:$0xff]
    %v951 = vld [vmem:[#allocation7 + $0x1700] sm:$0xff]
    %v952 = vld [vmem:[#allocation7 + $0x1708] sm:$0xff]
    %v953 = vld [vmem:[#allocation7 + $0x1710] sm:$0xff]
    %v954 = vld [vmem:[#allocation7 + $0x1718] sm:$0xff]
    %v955 = vld [vmem:[#allocation7 + $0x1720] sm:$0xff]
    %v956 = vld [vmem:[#allocation7 + $0x1728] sm:$0xff]
    %v957 = vld [vmem:[#allocation7 + $0x1730] sm:$0xff]
    %v958 = vld [vmem:[#allocation7 + $0x1738] sm:$0xff]
    %v959 = vld [vmem:[#allocation7 + $0x1740] sm:$0xff]
    %v960 = vld [vmem:[#allocation7 + $0x1748] sm:$0xff]
    %v961 = vld [vmem:[#allocation7 + $0x1750] sm:$0xff]
    %v962 = vld [vmem:[#allocation7 + $0x1758] sm:$0xff]
    %v963 = vld [vmem:[#allocation7 + $0x1760] sm:$0xff]
    %v964 = vld [vmem:[#allocation7 + $0x1768] sm:$0xff]
    %v965 = vld [vmem:[#allocation7 + $0x1770] sm:$0xff]
    %v966 = vld [vmem:[#allocation7 + $0x1778] sm:$0xff]
    %v967 = vld [vmem:[#allocation7 + $0x1780] sm:$0xff]
    %v968 = vld [vmem:[#allocation7 + $0x1788] sm:$0xff]
    %v969 = vld [vmem:[#allocation7 + $0x1790] sm:$0xff]
    %v970 = vld [vmem:[#allocation7 + $0x1798] sm:$0xff]
    %v971 = vld [vmem:[#allocation7 + $0x17a0] sm:$0xff]
    %v972 = vld [vmem:[#allocation7 + $0x17a8] sm:$0xff]
    %v973 = vld [vmem:[#allocation7 + $0x17b0] sm:$0xff]
    %v974 = vld [vmem:[#allocation7 + $0x17b8] sm:$0xff]
    %v975 = vld [vmem:[#allocation7 + $0x17c0] sm:$0xff]
    %v976 = vld [vmem:[#allocation7 + $0x17c8] sm:$0xff]
    %v977 = vld [vmem:[#allocation7 + $0x17d0] sm:$0xff]
    %v978 = vld [vmem:[#allocation7 + $0x17d8] sm:$0xff]
    %v979 = vld [vmem:[#allocation7 + $0x17e0] sm:$0xff]
    %v980 = vld [vmem:[#allocation7 + $0x17e8] sm:$0xff]
    %v981 = vld [vmem:[#allocation7 + $0x17f0] sm:$0xff]
    %v982 = vld [vmem:[#allocation7 + $0x17f8] sm:$0xff]
    %v983 = vld [vmem:[#allocation7 + $0x1800] sm:$0xff]
    %v984 = vld [vmem:[#allocation7 + $0x1808] sm:$0xff]
    %v985 = vld [vmem:[#allocation7 + $0x1810] sm:$0xff]
    %v986 = vld [vmem:[#allocation7 + $0x1818] sm:$0xff]
    %v987 = vld [vmem:[#allocation7 + $0x1820] sm:$0xff]
    %v988 = vld [vmem:[#allocation7 + $0x1828] sm:$0xff]
    %v989 = vld [vmem:[#allocation7 + $0x1830] sm:$0xff]
    %v990 = vld [vmem:[#allocation7 + $0x1838] sm:$0xff]
    %v991 = vld [vmem:[#allocation7 + $0x1840] sm:$0xff]
    %v992 = vld [vmem:[#allocation7 + $0x1848] sm:$0xff]
    %v993 = vld [vmem:[#allocation7 + $0x1850] sm:$0xff]
    %v994 = vld [vmem:[#allocation7 + $0x1858] sm:$0xff]
    %v995 = vld [vmem:[#allocation7 + $0x1860] sm:$0xff]
    %v996 = vld [vmem:[#allocation7 + $0x1868] sm:$0xff]
    %v997 = vld [vmem:[#allocation7 + $0x1870] sm:$0xff]
    %v998 = vld [vmem:[#allocation7 + $0x1878] sm:$0xff]
    %v999 = vld [vmem:[#allocation7 + $0x1880] sm:$0xff]
    %v1000 = vld [vmem:[#allocation7 + $0x1888] sm:$0xff]
    %v1001 = vld [vmem:[#allocation7 + $0x1890] sm:$0xff]
    %v1002 = vld [vmem:[#allocation7 + $0x1898] sm:$0xff]
    %v1003 = vld [vmem:[#allocation7 + $0x18a0] sm:$0xff]
    %v1004 = vld [vmem:[#allocation7 + $0x18a8] sm:$0xff]
    %v1005 = vld [vmem:[#allocation7 + $0x18b0] sm:$0xff]
    %v1006 = vld [vmem:[#allocation7 + $0x18b8] sm:$0xff]
    %v1007 = vld [vmem:[#allocation7 + $0x18c0] sm:$0xff]
    %v1008 = vld [vmem:[#allocation7 + $0x18c8] sm:$0xff]
    %v1009 = vld [vmem:[#allocation7 + $0x18d0] sm:$0xff]
    %v1010 = vld [vmem:[#allocation7 + $0x18d8] sm:$0xff]
    %v1011 = vld [vmem:[#allocation7 + $0x18e0] sm:$0xff]
    %v1012 = vld [vmem:[#allocation7 + $0x18e8] sm:$0xff]
    %v1013 = vld [vmem:[#allocation7 + $0x18f0] sm:$0xff]
    %v1014 = vld [vmem:[#allocation7 + $0x18f8] sm:$0xff]
    %v1015 = vld [vmem:[#allocation7 + $0x1900] sm:$0xff]
    %v1016 = vld [vmem:[#allocation7 + $0x1908] sm:$0xff]
    %v1017 = vld [vmem:[#allocation7 + $0x1910] sm:$0xff]
    %v1018 = vld [vmem:[#allocation7 + $0x1918] sm:$0xff]
    %v1019 = vld [vmem:[#allocation7 + $0x1920] sm:$0xff]
    %v1020 = vld [vmem:[#allocation7 + $0x1928] sm:$0xff]
    %v1021 = vld [vmem:[#allocation7 + $0x1930] sm:$0xff]
    %v1022 = vld [vmem:[#allocation7 + $0x1938] sm:$0xff]
    %v1023 = vld [vmem:[#allocation7 + $0x1940] sm:$0xff]
    %v1024 = vld [vmem:[#allocation7 + $0x1948] sm:$0xff]
    %v1025 = vld [vmem:[#allocation7 + $0x1950] sm:$0xff]
    %v1026 = vld [vmem:[#allocation7 + $0x1958] sm:$0xff]
    %v1027 = vld [vmem:[#allocation7 + $0x1960] sm:$0xff]
    %v1028 = vld [vmem:[#allocation7 + $0x1968] sm:$0xff]
    %v1029 = vld [vmem:[#allocation7 + $0x1970] sm:$0xff]
    %v1030 = vld [vmem:[#allocation7 + $0x1978] sm:$0xff]
    %v1031 = vld [vmem:[#allocation7 + $0x1980] sm:$0xff]
    %v1032 = vld [vmem:[#allocation7 + $0x1988] sm:$0xff]
    %v1033 = vld [vmem:[#allocation7 + $0x1990] sm:$0xff]
    %v1034 = vld [vmem:[#allocation7 + $0x1998] sm:$0xff]
    %v1035 = vld [vmem:[#allocation7 + $0x19a0] sm:$0xff]
    %v1036 = vld [vmem:[#allocation7 + $0x19a8] sm:$0xff]
    %v1037 = vld [vmem:[#allocation7 + $0x19b0] sm:$0xff]
    %v1038 = vld [vmem:[#allocation7 + $0x19b8] sm:$0xff]
    %v1039 = vld [vmem:[#allocation7 + $0x19c0] sm:$0xff]
    %v1040 = vld [vmem:[#allocation7 + $0x19c8] sm:$0xff]
    %v1041 = vld [vmem:[#allocation7 + $0x19d0] sm:$0xff]
    %v1042 = vld [vmem:[#allocation7 + $0x19d8] sm:$0xff]
    %v1043 = vld [vmem:[#allocation7 + $0x19e0] sm:$0xff]
    %v1044 = vld [vmem:[#allocation7 + $0x19e8] sm:$0xff]
    %v1045 = vld [vmem:[#allocation7 + $0x19f0] sm:$0xff]
    %v1046 = vld [vmem:[#allocation7 + $0x19f8] sm:$0xff]
    %v1047 = vld [vmem:[#allocation7 + $0x1a00] sm:$0xff]
    %v1048 = vld [vmem:[#allocation7 + $0x1a08] sm:$0xff]
    %v1049 = vld [vmem:[#allocation7 + $0x1a10] sm:$0xff]
    %v1050 = vld [vmem:[#allocation7 + $0x1a18] sm:$0xff]
    %v1051 = vld [vmem:[#allocation7 + $0x1a20] sm:$0xff]
    %v1052 = vld [vmem:[#allocation7 + $0x1a28] sm:$0xff]
    %v1053 = vld [vmem:[#allocation7 + $0x1a30] sm:$0xff]
    %v1054 = vld [vmem:[#allocation7 + $0x1a38] sm:$0xff]
    %v1055 = vld [vmem:[#allocation7 + $0x1a40] sm:$0xff]
    %v1056 = vld [vmem:[#allocation7 + $0x1a48] sm:$0xff]
    %v1057 = vld [vmem:[#allocation7 + $0x1a50] sm:$0xff]
    %v1058 = vld [vmem:[#allocation7 + $0x1a58] sm:$0xff]
    %v1059 = vld [vmem:[#allocation7 + $0x1a60] sm:$0xff]
    %v1060 = vld [vmem:[#allocation7 + $0x1a68] sm:$0xff]
    %v1061 = vld [vmem:[#allocation7 + $0x1a70] sm:$0xff]
    %v1062 = vld [vmem:[#allocation7 + $0x1a78] sm:$0xff]
    %v1063 = vld [vmem:[#allocation7 + $0x1a80] sm:$0xff]
    %v1064 = vld [vmem:[#allocation7 + $0x1a88] sm:$0xff]
    %v1065 = vld [vmem:[#allocation7 + $0x1a90] sm:$0xff]
    %v1066 = vld [vmem:[#allocation7 + $0x1a98] sm:$0xff]
    %v1067 = vld [vmem:[#allocation7 + $0x1aa0] sm:$0xff]
    %v1068 = vld [vmem:[#allocation7 + $0x1aa8] sm:$0xff]
    %v1069 = vld [vmem:[#allocation7 + $0x1ab0] sm:$0xff]
    %v1070 = vld [vmem:[#allocation7 + $0x1ab8] sm:$0xff]
    %v1071 = vld [vmem:[#allocation7 + $0x1ac0] sm:$0xff]
    %v1072 = vld [vmem:[#allocation7 + $0x1ac8] sm:$0xff]
    %v1073 = vld [vmem:[#allocation7 + $0x1ad0] sm:$0xff]
    %v1074 = vld [vmem:[#allocation7 + $0x1ad8] sm:$0xff]
    %v1075 = vld [vmem:[#allocation7 + $0x1ae0] sm:$0xff]
    %v1076 = vld [vmem:[#allocation7 + $0x1ae8] sm:$0xff]
    %v1077 = vld [vmem:[#allocation7 + $0x1af0] sm:$0xff]
    %v1078 = vld [vmem:[#allocation7 + $0x1af8] sm:$0xff]
    %v1079 = vld [vmem:[#allocation7 + $0x1b00] sm:$0xff]
    %v1080 = vld [vmem:[#allocation7 + $0x1b08] sm:$0xff]
    %v1081 = vld [vmem:[#allocation7 + $0x1b10] sm:$0xff]
    %v1082 = vld [vmem:[#allocation7 + $0x1b18] sm:$0xff]
    %v1083 = vld [vmem:[#allocation7 + $0x1b20] sm:$0xff]
    %v1084 = vld [vmem:[#allocation7 + $0x1b28] sm:$0xff]
    %v1085 = vld [vmem:[#allocation7 + $0x1b30] sm:$0xff]
    %v1086 = vld [vmem:[#allocation7 + $0x1b38] sm:$0xff]
    %v1087 = vld [vmem:[#allocation7 + $0x1b40] sm:$0xff]
    %v1088 = vld [vmem:[#allocation7 + $0x1b48] sm:$0xff]
    %v1089 = vld [vmem:[#allocation7 + $0x1b50] sm:$0xff]
    %v1090 = vld [vmem:[#allocation7 + $0x1b58] sm:$0xff]
    %v1091 = vld [vmem:[#allocation7 + $0x1b60] sm:$0xff]
    %v1092 = vld [vmem:[#allocation7 + $0x1b68] sm:$0xff]
    %v1093 = vld [vmem:[#allocation7 + $0x1b70] sm:$0xff]
    %v1094 = vld [vmem:[#allocation7 + $0x1b78] sm:$0xff]
    %v1095 = vld [vmem:[#allocation7 + $0x1b80] sm:$0xff]
    %v1096 = vld [vmem:[#allocation7 + $0x1b88] sm:$0xff]
    %v1097 = vld [vmem:[#allocation7 + $0x1b90] sm:$0xff]
    %v1098 = vld [vmem:[#allocation7 + $0x1b98] sm:$0xff]
    %v1099 = vld [vmem:[#allocation7 + $0x1ba0] sm:$0xff]
    %v1100 = vld [vmem:[#allocation7 + $0x1ba8] sm:$0xff]
    %v1101 = vld [vmem:[#allocation7 + $0x1bb0] sm:$0xff]
    %v1102 = vld [vmem:[#allocation7 + $0x1bb8] sm:$0xff]
    %v1103 = vld [vmem:[#allocation7 + $0x1bc0] sm:$0xff]
    %v1104 = vld [vmem:[#allocation7 + $0x1bc8] sm:$0xff]
    %v1105 = vld [vmem:[#allocation7 + $0x1bd0] sm:$0xff]
    %v1106 = vld [vmem:[#allocation7 + $0x1bd8] sm:$0xff]
    %v1107 = vld [vmem:[#allocation7 + $0x1be0] sm:$0xff]
    %v1108 = vld [vmem:[#allocation7 + $0x1be8] sm:$0xff]
    %v1109 = vld [vmem:[#allocation7 + $0x1bf0] sm:$0xff]
    %v1110 = vld [vmem:[#allocation7 + $0x1bf8] sm:$0xff]
    %v1111 = vld [vmem:[#allocation8] sm:$0xff]
    %v1113 = vlaneseq
    %v1114 = vshrl.u32 %v1113, 7
    %v1115 = vsub.s32 0, %v1114
    %v1116 = vrot.slane %v1111, %v1115
    %v1117 = vlaneseq
    %v1118 = vshrl.u32 %v1117, 7
    %v1119 = vsub.s32 1, %v1118
    %v1120 = vrot.slane %v1111, %v1119
    %v1121 = vlaneseq
    %v1122 = vshrl.u32 %v1121, 7
    %v1123 = vsub.s32 2, %v1122
    %v1124 = vrot.slane %v1111, %v1123
    %v1125 = vlaneseq
    %v1126 = vshrl.u32 %v1125, 7
    %v1127 = vsub.s32 3, %v1126
    %v1128 = vrot.slane %v1111, %v1127
    %v1129 = vlaneseq
    %v1130 = vshrl.u32 %v1129, 7
    %v1131 = vsub.s32 4, %v1130
    %v1132 = vrot.slane %v1111, %v1131
    %v1133 = vlaneseq
    %v1134 = vshrl.u32 %v1133, 7
    %v1135 = vsub.s32 5, %v1134
    %v1136 = vrot.slane %v1111, %v1135
    %v1137 = vlaneseq
    %v1138 = vshrl.u32 %v1137, 7
    %v1139 = vsub.s32 6, %v1138
    %v1140 = vrot.slane %v1111, %v1139
    %1148 = vmatprep.subr.mxu0 %v321
    %1149 = vmatpush1.msra.mxu0 %v320
    %1150 = vmatprep.subr.mxu0 %v314
    %1151 = vmatpush1.msra.mxu0 %v313
    %1152 = vmatprep.subr.mxu0 %v307
    %1153 = vmatpush1.msra.mxu0 %v306
    %1154 = vmatprep.subr.mxu0 %v300
    %1155 = vmatpush1.msra.mxu0 %v299
    %1156 = vmatprep.subr.mxu0 %v293
    %1157 = vmatpush1.msra.mxu0 %v292
    %1158 = vmatprep.subr.mxu0 %v286
    %1159 = vmatpush1.msra.mxu0 %v285
    %1160 = vmatprep.subr.mxu0 %v279
    %1161 = vmatpush1.msra.mxu0 %v278
    %1162 = vmatprep.subr.mxu0 %v272
    %1163 = vmatpush1.msra.mxu0 %v271
    %1164 = vmatprep.subr.mxu0 %v265
    %1165 = vmatpush1.msra.mxu0 %v264
    %1166 = vmatprep.subr.mxu0 %v258
    %1167 = vmatpush1.msra.mxu0 %v257
    %1168 = vmatprep.subr.mxu0 %v251
    %1169 = vmatpush1.msra.mxu0 %v250
    %1170 = vmatprep.subr.mxu0 %v244
    %1171 = vmatpush1.msra.mxu0 %v243
    %1172 = vmatprep.subr.mxu0 %v237
    %1173 = vmatpush1.msra.mxu0 %v236
    %1174 = vmatprep.subr.mxu0 %v230
    %1175 = vmatpush1.msra.mxu0 %v229
    %1176 = vmatprep.subr.mxu0 %v223
    %1177 = vmatpush1.msra.mxu0 %v222
    %1178 = vmatprep.subr.mxu0 %v216
    %1179 = vmatpush1.msra.mxu0 %v215
    %1180 = vmatprep.subr.mxu0 %v433
    %1181 = vmatpush2.msra.mxu0 %v432
    %1182 = vmatprep.subr.mxu0 %v426
    %1183 = vmatpush2.msra.mxu0 %v425
    %1184 = vmatprep.subr.mxu0 %v419
    %1185 = vmatpush2.msra.mxu0 %v418
    %1186 = vmatprep.subr.mxu0 %v412
    %1187 = vmatpush2.msra.mxu0 %v411
    %1188 = vmatprep.subr.mxu0 %v405
    %1189 = vmatpush2.msra.mxu0 %v404
    %1190 = vmatprep.subr.mxu0 %v398
    %1191 = vmatpush2.msra.mxu0 %v397
    %1192 = vmatprep.subr.mxu0 %v391
    %1193 = vmatpush2.msra.mxu0 %v390
    %1194 = vmatprep.subr.mxu0 %v384
    %1195 = vmatpush2.msra.mxu0 %v383
    %1196 = vmatprep.subr.mxu0 %v377
    %1197 = vmatpush2.msra.mxu0 %v376
    %1198 = vmatprep.subr.mxu0 %v370
    %1199 = vmatpush2.msra.mxu0 %v369
    %1200 = vmatprep.subr.mxu0 %v363
    %1201 = vmatpush2.msra.mxu0 %v362
    %1202 = vmatprep.subr.mxu0 %v356
    %1203 = vmatpush2.msra.mxu0 %v355
    %1204 = vmatprep.subr.mxu0 %v349
    %1205 = vmatpush2.msra.mxu0 %v348
    %1206 = vmatprep.subr.mxu0 %v342
    %1207 = vmatpush2.msra.mxu0 %v341
    %1208 = vmatprep.subr.mxu0 %v335
    %1209 = vmatpush2.msra.mxu0 %v334
    %1210 = vmatprep.subr.mxu0 %v328
    %1211 = vmatpush2.msra.mxu0 %v327
    %1212 = vmatprep.mubr.f32.mxu0 %v208
    %1213 = vmatmul.mubr.f32.gmra.mxu0 %v207
    %v1214 = vpop.f32.mrf.mxu0
    %v1215 = vadd.f32 %v1116, %v1214
    %v1216 = vpop.f32.mrf.mxu0
    %v1217 = vadd.f32 %v1120, %v1216
    %1218 = vdwg.mxu0
    %1219 = vmatprep.subr.mxu0 %v545
    %1220 = vmatpush1.msra.mxu0 %v544
    %1221 = vmatprep.subr.mxu0 %v538
    %1222 = vmatpush1.msra.mxu0 %v537
    %1223 = vmatprep.subr.mxu0 %v531
    %1224 = vmatpush1.msra.mxu0 %v530
    %1225 = vmatprep.subr.mxu0 %v524
    %1226 = vmatpush1.msra.mxu0 %v523
    %1227 = vmatprep.subr.mxu0 %v517
    %1228 = vmatpush1.msra.mxu0 %v516
    %1229 = vmatprep.subr.mxu0 %v510
    %1230 = vmatpush1.msra.mxu0 %v509
    %1231 = vmatprep.subr.mxu0 %v503
    %1232 = vmatpush1.msra.mxu0 %v502
    %1233 = vmatprep.subr.mxu0 %v496
    %1234 = vmatpush1.msra.mxu0 %v495
    %1235 = vmatprep.subr.mxu0 %v489
    %1236 = vmatpush1.msra.mxu0 %v488
    %1237 = vmatprep.subr.mxu0 %v482
    %1238 = vmatpush1.msra.mxu0 %v481
    %1239 = vmatprep.subr.mxu0 %v475
    %1240 = vmatpush1.msra.mxu0 %v474
    %1241 = vmatprep.subr.mxu0 %v468
    %1242 = vmatpush1.msra.mxu0 %v467
    %1243 = vmatprep.subr.mxu0 %v461
    %1244 = vmatpush1.msra.mxu0 %v460
    %1245 = vmatprep.subr.mxu0 %v454
    %1246 = vmatpush1.msra.mxu0 %v453
    %1247 = vmatprep.subr.mxu0 %v447
    %1248 = vmatpush1.msra.mxu0 %v446
    %1249 = vmatprep.subr.mxu0 %v440
    %1250 = vmatpush1.msra.mxu0 %v439
    %1251 = vmatprep.subr.mxu0 %v657
    %1252 = vmatpush2.msra.mxu0 %v656
    %1253 = vmatprep.subr.mxu0 %v650
    %1254 = vmatpush2.msra.mxu0 %v649
    %1255 = vmatprep.subr.mxu0 %v643
    %1256 = vmatpush2.msra.mxu0 %v642
    %1257 = vmatprep.subr.mxu0 %v636
    %1258 = vmatpush2.msra.mxu0 %v635
    %1259 = vmatprep.subr.mxu0 %v629
    %1260 = vmatpush2.msra.mxu0 %v628
    %1261 = vmatprep.subr.mxu0 %v622
    %1262 = vmatpush2.msra.mxu0 %v621
    %1263 = vmatprep.subr.mxu0 %v615
    %1264 = vmatpush2.msra.mxu0 %v614
    %1265 = vmatprep.subr.mxu0 %v608
    %1266 = vmatpush2.msra.mxu0 %v607
    %1267 = vmatprep.subr.mxu0 %v601
    %1268 = vmatpush2.msra.mxu0 %v600
    %1269 = vmatprep.subr.mxu0 %v594
    %1270 = vmatpush2.msra.mxu0 %v593
    %1271 = vmatprep.subr.mxu0 %v587
    %1272 = vmatpush2.msra.mxu0 %v586
    %1273 = vmatprep.subr.mxu0 %v580
    %1274 = vmatpush2.msra.mxu0 %v579
    %1275 = vmatprep.subr.mxu0 %v573
    %1276 = vmatpush2.msra.mxu0 %v572
    %1277 = vmatprep.subr.mxu0 %v566
    %1278 = vmatpush2.msra.mxu0 %v565
    %1279 = vmatprep.subr.mxu0 %v559
    %1280 = vmatpush2.msra.mxu0 %v558
    %1281 = vmatprep.subr.mxu0 %v552
    %1282 = vmatpush2.msra.mxu0 %v551
    %1283 = vmatprep.mubr.f32.mxu0 %v210
    %1284 = vmatmul.mubr.f32.gmra.mxu0 %v209
    %v1285 = vpop.f32.mrf.mxu0
    %v1286 = vadd.f32 %v1215, %v1285
    %v1287 = vpop.f32.mrf.mxu0
    %v1288 = vadd.f32 %v1217, %v1287
    %1289 = vdwg.mxu0
    %1290 = vmatprep.subr.mxu0 %v769
    %1291 = vmatpush1.msra.mxu0 %v768
    %1292 = vmatprep.subr.mxu0 %v762
    %1293 = vmatpush1.msra.mxu0 %v761
    %1294 = vmatprep.subr.mxu0 %v755
    %1295 = vmatpush1.msra.mxu0 %v754
    %1296 = vmatprep.subr.mxu0 %v748
    %1297 = vmatpush1.msra.mxu0 %v747
    %1298 = vmatprep.subr.mxu0 %v741
    %1299 = vmatpush1.msra.mxu0 %v740
    %1300 = vmatprep.subr.mxu0 %v734
    %1301 = vmatpush1.msra.mxu0 %v733
    %1302 = vmatprep.subr.mxu0 %v727
    %1303 = vmatpush1.msra.mxu0 %v726
    %1304 = vmatprep.subr.mxu0 %v720
    %1305 = vmatpush1.msra.mxu0 %v719
    %1306 = vmatprep.subr.mxu0 %v713
    %1307 = vmatpush1.msra.mxu0 %v712
    %1308 = vmatprep.subr.mxu0 %v706
    %1309 = vmatpush1.msra.mxu0 %v705
    %1310 = vmatprep.subr.mxu0 %v699
    %1311 = vmatpush1.msra.mxu0 %v698
    %1312 = vmatprep.subr.mxu0 %v692
    %1313 = vmatpush1.msra.mxu0 %v691
    %1314 = vmatprep.subr.mxu0 %v685
    %1315 = vmatpush1.msra.mxu0 %v684
    %1316 = vmatprep.subr.mxu0 %v678
    %1317 = vmatpush1.msra.mxu0 %v677
    %1318 = vmatprep.subr.mxu0 %v671
    %1319 = vmatpush1.msra.mxu0 %v670
    %1320 = vmatprep.subr.mxu0 %v664
    %1321 = vmatpush1.msra.mxu0 %v663
    %1322 = vmatprep.subr.mxu0 %v881
    %1323 = vmatpush2.msra.mxu0 %v880
    %1324 = vmatprep.subr.mxu0 %v874
    %1325 = vmatpush2.msra.mxu0 %v873
    %1326 = vmatprep.subr.mxu0 %v867
    %1327 = vmatpush2.msra.mxu0 %v866
    %1328 = vmatprep.subr.mxu0 %v860
    %1329 = vmatpush2.msra.mxu0 %v859
    %1330 = vmatprep.subr.mxu0 %v853
    %1331 = vmatpush2.msra.mxu0 %v852
    %1332 = vmatprep.subr.mxu0 %v846
    %1333 = vmatpush2.msra.mxu0 %v845
    %1334 = vmatprep.subr.mxu0 %v839
    %1335 = vmatpush2.msra.mxu0 %v838
    %1336 = vmatprep.subr.mxu0 %v832
    %1337 = vmatpush2.msra.mxu0 %v831
    %1338 = vmatprep.subr.mxu0 %v825
    %1339 = vmatpush2.msra.mxu0 %v824
    %1340 = vmatprep.subr.mxu0 %v818
    %1341 = vmatpush2.msra.mxu0 %v817
    %1342 = vmatprep.subr.mxu0 %v811
    %1343 = vmatpush2.msra.mxu0 %v810
    %1344 = vmatprep.subr.mxu0 %v804
    %1345 = vmatpush2.msra.mxu0 %v803
    %1346 = vmatprep.subr.mxu0 %v797
    %1347 = vmatpush2.msra.mxu0 %v796
    %1348 = vmatprep.subr.mxu0 %v790
    %1349 = vmatpush2.msra.mxu0 %v789
    %1350 = vmatprep.subr.mxu0 %v783
    %1351 = vmatpush2.msra.mxu0 %v782
    %1352 = vmatprep.subr.mxu0 %v776
    %1353 = vmatpush2.msra.mxu0 %v775
    %1354 = vmatprep.mubr.f32.mxu0 %v212
    %1355 = vmatmul.mubr.f32.gmra.mxu0 %v211
    %v1356 = vpop.f32.mrf.mxu0
    %v1357 = vadd.f32 %v1286, %v1356
    %v1358 = vpop.f32.mrf.mxu0
    %v1359 = vadd.f32 %v1288, %v1358
    %1360 = vdwg.mxu0
    %1361 = vmatprep.subr.mxu0 %v993
    %1362 = vmatpush1.msra.mxu0 %v992
    %1363 = vmatprep.subr.mxu0 %v986
    %1364 = vmatpush1.msra.mxu0 %v985
    %1365 = vmatprep.subr.mxu0 %v979
    %1366 = vmatpush1.msra.mxu0 %v978
    %1367 = vmatprep.subr.mxu0 %v972
    %1368 = vmatpush1.msra.mxu0 %v971
    %1369 = vmatprep.subr.mxu0 %v965
    %1370 = vmatpush1.msra.mxu0 %v964
    %1371 = vmatprep.subr.mxu0 %v958
    %1372 = vmatpush1.msra.mxu0 %v957
    %1373 = vmatprep.subr.mxu0 %v951
    %1374 = vmatpush1.msra.mxu0 %v950
    %1375 = vmatprep.subr.mxu0 %v944
    %1376 = vmatpush1.msra.mxu0 %v943
    %1377 = vmatprep.subr.mxu0 %v937
    %1378 = vmatpush1.msra.mxu0 %v936
    %1379 = vmatprep.subr.mxu0 %v930
    %1380 = vmatpush1.msra.mxu0 %v929
    %1381 = vmatprep.subr.mxu0 %v923
    %1382 = vmatpush1.msra.mxu0 %v922
    %1383 = vmatprep.subr.mxu0 %v916
    %1384 = vmatpush1.msra.mxu0 %v915
    %1385 = vmatprep.subr.mxu0 %v909
    %1386 = vmatpush1.msra.mxu0 %v908
    %1387 = vmatprep.subr.mxu0 %v902
    %1388 = vmatpush1.msra.mxu0 %v901
    %1389 = vmatprep.subr.mxu0 %v895
    %1390 = vmatpush1.msra.mxu0 %v894
    %1391 = vmatprep.subr.mxu0 %v888
    %1392 = vmatpush1.msra.mxu0 %v887
    %1393 = vmatprep.subr.mxu0 %v1105
    %1394 = vmatpush2.msra.mxu0 %v1104
    %1395 = vmatprep.subr.mxu0 %v1098
    %1396 = vmatpush2.msra.mxu0 %v1097
    %1397 = vmatprep.subr.mxu0 %v1091
    %1398 = vmatpush2.msra.mxu0 %v1090
    %1399 = vmatprep.subr.mxu0 %v1084
    %1400 = vmatpush2.msra.mxu0 %v1083
    %1401 = vmatprep.subr.mxu0 %v1077
    %1402 = vmatpush2.msra.mxu0 %v1076
    %1403 = vmatprep.subr.mxu0 %v1070
    %1404 = vmatpush2.msra.mxu0 %v1069
    %1405 = vmatprep.subr.mxu0 %v1063
    %1406 = vmatpush2.msra.mxu0 %v1062
    %1407 = vmatprep.subr.mxu0 %v1056
    %1408 = vmatpush2.msra.mxu0 %v1055
    %1409 = vmatprep.subr.mxu0 %v1049
    %1410 = vmatpush2.msra.mxu0 %v1048
    %1411 = vmatprep.subr.mxu0 %v1042
    %1412 = vmatpush2.msra.mxu0 %v1041
    %1413 = vmatprep.subr.mxu0 %v1035
    %1414 = vmatpush2.msra.mxu0 %v1034
    %1415 = vmatprep.subr.mxu0 %v1028
    %1416 = vmatpush2.msra.mxu0 %v1027
    %1417 = vmatprep.subr.mxu0 %v1021
    %1418 = vmatpush2.msra.mxu0 %v1020
    %1419 = vmatprep.subr.mxu0 %v1014
    %1420 = vmatpush2.msra.mxu0 %v1013
    %1421 = vmatprep.subr.mxu0 %v1007
    %1422 = vmatpush2.msra.mxu0 %v1006
    %1423 = vmatprep.subr.mxu0 %v1000
    %1424 = vmatpush2.msra.mxu0 %v999
    %1425 = vmatprep.mubr.f32.mxu0 %v214
    %1426 = vmatmul.mubr.f32.gmra.mxu0 %v213
    %v1427 = vpop.f32.mrf.mxu0
    %v1428 = vadd.f32 %v1357, %v1427
    %v1429 = vpop.f32.mrf.mxu0
    %v1430 = vadd.f32 %v1359, %v1429
    %1431 = vdwg.mxu0
    %1432 = vmatprep.subr.mxu0 %v323
    %1433 = vmatpush1.msra.mxu0 %v322
    %1434 = vmatprep.subr.mxu0 %v316
    %1435 = vmatpush1.msra.mxu0 %v315
    %1436 = vmatprep.subr.mxu0 %v309
    %1437 = vmatpush1.msra.mxu0 %v308
    %1438 = vmatprep.subr.mxu0 %v302
    %1439 = vmatpush1.msra.mxu0 %v301
    %1440 = vmatprep.subr.mxu0 %v295
    %1441 = vmatpush1.msra.mxu0 %v294
    %1442 = vmatprep.subr.mxu0 %v288
    %1443 = vmatpush1.msra.mxu0 %v287
    %1444 = vmatprep.subr.mxu0 %v281
    %1445 = vmatpush1.msra.mxu0 %v280
    %1446 = vmatprep.subr.mxu0 %v274
    %1447 = vmatpush1.msra.mxu0 %v273
    %1448 = vmatprep.subr.mxu0 %v267
    %1449 = vmatpush1.msra.mxu0 %v266
    %1450 = vmatprep.subr.mxu0 %v260
    %1451 = vmatpush1.msra.mxu0 %v259
    %1452 = vmatprep.subr.mxu0 %v253
    %1453 = vmatpush1.msra.mxu0 %v252
    %1454 = vmatprep.subr.mxu0 %v246
    %1455 = vmatpush1.msra.mxu0 %v245
    %1456 = vmatprep.subr.mxu0 %v239
    %1457 = vmatpush1.msra.mxu0 %v238
    %1458 = vmatprep.subr.mxu0 %v232
    %1459 = vmatpush1.msra.mxu0 %v231
    %1460 = vmatprep.subr.mxu0 %v225
    %1461 = vmatpush1.msra.mxu0 %v224
    %1462 = vmatprep.subr.mxu0 %v218
    %1463 = vmatpush1.msra.mxu0 %v217
    %1464 = vmatprep.subr.mxu0 %v435
    %1465 = vmatpush2.msra.mxu0 %v434
    %1466 = vmatprep.subr.mxu0 %v428
    %1467 = vmatpush2.msra.mxu0 %v427
    %1468 = vmatprep.subr.mxu0 %v421
    %1469 = vmatpush2.msra.mxu0 %v420
    %1470 = vmatprep.subr.mxu0 %v414
    %1471 = vmatpush2.msra.mxu0 %v413
    %1472 = vmatprep.subr.mxu0 %v407
    %1473 = vmatpush2.msra.mxu0 %v406
    %1474 = vmatprep.subr.mxu0 %v400
    %1475 = vmatpush2.msra.mxu0 %v399
    %1476 = vmatprep.subr.mxu0 %v393
    %1477 = vmatpush2.msra.mxu0 %v392
    %1478 = vmatprep.subr.mxu0 %v386
    %1479 = vmatpush2.msra.mxu0 %v385
    %1480 = vmatprep.subr.mxu0 %v379
    %1481 = vmatpush2.msra.mxu0 %v378
    %1482 = vmatprep.subr.mxu0 %v372
    %1483 = vmatpush2.msra.mxu0 %v371
    %1484 = vmatprep.subr.mxu0 %v365
    %1485 = vmatpush2.msra.mxu0 %v364
    %1486 = vmatprep.subr.mxu0 %v358
    %1487 = vmatpush2.msra.mxu0 %v357
    %1488 = vmatprep.subr.mxu0 %v351
    %1489 = vmatpush2.msra.mxu0 %v350
    %1490 = vmatprep.subr.mxu0 %v344
    %1491 = vmatpush2.msra.mxu0 %v343
    %1492 = vmatprep.subr.mxu0 %v337
    %1493 = vmatpush2.msra.mxu0 %v336
    %1494 = vmatprep.subr.mxu0 %v330
    %1495 = vmatpush2.msra.mxu0 %v329
    %1496 = vmatprep.mubr.f32.mxu0 %v208
    %1497 = vmatmul.mubr.f32.gmra.mxu0 %v207
    %v1498 = vpop.f32.mrf.mxu0
    %v1499 = vadd.f32 %v1124, %v1498
    %v1500 = vpop.f32.mrf.mxu0
    %v1501 = vadd.f32 %v1128, %v1500
    %1502 = vdwg.mxu0
    %1503 = vmatprep.subr.mxu0 %v547
    %1504 = vmatpush1.msra.mxu0 %v546
    %1505 = vmatprep.subr.mxu0 %v540
    %1506 = vmatpush1.msra.mxu0 %v539
    %1507 = vmatprep.subr.mxu0 %v533
    %1508 = vmatpush1.msra.mxu0 %v532
    %1509 = vmatprep.subr.mxu0 %v526
    %1510 = vmatpush1.msra.mxu0 %v525
    %1511 = vmatprep.subr.mxu0 %v519
    %1512 = vmatpush1.msra.mxu0 %v518
    %1513 = vmatprep.subr.mxu0 %v512
    %1514 = vmatpush1.msra.mxu0 %v511
    %1515 = vmatprep.subr.mxu0 %v505
    %1516 = vmatpush1.msra.mxu0 %v504
    %1517 = vmatprep.subr.mxu0 %v498
    %1518 = vmatpush1.msra.mxu0 %v497
    %1519 = vmatprep.subr.mxu0 %v491
    %1520 = vmatpush1.msra.mxu0 %v490
    %1521 = vmatprep.subr.mxu0 %v484
    %1522 = vmatpush1.msra.mxu0 %v483
    %1523 = vmatprep.subr.mxu0 %v477
    %1524 = vmatpush1.msra.mxu0 %v476
    %1525 = vmatprep.subr.mxu0 %v470
    %1526 = vmatpush1.msra.mxu0 %v469
    %1527 = vmatprep.subr.mxu0 %v463
    %1528 = vmatpush1.msra.mxu0 %v462
    %1529 = vmatprep.subr.mxu0 %v456
    %1530 = vmatpush1.msra.mxu0 %v455
    %1531 = vmatprep.subr.mxu0 %v449
    %1532 = vmatpush1.msra.mxu0 %v448
    %1533 = vmatprep.subr.mxu0 %v442
    %1534 = vmatpush1.msra.mxu0 %v441
    %1535 = vmatprep.subr.mxu0 %v659
    %1536 = vmatpush2.msra.mxu0 %v658
    %1537 = vmatprep.subr.mxu0 %v652
    %1538 = vmatpush2.msra.mxu0 %v651
    %1539 = vmatprep.subr.mxu0 %v645
    %1540 = vmatpush2.msra.mxu0 %v644
    %1541 = vmatprep.subr.mxu0 %v638
    %1542 = vmatpush2.msra.mxu0 %v637
    %1543 = vmatprep.subr.mxu0 %v631
    %1544 = vmatpush2.msra.mxu0 %v630
    %1545 = vmatprep.subr.mxu0 %v624
    %1546 = vmatpush2.msra.mxu0 %v623
    %1547 = vmatprep.subr.mxu0 %v617
    %1548 = vmatpush2.msra.mxu0 %v616
    %1549 = vmatprep.subr.mxu0 %v610
    %1550 = vmatpush2.msra.mxu0 %v609
    %1551 = vmatprep.subr.mxu0 %v603
    %1552 = vmatpush2.msra.mxu0 %v602
    %1553 = vmatprep.subr.mxu0 %v596
    %1554 = vmatpush2.msra.mxu0 %v595
    %1555 = vmatprep.subr.mxu0 %v589
    %1556 = vmatpush2.msra.mxu0 %v588
    %1557 = vmatprep.subr.mxu0 %v582
    %1558 = vmatpush2.msra.mxu0 %v581
    %1559 = vmatprep.subr.mxu0 %v575
    %1560 = vmatpush2.msra.mxu0 %v574
    %1561 = vmatprep.subr.mxu0 %v568
    %1562 = vmatpush2.msra.mxu0 %v567
    %1563 = vmatprep.subr.mxu0 %v561
    %1564 = vmatpush2.msra.mxu0 %v560
    %1565 = vmatprep.subr.mxu0 %v554
    %1566 = vmatpush2.msra.mxu0 %v553
    %1567 = vmatprep.mubr.f32.mxu0 %v210
    %1568 = vmatmul.mubr.f32.gmra.mxu0 %v209
    %v1569 = vpop.f32.mrf.mxu0
    %v1570 = vadd.f32 %v1499, %v1569
    %v1571 = vpop.f32.mrf.mxu0
    %v1572 = vadd.f32 %v1501, %v1571
    %1573 = vdwg.mxu0
    %1574 = vmatprep.subr.mxu0 %v771
    %1575 = vmatpush1.msra.mxu0 %v770
    %1576 = vmatprep.subr.mxu0 %v764
    %1577 = vmatpush1.msra.mxu0 %v763
    %1578 = vmatprep.subr.mxu0 %v757
    %1579 = vmatpush1.msra.mxu0 %v756
    %1580 = vmatprep.subr.mxu0 %v750
    %1581 = vmatpush1.msra.mxu0 %v749
    %1582 = vmatprep.subr.mxu0 %v743
    %1583 = vmatpush1.msra.mxu0 %v742
    %1584 = vmatprep.subr.mxu0 %v736
    %1585 = vmatpush1.msra.mxu0 %v735
    %1586 = vmatprep.subr.mxu0 %v729
    %1587 = vmatpush1.msra.mxu0 %v728
    %1588 = vmatprep.subr.mxu0 %v722
    %1589 = vmatpush1.msra.mxu0 %v721
    %1590 = vmatprep.subr.mxu0 %v715
    %1591 = vmatpush1.msra.mxu0 %v714
    %1592 = vmatprep.subr.mxu0 %v708
    %1593 = vmatpush1.msra.mxu0 %v707
    %1594 = vmatprep.subr.mxu0 %v701
    %1595 = vmatpush1.msra.mxu0 %v700
    %1596 = vmatprep.subr.mxu0 %v694
    %1597 = vmatpush1.msra.mxu0 %v693
    %1598 = vmatprep.subr.mxu0 %v687
    %1599 = vmatpush1.msra.mxu0 %v686
    %1600 = vmatprep.subr.mxu0 %v680
    %1601 = vmatpush1.msra.mxu0 %v679
    %1602 = vmatprep.subr.mxu0 %v673
    %1603 = vmatpush1.msra.mxu0 %v672
    %1604 = vmatprep.subr.mxu0 %v666
    %1605 = vmatpush1.msra.mxu0 %v665
    %1606 = vmatprep.subr.mxu0 %v883
    %1607 = vmatpush2.msra.mxu0 %v882
    %1608 = vmatprep.subr.mxu0 %v876
    %1609 = vmatpush2.msra.mxu0 %v875
    %1610 = vmatprep.subr.mxu0 %v869
    %1611 = vmatpush2.msra.mxu0 %v868
    %1612 = vmatprep.subr.mxu0 %v862
    %1613 = vmatpush2.msra.mxu0 %v861
    %1614 = vmatprep.subr.mxu0 %v855
    %1615 = vmatpush2.msra.mxu0 %v854
    %1616 = vmatprep.subr.mxu0 %v848
    %1617 = vmatpush2.msra.mxu0 %v847
    %1618 = vmatprep.subr.mxu0 %v841
    %1619 = vmatpush2.msra.mxu0 %v840
    %1620 = vmatprep.subr.mxu0 %v834
    %1621 = vmatpush2.msra.mxu0 %v833
    %1622 = vmatprep.subr.mxu0 %v827
    %1623 = vmatpush2.msra.mxu0 %v826
    %1624 = vmatprep.subr.mxu0 %v820
    %1625 = vmatpush2.msra.mxu0 %v819
    %1626 = vmatprep.subr.mxu0 %v813
    %1627 = vmatpush2.msra.mxu0 %v812
    %1628 = vmatprep.subr.mxu0 %v806
    %1629 = vmatpush2.msra.mxu0 %v805
    %1630 = vmatprep.subr.mxu0 %v799
    %1631 = vmatpush2.msra.mxu0 %v798
    %1632 = vmatprep.subr.mxu0 %v792
    %1633 = vmatpush2.msra.mxu0 %v791
    %1634 = vmatprep.subr.mxu0 %v785
    %1635 = vmatpush2.msra.mxu0 %v784
    %1636 = vmatprep.subr.mxu0 %v778
    %1637 = vmatpush2.msra.mxu0 %v777
    %1638 = vmatprep.mubr.f32.mxu0 %v212
    %1639 = vmatmul.mubr.f32.gmra.mxu0 %v211
    %v1640 = vpop.f32.mrf.mxu0
    %v1641 = vadd.f32 %v1570, %v1640
    %v1642 = vpop.f32.mrf.mxu0
    %v1643 = vadd.f32 %v1572, %v1642
    %1644 = vdwg.mxu0
    %1645 = vmatprep.subr.mxu0 %v995
    %1646 = vmatpush1.msra.mxu0 %v994
    %1647 = vmatprep.subr.mxu0 %v988
    %1648 = vmatpush1.msra.mxu0 %v987
    %1649 = vmatprep.subr.mxu0 %v981
    %1650 = vmatpush1.msra.mxu0 %v980
    %1651 = vmatprep.subr.mxu0 %v974
    %1652 = vmatpush1.msra.mxu0 %v973
    %1653 = vmatprep.subr.mxu0 %v967
    %1654 = vmatpush1.msra.mxu0 %v966
    %1655 = vmatprep.subr.mxu0 %v960
    %1656 = vmatpush1.msra.mxu0 %v959
    %1657 = vmatprep.subr.mxu0 %v953
    %1658 = vmatpush1.msra.mxu0 %v952
    %1659 = vmatprep.subr.mxu0 %v946
    %1660 = vmatpush1.msra.mxu0 %v945
    %1661 = vmatprep.subr.mxu0 %v939
    %1662 = vmatpush1.msra.mxu0 %v938
    %1663 = vmatprep.subr.mxu0 %v932
    %1664 = vmatpush1.msra.mxu0 %v931
    %1665 = vmatprep.subr.mxu0 %v925
    %1666 = vmatpush1.msra.mxu0 %v924
    %1667 = vmatprep.subr.mxu0 %v918
    %1668 = vmatpush1.msra.mxu0 %v917
    %1669 = vmatprep.subr.mxu0 %v911
    %1670 = vmatpush1.msra.mxu0 %v910
    %1671 = vmatprep.subr.mxu0 %v904
    %1672 = vmatpush1.msra.mxu0 %v903
    %1673 = vmatprep.subr.mxu0 %v897
    %1674 = vmatpush1.msra.mxu0 %v896
    %1675 = vmatprep.subr.mxu0 %v890
    %1676 = vmatpush1.msra.mxu0 %v889
    %1677 = vmatprep.subr.mxu0 %v1107
    %1678 = vmatpush2.msra.mxu0 %v1106
    %1679 = vmatprep.subr.mxu0 %v1100
    %1680 = vmatpush2.msra.mxu0 %v1099
    %1681 = vmatprep.subr.mxu0 %v1093
    %1682 = vmatpush2.msra.mxu0 %v1092
    %1683 = vmatprep.subr.mxu0 %v1086
    %1684 = vmatpush2.msra.mxu0 %v1085
    %1685 = vmatprep.subr.mxu0 %v1079
    %1686 = vmatpush2.msra.mxu0 %v1078
    %1687 = vmatprep.subr.mxu0 %v1072
    %1688 = vmatpush2.msra.mxu0 %v1071
    %1689 = vmatprep.subr.mxu0 %v1065
    %1690 = vmatpush2.msra.mxu0 %v1064
    %1691 = vmatprep.subr.mxu0 %v1058
    %1692 = vmatpush2.msra.mxu0 %v1057
    %1693 = vmatprep.subr.mxu0 %v1051
    %1694 = vmatpush2.msra.mxu0 %v1050
    %1695 = vmatprep.subr.mxu0 %v1044
    %1696 = vmatpush2.msra.mxu0 %v1043
    %1697 = vmatprep.subr.mxu0 %v1037
    %1698 = vmatpush2.msra.mxu0 %v1036
    %1699 = vmatprep.subr.mxu0 %v1030
    %1700 = vmatpush2.msra.mxu0 %v1029
    %1701 = vmatprep.subr.mxu0 %v1023
    %1702 = vmatpush2.msra.mxu0 %v1022
    %1703 = vmatprep.subr.mxu0 %v1016
    %1704 = vmatpush2.msra.mxu0 %v1015
    %1705 = vmatprep.subr.mxu0 %v1009
    %1706 = vmatpush2.msra.mxu0 %v1008
    %1707 = vmatprep.subr.mxu0 %v1002
    %1708 = vmatpush2.msra.mxu0 %v1001
    %1709 = vmatprep.mubr.f32.mxu0 %v214
    %1710 = vmatmul.mubr.f32.gmra.mxu0 %v213
    %v1711 = vpop.f32.mrf.mxu0
    %v1712 = vadd.f32 %v1641, %v1711
    %v1713 = vpop.f32.mrf.mxu0
    %v1714 = vadd.f32 %v1643, %v1713
    %1715 = vdwg.mxu0
    %1716 = vmatprep.subr.mxu0 %v325
    %1717 = vmatpush1.msra.mxu0 %v324
    %1718 = vmatprep.subr.mxu0 %v318
    %1719 = vmatpush1.msra.mxu0 %v317
    %1720 = vmatprep.subr.mxu0 %v311
    %1721 = vmatpush1.msra.mxu0 %v310
    %1722 = vmatprep.subr.mxu0 %v304
    %1723 = vmatpush1.msra.mxu0 %v303
    %1724 = vmatprep.subr.mxu0 %v297
    %1725 = vmatpush1.msra.mxu0 %v296
    %1726 = vmatprep.subr.mxu0 %v290
    %1727 = vmatpush1.msra.mxu0 %v289
    %1728 = vmatprep.subr.mxu0 %v283
    %1729 = vmatpush1.msra.mxu0 %v282
    %1730 = vmatprep.subr.mxu0 %v276
    %1731 = vmatpush1.msra.mxu0 %v275
    %1732 = vmatprep.subr.mxu0 %v269
    %1733 = vmatpush1.msra.mxu0 %v268
    %1734 = vmatprep.subr.mxu0 %v262
    %1735 = vmatpush1.msra.mxu0 %v261
    %1736 = vmatprep.subr.mxu0 %v255
    %1737 = vmatpush1.msra.mxu0 %v254
    %1738 = vmatprep.subr.mxu0 %v248
    %1739 = vmatpush1.msra.mxu0 %v247
    %1740 = vmatprep.subr.mxu0 %v241
    %1741 = vmatpush1.msra.mxu0 %v240
    %1742 = vmatprep.subr.mxu0 %v234
    %1743 = vmatpush1.msra.mxu0 %v233
    %1744 = vmatprep.subr.mxu0 %v227
    %1745 = vmatpush1.msra.mxu0 %v226
    %1746 = vmatprep.subr.mxu0 %v220
    %1747 = vmatpush1.msra.mxu0 %v219
    %1748 = vmatprep.subr.mxu0 %v437
    %1749 = vmatpush2.msra.mxu0 %v436
    %1750 = vmatprep.subr.mxu0 %v430
    %1751 = vmatpush2.msra.mxu0 %v429
    %1752 = vmatprep.subr.mxu0 %v423
    %1753 = vmatpush2.msra.mxu0 %v422
    %1754 = vmatprep.subr.mxu0 %v416
    %1755 = vmatpush2.msra.mxu0 %v415
    %1756 = vmatprep.subr.mxu0 %v409
    %1757 = vmatpush2.msra.mxu0 %v408
    %1758 = vmatprep.subr.mxu0 %v402
    %1759 = vmatpush2.msra.mxu0 %v401
    %1760 = vmatprep.subr.mxu0 %v395
    %1761 = vmatpush2.msra.mxu0 %v394
    %1762 = vmatprep.subr.mxu0 %v388
    %1763 = vmatpush2.msra.mxu0 %v387
    %1764 = vmatprep.subr.mxu0 %v381
    %1765 = vmatpush2.msra.mxu0 %v380
    %1766 = vmatprep.subr.mxu0 %v374
    %1767 = vmatpush2.msra.mxu0 %v373
    %1768 = vmatprep.subr.mxu0 %v367
    %1769 = vmatpush2.msra.mxu0 %v366
    %1770 = vmatprep.subr.mxu0 %v360
    %1771 = vmatpush2.msra.mxu0 %v359
    %1772 = vmatprep.subr.mxu0 %v353
    %1773 = vmatpush2.msra.mxu0 %v352
    %1774 = vmatprep.subr.mxu0 %v346
    %1775 = vmatpush2.msra.mxu0 %v345
    %1776 = vmatprep.subr.mxu0 %v339
    %1777 = vmatpush2.msra.mxu0 %v338
    %1778 = vmatprep.subr.mxu0 %v332
    %1779 = vmatpush2.msra.mxu0 %v331
    %1780 = vmatprep.mubr.f32.mxu0 %v208
    %1781 = vmatmul.mubr.f32.gmra.mxu0 %v207
    %v1782 = vpop.f32.mrf.mxu0
    %v1783 = vadd.f32 %v1132, %v1782
    %v1784 = vpop.f32.mrf.mxu0
    %v1785 = vadd.f32 %v1136, %v1784
    %1786 = vdwg.mxu0
    %1787 = vmatprep.subr.mxu0 %v549
    %1788 = vmatpush1.msra.mxu0 %v548
    %1789 = vmatprep.subr.mxu0 %v542
    %1790 = vmatpush1.msra.mxu0 %v541
    %1791 = vmatprep.subr.mxu0 %v535
    %1792 = vmatpush1.msra.mxu0 %v534
    %1793 = vmatprep.subr.mxu0 %v528
    %1794 = vmatpush1.msra.mxu0 %v527
    %1795 = vmatprep.subr.mxu0 %v521
    %1796 = vmatpush1.msra.mxu0 %v520
    %1797 = vmatprep.subr.mxu0 %v514
    %1798 = vmatpush1.msra.mxu0 %v513
    %1799 = vmatprep.subr.mxu0 %v507
    %1800 = vmatpush1.msra.mxu0 %v506
    %1801 = vmatprep.subr.mxu0 %v500
    %1802 = vmatpush1.msra.mxu0 %v499
    %1803 = vmatprep.subr.mxu0 %v493
    %1804 = vmatpush1.msra.mxu0 %v492
    %1805 = vmatprep.subr.mxu0 %v486
    %1806 = vmatpush1.msra.mxu0 %v485
    %1807 = vmatprep.subr.mxu0 %v479
    %1808 = vmatpush1.msra.mxu0 %v478
    %1809 = vmatprep.subr.mxu0 %v472
    %1810 = vmatpush1.msra.mxu0 %v471
    %1811 = vmatprep.subr.mxu0 %v465
    %1812 = vmatpush1.msra.mxu0 %v464
    %1813 = vmatprep.subr.mxu0 %v458
    %1814 = vmatpush1.msra.mxu0 %v457
    %1815 = vmatprep.subr.mxu0 %v451
    %1816 = vmatpush1.msra.mxu0 %v450
    %1817 = vmatprep.subr.mxu0 %v444
    %1818 = vmatpush1.msra.mxu0 %v443
    %1819 = vmatprep.subr.mxu0 %v661
    %1820 = vmatpush2.msra.mxu0 %v660
    %1821 = vmatprep.subr.mxu0 %v654
    %1822 = vmatpush2.msra.mxu0 %v653
    %1823 = vmatprep.subr.mxu0 %v647
    %1824 = vmatpush2.msra.mxu0 %v646
    %1825 = vmatprep.subr.mxu0 %v640
    %1826 = vmatpush2.msra.mxu0 %v639
    %1827 = vmatprep.subr.mxu0 %v633
    %1828 = vmatpush2.msra.mxu0 %v632
    %1829 = vmatprep.subr.mxu0 %v626
    %1830 = vmatpush2.msra.mxu0 %v625
    %1831 = vmatprep.subr.mxu0 %v619
    %1832 = vmatpush2.msra.mxu0 %v618
    %1833 = vmatprep.subr.mxu0 %v612
    %1834 = vmatpush2.msra.mxu0 %v611
    %1835 = vmatprep.subr.mxu0 %v605
    %1836 = vmatpush2.msra.mxu0 %v604
    %1837 = vmatprep.subr.mxu0 %v598
    %1838 = vmatpush2.msra.mxu0 %v597
    %1839 = vmatprep.subr.mxu0 %v591
    %1840 = vmatpush2.msra.mxu0 %v590
    %1841 = vmatprep.subr.mxu0 %v584
    %1842 = vmatpush2.msra.mxu0 %v583
    %1843 = vmatprep.subr.mxu0 %v577
    %1844 = vmatpush2.msra.mxu0 %v576
    %1845 = vmatprep.subr.mxu0 %v570
    %1846 = vmatpush2.msra.mxu0 %v569
    %1847 = vmatprep.subr.mxu0 %v563
    %1848 = vmatpush2.msra.mxu0 %v562
    %1849 = vmatprep.subr.mxu0 %v556
    %1850 = vmatpush2.msra.mxu0 %v555
    %1851 = vmatprep.mubr.f32.mxu0 %v210
    %1852 = vmatmul.mubr.f32.gmra.mxu0 %v209
    %v1853 = vpop.f32.mrf.mxu0
    %v1854 = vadd.f32 %v1783, %v1853
    %v1855 = vpop.f32.mrf.mxu0
    %v1856 = vadd.f32 %v1785, %v1855
    %1857 = vdwg.mxu0
    %1858 = vmatprep.subr.mxu0 %v773
    %1859 = vmatpush1.msra.mxu0 %v772
    %1860 = vmatprep.subr.mxu0 %v766
    %1861 = vmatpush1.msra.mxu0 %v765
    %1862 = vmatprep.subr.mxu0 %v759
    %1863 = vmatpush1.msra.mxu0 %v758
    %1864 = vmatprep.subr.mxu0 %v752
    %1865 = vmatpush1.msra.mxu0 %v751
    %1866 = vmatprep.subr.mxu0 %v745
    %1867 = vmatpush1.msra.mxu0 %v744
    %1868 = vmatprep.subr.mxu0 %v738
    %1869 = vmatpush1.msra.mxu0 %v737
    %1870 = vmatprep.subr.mxu0 %v731
    %1871 = vmatpush1.msra.mxu0 %v730
    %1872 = vmatprep.subr.mxu0 %v724
    %1873 = vmatpush1.msra.mxu0 %v723
    %1874 = vmatprep.subr.mxu0 %v717
    %1875 = vmatpush1.msra.mxu0 %v716
    %1876 = vmatprep.subr.mxu0 %v710
    %1877 = vmatpush1.msra.mxu0 %v709
    %1878 = vmatprep.subr.mxu0 %v703
    %1879 = vmatpush1.msra.mxu0 %v702
    %1880 = vmatprep.subr.mxu0 %v696
    %1881 = vmatpush1.msra.mxu0 %v695
    %1882 = vmatprep.subr.mxu0 %v689
    %1883 = vmatpush1.msra.mxu0 %v688
    %1884 = vmatprep.subr.mxu0 %v682
    %1885 = vmatpush1.msra.mxu0 %v681
    %1886 = vmatprep.subr.mxu0 %v675
    %1887 = vmatpush1.msra.mxu0 %v674
    %1888 = vmatprep.subr.mxu0 %v668
    %1889 = vmatpush1.msra.mxu0 %v667
    %1890 = vmatprep.subr.mxu0 %v885
    %1891 = vmatpush2.msra.mxu0 %v884
    %1892 = vmatprep.subr.mxu0 %v878
    %1893 = vmatpush2.msra.mxu0 %v877
    %1894 = vmatprep.subr.mxu0 %v871
    %1895 = vmatpush2.msra.mxu0 %v870
    %1896 = vmatprep.subr.mxu0 %v864
    %1897 = vmatpush2.msra.mxu0 %v863
    %1898 = vmatprep.subr.mxu0 %v857
    %1899 = vmatpush2.msra.mxu0 %v856
    %1900 = vmatprep.subr.mxu0 %v850
    %1901 = vmatpush2.msra.mxu0 %v849
    %1902 = vmatprep.subr.mxu0 %v843
    %1903 = vmatpush2.msra.mxu0 %v842
    %1904 = vmatprep.subr.mxu0 %v836
    %1905 = vmatpush2.msra.mxu0 %v835
    %1906 = vmatprep.subr.mxu0 %v829
    %1907 = vmatpush2.msra.mxu0 %v828
    %1908 = vmatprep.subr.mxu0 %v822
    %1909 = vmatpush2.msra.mxu0 %v821
    %1910 = vmatprep.subr.mxu0 %v815
    %1911 = vmatpush2.msra.mxu0 %v814
    %1912 = vmatprep.subr.mxu0 %v808
    %1913 = vmatpush2.msra.mxu0 %v807
    %1914 = vmatprep.subr.mxu0 %v801
    %1915 = vmatpush2.msra.mxu0 %v800
    %1916 = vmatprep.subr.mxu0 %v794
    %1917 = vmatpush2.msra.mxu0 %v793
    %1918 = vmatprep.subr.mxu0 %v787
    %1919 = vmatpush2.msra.mxu0 %v786
    %1920 = vmatprep.subr.mxu0 %v780
    %1921 = vmatpush2.msra.mxu0 %v779
    %1922 = vmatprep.mubr.f32.mxu0 %v212
    %1923 = vmatmul.mubr.f32.gmra.mxu0 %v211
    %v1924 = vpop.f32.mrf.mxu0
    %v1925 = vadd.f32 %v1854, %v1924
    %v1926 = vpop.f32.mrf.mxu0
    %v1927 = vadd.f32 %v1856, %v1926
    %1928 = vdwg.mxu0
    %1929 = vmatprep.subr.mxu0 %v997
    %1930 = vmatpush1.msra.mxu0 %v996
    %1931 = vmatprep.subr.mxu0 %v990
    %1932 = vmatpush1.msra.mxu0 %v989
    %1933 = vmatprep.subr.mxu0 %v983
    %1934 = vmatpush1.msra.mxu0 %v982
    %1935 = vmatprep.subr.mxu0 %v976
    %1936 = vmatpush1.msra.mxu0 %v975
    %1937 = vmatprep.subr.mxu0 %v969
    %1938 = vmatpush1.msra.mxu0 %v968
    %1939 = vmatprep.subr.mxu0 %v962
    %1940 = vmatpush1.msra.mxu0 %v961
    %1941 = vmatprep.subr.mxu0 %v955
    %1942 = vmatpush1.msra.mxu0 %v954
    %1943 = vmatprep.subr.mxu0 %v948
    %1944 = vmatpush1.msra.mxu0 %v947
    %1945 = vmatprep.subr.mxu0 %v941
    %1946 = vmatpush1.msra.mxu0 %v940
    %1947 = vmatprep.subr.mxu0 %v934
    %1948 = vmatpush1.msra.mxu0 %v933
    %1949 = vmatprep.subr.mxu0 %v927
    %1950 = vmatpush1.msra.mxu0 %v926
    %1951 = vmatprep.subr.mxu0 %v920
    %1952 = vmatpush1.msra.mxu0 %v919
    %1953 = vmatprep.subr.mxu0 %v913
    %1954 = vmatpush1.msra.mxu0 %v912
    %1955 = vmatprep.subr.mxu0 %v906
    %1956 = vmatpush1.msra.mxu0 %v905
    %1957 = vmatprep.subr.mxu0 %v899
    %1958 = vmatpush1.msra.mxu0 %v898
    %1959 = vmatprep.subr.mxu0 %v892
    %1960 = vmatpush1.msra.mxu0 %v891
    %1961 = vmatprep.subr.mxu0 %v1109
    %1962 = vmatpush2.msra.mxu0 %v1108
    %1963 = vmatprep.subr.mxu0 %v1102
    %1964 = vmatpush2.msra.mxu0 %v1101
    %1965 = vmatprep.subr.mxu0 %v1095
    %1966 = vmatpush2.msra.mxu0 %v1094
    %1967 = vmatprep.subr.mxu0 %v1088
    %1968 = vmatpush2.msra.mxu0 %v1087
    %1969 = vmatprep.subr.mxu0 %v1081
    %1970 = vmatpush2.msra.mxu0 %v1080
    %1971 = vmatprep.subr.mxu0 %v1074
    %1972 = vmatpush2.msra.mxu0 %v1073
    %1973 = vmatprep.subr.mxu0 %v1067
    %1974 = vmatpush2.msra.mxu0 %v1066
    %1975 = vmatprep.subr.mxu0 %v1060
    %1976 = vmatpush2.msra.mxu0 %v1059
    %1977 = vmatprep.subr.mxu0 %v1053
    %1978 = vmatpush2.msra.mxu0 %v1052
    %1979 = vmatprep.subr.mxu0 %v1046
    %1980 = vmatpush2.msra.mxu0 %v1045
    %1981 = vmatprep.subr.mxu0 %v1039
    %1982 = vmatpush2.msra.mxu0 %v1038
    %1983 = vmatprep.subr.mxu0 %v1032
    %1984 = vmatpush2.msra.mxu0 %v1031
    %1985 = vmatprep.subr.mxu0 %v1025
    %1986 = vmatpush2.msra.mxu0 %v1024
    %1987 = vmatprep.subr.mxu0 %v1018
    %1988 = vmatpush2.msra.mxu0 %v1017
    %1989 = vmatprep.subr.mxu0 %v1011
    %1990 = vmatpush2.msra.mxu0 %v1010
    %1991 = vmatprep.subr.mxu0 %v1004
    %1992 = vmatpush2.msra.mxu0 %v1003
    %1993 = vmatprep.mubr.f32.mxu0 %v214
    %1994 = vmatmul.mubr.f32.gmra.mxu0 %v213
    %v1995 = vpop.f32.mrf.mxu0
    %v1996 = vadd.f32 %v1925, %v1995
    %v1997 = vpop.f32.mrf.mxu0
    %v1998 = vadd.f32 %v1927, %v1997
    %1999 = vdwg.mxu0
    %2000 = vmatprep.subr.mxu0 0.0
    %2001 = vmatpush1.msra.mxu0 %v326
    %2002 = vmatprep.subr.mxu0 0.0
    %2003 = vmatpush1.msra.mxu0 %v319
    %2004 = vmatprep.subr.mxu0 0.0
    %2005 = vmatpush1.msra.mxu0 %v312
    %2006 = vmatprep.subr.mxu0 0.0
    %2007 = vmatpush1.msra.mxu0 %v305
    %2008 = vmatprep.subr.mxu0 0.0
    %2009 = vmatpush1.msra.mxu0 %v298
    %2010 = vmatprep.subr.mxu0 0.0
    %2011 = vmatpush1.msra.mxu0 %v291
    %2012 = vmatprep.subr.mxu0 0.0
    %2013 = vmatpush1.msra.mxu0 %v284
    %2014 = vmatprep.subr.mxu0 0.0
    %2015 = vmatpush1.msra.mxu0 %v277
    %2016 = vmatprep.subr.mxu0 0.0
    %2017 = vmatpush1.msra.mxu0 %v270
    %2018 = vmatprep.subr.mxu0 0.0
    %2019 = vmatpush1.msra.mxu0 %v263
    %2020 = vmatprep.subr.mxu0 0.0
    %2021 = vmatpush1.msra.mxu0 %v256
    %2022 = vmatprep.subr.mxu0 0.0
    %2023 = vmatpush1.msra.mxu0 %v249
    %2024 = vmatprep.subr.mxu0 0.0
    %2025 = vmatpush1.msra.mxu0 %v242
    %2026 = vmatprep.subr.mxu0 0.0
    %2027 = vmatpush1.msra.mxu0 %v235
    %2028 = vmatprep.subr.mxu0 0.0
    %2029 = vmatpush1.msra.mxu0 %v228
    %2030 = vmatprep.subr.mxu0 0.0
    %2031 = vmatpush1.msra.mxu0 %v221
    %2032 = vmatprep.subr.mxu0 0.0
    %2033 = vmatpush2.msra.mxu0 %v438
    %2034 = vmatprep.subr.mxu0 0.0
    %2035 = vmatpush2.msra.mxu0 %v431
    %2036 = vmatprep.subr.mxu0 0.0
    %2037 = vmatpush2.msra.mxu0 %v424
    %2038 = vmatprep.subr.mxu0 0.0
    %2039 = vmatpush2.msra.mxu0 %v417
    %2040 = vmatprep.subr.mxu0 0.0
    %2041 = vmatpush2.msra.mxu0 %v410
    %2042 = vmatprep.subr.mxu0 0.0
    %2043 = vmatpush2.msra.mxu0 %v403
    %2044 = vmatprep.subr.mxu0 0.0
    %2045 = vmatpush2.msra.mxu0 %v396
    %2046 = vmatprep.subr.mxu0 0.0
    %2047 = vmatpush2.msra.mxu0 %v389
    %2048 = vmatprep.subr.mxu0 0.0
    %2049 = vmatpush2.msra.mxu0 %v382
    %2050 = vmatprep.subr.mxu0 0.0
    %2051 = vmatpush2.msra.mxu0 %v375
    %2052 = vmatprep.subr.mxu0 0.0
    %2053 = vmatpush2.msra.mxu0 %v368
    %2054 = vmatprep.subr.mxu0 0.0
    %2055 = vmatpush2.msra.mxu0 %v361
    %2056 = vmatprep.subr.mxu0 0.0
    %2057 = vmatpush2.msra.mxu0 %v354
    %2058 = vmatprep.subr.mxu0 0.0
    %2059 = vmatpush2.msra.mxu0 %v347
    %2060 = vmatprep.subr.mxu0 0.0
    %2061 = vmatpush2.msra.mxu0 %v340
    %2062 = vmatprep.subr.mxu0 0.0
    %2063 = vmatpush2.msra.mxu0 %v333
    %2064 = vmatprep.mubr.f32.mxu0 %v208
    %2065 = vmatmul.mubr.f32.gmra.mxu0 %v207
    %v2066 = vpop.f32.mrf.mxu0
    %v2067 = vadd.f32 %v1140, %v2066
    %v2068 = vpop.f32.mrf.mxu0
    %2069 = vdwg.mxu0
    %2070 = vmatprep.subr.mxu0 0.0
    %2071 = vmatpush1.msra.mxu0 %v550
    %2072 = vmatprep.subr.mxu0 0.0
    %2073 = vmatpush1.msra.mxu0 %v543
    %2074 = vmatprep.subr.mxu0 0.0
    %2075 = vmatpush1.msra.mxu0 %v536
    %2076 = vmatprep.subr.mxu0 0.0
    %2077 = vmatpush1.msra.mxu0 %v529
    %2078 = vmatprep.subr.mxu0 0.0
    %2079 = vmatpush1.msra.mxu0 %v522
    %2080 = vmatprep.subr.mxu0 0.0
    %2081 = vmatpush1.msra.mxu0 %v515
    %2082 = vmatprep.subr.mxu0 0.0
    %2083 = vmatpush1.msra.mxu0 %v508
    %2084 = vmatprep.subr.mxu0 0.0
    %2085 = vmatpush1.msra.mxu0 %v501
    %2086 = vmatprep.subr.mxu0 0.0
    %2087 = vmatpush1.msra.mxu0 %v494
    %2088 = vmatprep.subr.mxu0 0.0
    %2089 = vmatpush1.msra.mxu0 %v487
    %2090 = vmatprep.subr.mxu0 0.0
    %2091 = vmatpush1.msra.mxu0 %v480
    %2092 = vmatprep.subr.mxu0 0.0
    %2093 = vmatpush1.msra.mxu0 %v473
    %2094 = vmatprep.subr.mxu0 0.0
    %2095 = vmatpush1.msra.mxu0 %v466
    %2096 = vmatprep.subr.mxu0 0.0
    %2097 = vmatpush1.msra.mxu0 %v459
    %2098 = vmatprep.subr.mxu0 0.0
    %2099 = vmatpush1.msra.mxu0 %v452
    %2100 = vmatprep.subr.mxu0 0.0
    %2101 = vmatpush1.msra.mxu0 %v445
    %2102 = vmatprep.subr.mxu0 0.0
    %2103 = vmatpush2.msra.mxu0 %v662
    %2104 = vmatprep.subr.mxu0 0.0
    %2105 = vmatpush2.msra.mxu0 %v655
    %2106 = vmatprep.subr.mxu0 0.0
    %2107 = vmatpush2.msra.mxu0 %v648
    %2108 = vmatprep.subr.mxu0 0.0
    %2109 = vmatpush2.msra.mxu0 %v641
    %2110 = vmatprep.subr.mxu0 0.0
    %2111 = vmatpush2.msra.mxu0 %v634
    %2112 = vmatprep.subr.mxu0 0.0
    %2113 = vmatpush2.msra.mxu0 %v627
    %2114 = vmatprep.subr.mxu0 0.0
    %2115 = vmatpush2.msra.mxu0 %v620
    %2116 = vmatprep.subr.mxu0 0.0
    %2117 = vmatpush2.msra.mxu0 %v613
    %2118 = vmatprep.subr.mxu0 0.0
    %2119 = vmatpush2.msra.mxu0 %v606
    %2120 = vmatprep.subr.mxu0 0.0
    %2121 = vmatpush2.msra.mxu0 %v599
    %2122 = vmatprep.subr.mxu0 0.0
    %2123 = vmatpush2.msra.mxu0 %v592
    %2124 = vmatprep.subr.mxu0 0.0
    %2125 = vmatpush2.msra.mxu0 %v585
    %2126 = vmatprep.subr.mxu0 0.0
    %2127 = vmatpush2.msra.mxu0 %v578
    %2128 = vmatprep.subr.mxu0 0.0
    %2129 = vmatpush2.msra.mxu0 %v571
    %2130 = vmatprep.subr.mxu0 0.0
    %2131 = vmatpush2.msra.mxu0 %v564
    %2132 = vmatprep.subr.mxu0 0.0
    %2133 = vmatpush2.msra.mxu0 %v557
    %2134 = vmatprep.mubr.f32.mxu0 %v210
    %2135 = vmatmul.mubr.f32.gmra.mxu0 %v209
    %v2136 = vpop.f32.mrf.mxu0
    %v2137 = vadd.f32 %v2067, %v2136
    %v2138 = vpop.f32.mrf.mxu0
    %2139 = vdwg.mxu0
    %2140 = vmatprep.subr.mxu0 0.0
    %2141 = vmatpush1.msra.mxu0 %v774
    %2142 = vmatprep.subr.mxu0 0.0
    %2143 = vmatpush1.msra.mxu0 %v767
    %2144 = vmatprep.subr.mxu0 0.0
    %2145 = vmatpush1.msra.mxu0 %v760
    %2146 = vmatprep.subr.mxu0 0.0
    %2147 = vmatpush1.msra.mxu0 %v753
    %2148 = vmatprep.subr.mxu0 0.0
    %2149 = vmatpush1.msra.mxu0 %v746
    %2150 = vmatprep.subr.mxu0 0.0
    %2151 = vmatpush1.msra.mxu0 %v739
    %2152 = vmatprep.subr.mxu0 0.0
    %2153 = vmatpush1.msra.mxu0 %v732
    %2154 = vmatprep.subr.mxu0 0.0
    %2155 = vmatpush1.msra.mxu0 %v725
    %2156 = vmatprep.subr.mxu0 0.0
    %2157 = vmatpush1.msra.mxu0 %v718
    %2158 = vmatprep.subr.mxu0 0.0
    %2159 = vmatpush1.msra.mxu0 %v711
    %2160 = vmatprep.subr.mxu0 0.0
    %2161 = vmatpush1.msra.mxu0 %v704
    %2162 = vmatprep.subr.mxu0 0.0
    %2163 = vmatpush1.msra.mxu0 %v697
    %2164 = vmatprep.subr.mxu0 0.0
    %2165 = vmatpush1.msra.mxu0 %v690
    %2166 = vmatprep.subr.mxu0 0.0
    %2167 = vmatpush1.msra.mxu0 %v683
    %2168 = vmatprep.subr.mxu0 0.0
    %2169 = vmatpush1.msra.mxu0 %v676
    %2170 = vmatprep.subr.mxu0 0.0
    %2171 = vmatpush1.msra.mxu0 %v669
    %2172 = vmatprep.subr.mxu0 0.0
    %2173 = vmatpush2.msra.mxu0 %v886
    %2174 = vmatprep.subr.mxu0 0.0
    %2175 = vmatpush2.msra.mxu0 %v879
    %2176 = vmatprep.subr.mxu0 0.0
    %2177 = vmatpush2.msra.mxu0 %v872
    %2178 = vmatprep.subr.mxu0 0.0
    %2179 = vmatpush2.msra.mxu0 %v865
    %2180 = vmatprep.subr.mxu0 0.0
    %2181 = vmatpush2.msra.mxu0 %v858
    %2182 = vmatprep.subr.mxu0 0.0
    %2183 = vmatpush2.msra.mxu0 %v851
    %2184 = vmatprep.subr.mxu0 0.0
    %2185 = vmatpush2.msra.mxu0 %v844
    %2186 = vmatprep.subr.mxu0 0.0
    %2187 = vmatpush2.msra.mxu0 %v837
    %2188 = vmatprep.subr.mxu0 0.0
    %2189 = vmatpush2.msra.mxu0 %v830
    %2190 = vmatprep.subr.mxu0 0.0
    %2191 = vmatpush2.msra.mxu0 %v823
    %2192 = vmatprep.subr.mxu0 0.0
    %2193 = vmatpush2.msra.mxu0 %v816
    %2194 = vmatprep.subr.mxu0 0.0
    %2195 = vmatpush2.msra.mxu0 %v809
    %2196 = vmatprep.subr.mxu0 0.0
    %2197 = vmatpush2.msra.mxu0 %v802
    %2198 = vmatprep.subr.mxu0 0.0
    %2199 = vmatpush2.msra.mxu0 %v795
    %2200 = vmatprep.subr.mxu0 0.0
    %2201 = vmatpush2.msra.mxu0 %v788
    %2202 = vmatprep.subr.mxu0 0.0
    %2203 = vmatpush2.msra.mxu0 %v781
    %2204 = vmatprep.mubr.f32.mxu0 %v212
    %2205 = vmatmul.mubr.f32.gmra.mxu0 %v211
    %v2206 = vpop.f32.mrf.mxu0
    %v2207 = vadd.f32 %v2137, %v2206
    %v2208 = vpop.f32.mrf.mxu0
    %2209 = vdwg.mxu0
    %2210 = vmatprep.subr.mxu0 0.0
    %2211 = vmatpush1.msra.mxu0 %v998
    %2212 = vmatprep.subr.mxu0 0.0
    %2213 = vmatpush1.msra.mxu0 %v991
    %2214 = vmatprep.subr.mxu0 0.0
    %2215 = vmatpush1.msra.mxu0 %v984
    %2216 = vmatprep.subr.mxu0 0.0
    %2217 = vmatpush1.msra.mxu0 %v977
    %2218 = vmatprep.subr.mxu0 0.0
    %2219 = vmatpush1.msra.mxu0 %v970
    %2220 = vmatprep.subr.mxu0 0.0
    %2221 = vmatpush1.msra.mxu0 %v963
    %2222 = vmatprep.subr.mxu0 0.0
    %2223 = vmatpush1.msra.mxu0 %v956
    %2224 = vmatprep.subr.mxu0 0.0
    %2225 = vmatpush1.msra.mxu0 %v949
    %2226 = vmatprep.subr.mxu0 0.0
    %2227 = vmatpush1.msra.mxu0 %v942
    %2228 = vmatprep.subr.mxu0 0.0
    %2229 = vmatpush1.msra.mxu0 %v935
    %2230 = vmatprep.subr.mxu0 0.0
    %2231 = vmatpush1.msra.mxu0 %v928
    %2232 = vmatprep.subr.mxu0 0.0
    %2233 = vmatpush1.msra.mxu0 %v921
    %2234 = vmatprep.subr.mxu0 0.0
    %2235 = vmatpush1.msra.mxu0 %v914
    %2236 = vmatprep.subr.mxu0 0.0
    %2237 = vmatpush1.msra.mxu0 %v907
    %2238 = vmatprep.subr.mxu0 0.0
    %2239 = vmatpush1.msra.mxu0 %v900
    %2240 = vmatprep.subr.mxu0 0.0
    %2241 = vmatpush1.msra.mxu0 %v893
    %2242 = vmatprep.subr.mxu0 0.0
    %2243 = vmatpush2.msra.mxu0 %v1110
    %2244 = vmatprep.subr.mxu0 0.0
    %2245 = vmatpush2.msra.mxu0 %v1103
    %2246 = vmatprep.subr.mxu0 0.0
    %2247 = vmatpush2.msra.mxu0 %v1096
    %2248 = vmatprep.subr.mxu0 0.0
    %2249 = vmatpush2.msra.mxu0 %v1089
    %2250 = vmatprep.subr.mxu0 0.0
    %2251 = vmatpush2.msra.mxu0 %v1082
    %2252 = vmatprep.subr.mxu0 0.0
    %2253 = vmatpush2.msra.mxu0 %v1075
    %2254 = vmatprep.subr.mxu0 0.0
    %2255 = vmatpush2.msra.mxu0 %v1068
    %2256 = vmatprep.subr.mxu0 0.0
    %2257 = vmatpush2.msra.mxu0 %v1061
    %2258 = vmatprep.subr.mxu0 0.0
    %2259 = vmatpush2.msra.mxu0 %v1054
    %2260 = vmatprep.subr.mxu0 0.0
    %2261 = vmatpush2.msra.mxu0 %v1047
    %2262 = vmatprep.subr.mxu0 0.0
    %2263 = vmatpush2.msra.mxu0 %v1040
    %2264 = vmatprep.subr.mxu0 0.0
    %2265 = vmatpush2.msra.mxu0 %v1033
    %2266 = vmatprep.subr.mxu0 0.0
    %2267 = vmatpush2.msra.mxu0 %v1026
    %2268 = vmatprep.subr.mxu0 0.0
    %2269 = vmatpush2.msra.mxu0 %v1019
    %2270 = vmatprep.subr.mxu0 0.0
    %2271 = vmatpush2.msra.mxu0 %v1012
    %2272 = vmatprep.subr.mxu0 0.0
    %2273 = vmatpush2.msra.mxu0 %v1005
    %2274 = vmatprep.mubr.f32.mxu0 %v214
    %2275 = vmatmul.mubr.f32.gmra.mxu0 %v213
    %v2276 = vpop.f32.mrf.mxu0
    %v2277 = vadd.f32 %v2207, %v2276
    %v2278 = vpop.f32.mrf.mxu0
    %2279 = vdwg.mxu0
    %v2280 = vmax.f32 %v1428, 0.0
    %v2281 = vmax.f32 %v1430, 0.0
    %v2282 = vmax.f32 %v1712, 0.0
    %v2283 = vmax.f32 %v1714, 0.0
    %v2284 = vmax.f32 %v1996, 0.0
    %v2285 = vmax.f32 %v1998, 0.0
    %v2286 = vmax.f32 %v2277, 0.0
    %v2287 = vld [vmem:[#allocation10] sm:$0xff]
    %v2288 = vld [vmem:[#allocation10 + $0x8] sm:$0xff]
    %v2289 = vld [vmem:[#allocation10 + $0x10] sm:$0xff]
    %v2290 = vld [vmem:[#allocation10 + $0x18] sm:$0xff]
    %v2291 = vld [vmem:[#allocation10 + $0x20] sm:$0xff]
    %v2292 = vld [vmem:[#allocation10 + $0x28] sm:$0xff]
    %v2293 = vld [vmem:[#allocation10 + $0x30] sm:$0xff]
    %v2294 = vld [vmem:[#allocation10 + $0x38] sm:$0xff]
    %v2295 = vld [vmem:[#allocation10 + $0x40] sm:$0xff]
    %v2296 = vld [vmem:[#allocation10 + $0x48] sm:$0xff]
    %v2297 = vld [vmem:[#allocation10 + $0x50] sm:$0xff]
    %v2298 = vld [vmem:[#allocation10 + $0x58] sm:$0xff]
    %v2299 = vld [vmem:[#allocation10 + $0x60] sm:$0xff]
    %v2300 = vld [vmem:[#allocation10 + $0x68] sm:$0xff]
    %v2301 = vld [vmem:[#allocation10 + $0x70] sm:$0xff]
    %v2302 = vld [vmem:[#allocation10 + $0x78] sm:$0xff]
    %v2303 = vld [vmem:[#allocation10 + $0x80] sm:$0xff]
    %v2304 = vld [vmem:[#allocation10 + $0x88] sm:$0xff]
    %v2305 = vld [vmem:[#allocation10 + $0x90] sm:$0xff]
    %v2306 = vld [vmem:[#allocation10 + $0x98] sm:$0xff]
    %v2307 = vld [vmem:[#allocation10 + $0xa0] sm:$0xff]
    %v2308 = vld [vmem:[#allocation10 + $0xa8] sm:$0xff]
    %v2309 = vld [vmem:[#allocation10 + $0xb0] sm:$0xff]
    %v2310 = vld [vmem:[#allocation10 + $0xb8] sm:$0xff]
    %v2311 = vld [vmem:[#allocation10 + $0xc0] sm:$0xff]
    %v2312 = vld [vmem:[#allocation10 + $0xc8] sm:$0xff]
    %v2313 = vld [vmem:[#allocation10 + $0xd0] sm:$0xff]
    %v2314 = vld [vmem:[#allocation10 + $0xd8] sm:$0xff]
    %v2315 = vld [vmem:[#allocation10 + $0xe0] sm:$0xff]
    %v2316 = vld [vmem:[#allocation10 + $0xe8] sm:$0xff]
    %v2317 = vld [vmem:[#allocation10 + $0xf0] sm:$0xff]
    %v2318 = vld [vmem:[#allocation10 + $0xf8] sm:$0xff]
    %v2319 = vld [vmem:[#allocation10 + $0x100] sm:$0xff]
    %v2320 = vld [vmem:[#allocation10 + $0x108] sm:$0xff]
    %v2321 = vld [vmem:[#allocation10 + $0x110] sm:$0xff]
    %v2322 = vld [vmem:[#allocation10 + $0x118] sm:$0xff]
    %v2323 = vld [vmem:[#allocation10 + $0x120] sm:$0xff]
    %v2324 = vld [vmem:[#allocation10 + $0x128] sm:$0xff]
    %v2325 = vld [vmem:[#allocation10 + $0x130] sm:$0xff]
    %v2326 = vld [vmem:[#allocation10 + $0x138] sm:$0xff]
    %v2327 = vld [vmem:[#allocation10 + $0x140] sm:$0xff]
    %v2328 = vld [vmem:[#allocation10 + $0x148] sm:$0xff]
    %v2329 = vld [vmem:[#allocation10 + $0x150] sm:$0xff]
    %v2330 = vld [vmem:[#allocation10 + $0x158] sm:$0xff]
    %v2331 = vld [vmem:[#allocation10 + $0x160] sm:$0xff]
    %v2332 = vld [vmem:[#allocation10 + $0x168] sm:$0xff]
    %v2333 = vld [vmem:[#allocation10 + $0x170] sm:$0xff]
    %v2334 = vld [vmem:[#allocation10 + $0x178] sm:$0xff]
    %v2335 = vld [vmem:[#allocation10 + $0x180] sm:$0xff]
    %v2336 = vld [vmem:[#allocation10 + $0x188] sm:$0xff]
    %v2337 = vld [vmem:[#allocation10 + $0x190] sm:$0xff]
    %v2338 = vld [vmem:[#allocation10 + $0x198] sm:$0xff]
    %v2339 = vld [vmem:[#allocation10 + $0x1a0] sm:$0xff]
    %v2340 = vld [vmem:[#allocation10 + $0x1a8] sm:$0xff]
    %v2341 = vld [vmem:[#allocation10 + $0x1b0] sm:$0xff]
    %v2342 = vld [vmem:[#allocation10 + $0x1b8] sm:$0xff]
    %v2343 = vld [vmem:[#allocation10 + $0x1c0] sm:$0xff]
    %v2344 = vld [vmem:[#allocation10 + $0x1c8] sm:$0xff]
    %v2345 = vld [vmem:[#allocation10 + $0x1d0] sm:$0xff]
    %v2346 = vld [vmem:[#allocation10 + $0x1d8] sm:$0xff]
    %v2347 = vld [vmem:[#allocation10 + $0x1e0] sm:$0xff]
    %v2348 = vld [vmem:[#allocation10 + $0x1e8] sm:$0xff]
    %v2349 = vld [vmem:[#allocation10 + $0x1f0] sm:$0xff]
    %v2350 = vld [vmem:[#allocation10 + $0x1f8] sm:$0xff]
    %v2351 = vld [vmem:[#allocation10 + $0x200] sm:$0xff]
    %v2352 = vld [vmem:[#allocation10 + $0x208] sm:$0xff]
    %v2353 = vld [vmem:[#allocation10 + $0x210] sm:$0xff]
    %v2354 = vld [vmem:[#allocation10 + $0x218] sm:$0xff]
    %v2355 = vld [vmem:[#allocation10 + $0x220] sm:$0xff]
    %v2356 = vld [vmem:[#allocation10 + $0x228] sm:$0xff]
    %v2357 = vld [vmem:[#allocation10 + $0x230] sm:$0xff]
    %v2358 = vld [vmem:[#allocation10 + $0x238] sm:$0xff]
    %v2359 = vld [vmem:[#allocation10 + $0x240] sm:$0xff]
    %v2360 = vld [vmem:[#allocation10 + $0x248] sm:$0xff]
    %v2361 = vld [vmem:[#allocation10 + $0x250] sm:$0xff]
    %v2362 = vld [vmem:[#allocation10 + $0x258] sm:$0xff]
    %v2363 = vld [vmem:[#allocation10 + $0x260] sm:$0xff]
    %v2364 = vld [vmem:[#allocation10 + $0x268] sm:$0xff]
    %v2365 = vld [vmem:[#allocation10 + $0x270] sm:$0xff]
    %v2366 = vld [vmem:[#allocation10 + $0x278] sm:$0xff]
    %v2367 = vld [vmem:[#allocation10 + $0x280] sm:$0xff]
    %v2368 = vld [vmem:[#allocation10 + $0x288] sm:$0xff]
    %v2369 = vld [vmem:[#allocation10 + $0x290] sm:$0xff]
    %v2370 = vld [vmem:[#allocation10 + $0x298] sm:$0xff]
    %v2371 = vld [vmem:[#allocation10 + $0x2a0] sm:$0xff]
    %v2372 = vld [vmem:[#allocation10 + $0x2a8] sm:$0xff]
    %v2373 = vld [vmem:[#allocation10 + $0x2b0] sm:$0xff]
    %v2374 = vld [vmem:[#allocation10 + $0x2b8] sm:$0xff]
    %v2375 = vld [vmem:[#allocation10 + $0x2c0] sm:$0xff]
    %v2376 = vld [vmem:[#allocation10 + $0x2c8] sm:$0xff]
    %v2377 = vld [vmem:[#allocation10 + $0x2d0] sm:$0xff]
    %v2378 = vld [vmem:[#allocation10 + $0x2d8] sm:$0xff]
    %v2379 = vld [vmem:[#allocation10 + $0x2e0] sm:$0xff]
    %v2380 = vld [vmem:[#allocation10 + $0x2e8] sm:$0xff]
    %v2381 = vld [vmem:[#allocation10 + $0x2f0] sm:$0xff]
    %v2382 = vld [vmem:[#allocation10 + $0x2f8] sm:$0xff]
    %v2383 = vld [vmem:[#allocation10 + $0x300] sm:$0xff]
    %v2384 = vld [vmem:[#allocation10 + $0x308] sm:$0xff]
    %v2385 = vld [vmem:[#allocation10 + $0x310] sm:$0xff]
    %v2386 = vld [vmem:[#allocation10 + $0x318] sm:$0xff]
    %v2387 = vld [vmem:[#allocation10 + $0x320] sm:$0xff]
    %v2388 = vld [vmem:[#allocation10 + $0x328] sm:$0xff]
    %v2389 = vld [vmem:[#allocation10 + $0x330] sm:$0xff]
    %v2390 = vld [vmem:[#allocation10 + $0x338] sm:$0xff]
    %v2391 = vld [vmem:[#allocation10 + $0x340] sm:$0xff]
    %v2392 = vld [vmem:[#allocation10 + $0x348] sm:$0xff]
    %v2393 = vld [vmem:[#allocation10 + $0x350] sm:$0xff]
    %v2394 = vld [vmem:[#allocation10 + $0x358] sm:$0xff]
    %v2395 = vld [vmem:[#allocation10 + $0x360] sm:$0xff]
    %v2396 = vld [vmem:[#allocation10 + $0x368] sm:$0xff]
    %v2397 = vld [vmem:[#allocation10 + $0x370] sm:$0xff]
    %v2398 = vld [vmem:[#allocation10 + $0x378] sm:$0xff]
    %v2399 = vld [vmem:[#allocation10 + $0x380] sm:$0xff]
    %v2400 = vld [vmem:[#allocation10 + $0x388] sm:$0xff]
    %v2401 = vld [vmem:[#allocation10 + $0x390] sm:$0xff]
    %v2402 = vld [vmem:[#allocation10 + $0x398] sm:$0xff]
    %v2403 = vld [vmem:[#allocation10 + $0x3a0] sm:$0xff]
    %v2404 = vld [vmem:[#allocation10 + $0x3a8] sm:$0xff]
    %v2405 = vld [vmem:[#allocation10 + $0x3b0] sm:$0xff]
    %v2406 = vld [vmem:[#allocation10 + $0x3b8] sm:$0xff]
    %v2407 = vld [vmem:[#allocation10 + $0x3c0] sm:$0xff]
    %v2408 = vld [vmem:[#allocation10 + $0x3c8] sm:$0xff]
    %v2409 = vld [vmem:[#allocation10 + $0x3d0] sm:$0xff]
    %v2410 = vld [vmem:[#allocation10 + $0x3d8] sm:$0xff]
    %v2411 = vld [vmem:[#allocation10 + $0x3e0] sm:$0xff]
    %v2412 = vld [vmem:[#allocation10 + $0x3e8] sm:$0xff]
    %v2413 = vld [vmem:[#allocation10 + $0x3f0] sm:$0xff]
    %v2414 = vld [vmem:[#allocation10 + $0x3f8] sm:$0xff]
    %v2415 = vld [vmem:[#allocation10 + $0x400] sm:$0xff]
    %v2416 = vld [vmem:[#allocation10 + $0x408] sm:$0xff]
    %v2417 = vld [vmem:[#allocation10 + $0x410] sm:$0xff]
    %v2418 = vld [vmem:[#allocation10 + $0x418] sm:$0xff]
    %v2419 = vld [vmem:[#allocation10 + $0x420] sm:$0xff]
    %v2420 = vld [vmem:[#allocation10 + $0x428] sm:$0xff]
    %v2421 = vld [vmem:[#allocation10 + $0x430] sm:$0xff]
    %v2422 = vld [vmem:[#allocation10 + $0x438] sm:$0xff]
    %v2423 = vld [vmem:[#allocation10 + $0x440] sm:$0xff]
    %v2424 = vld [vmem:[#allocation10 + $0x448] sm:$0xff]
    %v2425 = vld [vmem:[#allocation10 + $0x450] sm:$0xff]
    %v2426 = vld [vmem:[#allocation10 + $0x458] sm:$0xff]
    %v2427 = vld [vmem:[#allocation10 + $0x460] sm:$0xff]
    %v2428 = vld [vmem:[#allocation10 + $0x468] sm:$0xff]
    %v2429 = vld [vmem:[#allocation10 + $0x470] sm:$0xff]
    %v2430 = vld [vmem:[#allocation10 + $0x478] sm:$0xff]
    %v2431 = vld [vmem:[#allocation10 + $0x480] sm:$0xff]
    %v2432 = vld [vmem:[#allocation10 + $0x488] sm:$0xff]
    %v2433 = vld [vmem:[#allocation10 + $0x490] sm:$0xff]
    %v2434 = vld [vmem:[#allocation10 + $0x498] sm:$0xff]
    %v2435 = vld [vmem:[#allocation10 + $0x4a0] sm:$0xff]
    %v2436 = vld [vmem:[#allocation10 + $0x4a8] sm:$0xff]
    %v2437 = vld [vmem:[#allocation10 + $0x4b0] sm:$0xff]
    %v2438 = vld [vmem:[#allocation10 + $0x4b8] sm:$0xff]
    %v2439 = vld [vmem:[#allocation10 + $0x4c0] sm:$0xff]
    %v2440 = vld [vmem:[#allocation10 + $0x4c8] sm:$0xff]
    %v2441 = vld [vmem:[#allocation10 + $0x4d0] sm:$0xff]
    %v2442 = vld [vmem:[#allocation10 + $0x4d8] sm:$0xff]
    %v2443 = vld [vmem:[#allocation10 + $0x4e0] sm:$0xff]
    %v2444 = vld [vmem:[#allocation10 + $0x4e8] sm:$0xff]
    %v2445 = vld [vmem:[#allocation10 + $0x4f0] sm:$0xff]
    %v2446 = vld [vmem:[#allocation10 + $0x4f8] sm:$0xff]
    %v2447 = vld [vmem:[#allocation10 + $0x500] sm:$0xff]
    %v2448 = vld [vmem:[#allocation10 + $0x508] sm:$0xff]
    %v2449 = vld [vmem:[#allocation10 + $0x510] sm:$0xff]
    %v2450 = vld [vmem:[#allocation10 + $0x518] sm:$0xff]
    %v2451 = vld [vmem:[#allocation10 + $0x520] sm:$0xff]
    %v2452 = vld [vmem:[#allocation10 + $0x528] sm:$0xff]
    %v2453 = vld [vmem:[#allocation10 + $0x530] sm:$0xff]
    %v2454 = vld [vmem:[#allocation10 + $0x538] sm:$0xff]
    %v2455 = vld [vmem:[#allocation10 + $0x540] sm:$0xff]
    %v2456 = vld [vmem:[#allocation10 + $0x548] sm:$0xff]
    %v2457 = vld [vmem:[#allocation10 + $0x550] sm:$0xff]
    %v2458 = vld [vmem:[#allocation10 + $0x558] sm:$0xff]
    %v2459 = vld [vmem:[#allocation10 + $0x560] sm:$0xff]
    %v2460 = vld [vmem:[#allocation10 + $0x568] sm:$0xff]
    %v2461 = vld [vmem:[#allocation10 + $0x570] sm:$0xff]
    %v2462 = vld [vmem:[#allocation10 + $0x578] sm:$0xff]
    %v2463 = vld [vmem:[#allocation10 + $0x580] sm:$0xff]
    %v2464 = vld [vmem:[#allocation10 + $0x588] sm:$0xff]
    %v2465 = vld [vmem:[#allocation10 + $0x590] sm:$0xff]
    %v2466 = vld [vmem:[#allocation10 + $0x598] sm:$0xff]
    %v2467 = vld [vmem:[#allocation10 + $0x5a0] sm:$0xff]
    %v2468 = vld [vmem:[#allocation10 + $0x5a8] sm:$0xff]
    %v2469 = vld [vmem:[#allocation10 + $0x5b0] sm:$0xff]
    %v2470 = vld [vmem:[#allocation10 + $0x5b8] sm:$0xff]
    %v2471 = vld [vmem:[#allocation10 + $0x5c0] sm:$0xff]
    %v2472 = vld [vmem:[#allocation10 + $0x5c8] sm:$0xff]
    %v2473 = vld [vmem:[#allocation10 + $0x5d0] sm:$0xff]
    %v2474 = vld [vmem:[#allocation10 + $0x5d8] sm:$0xff]
    %v2475 = vld [vmem:[#allocation10 + $0x5e0] sm:$0xff]
    %v2476 = vld [vmem:[#allocation10 + $0x5e8] sm:$0xff]
    %v2477 = vld [vmem:[#allocation10 + $0x5f0] sm:$0xff]
    %v2478 = vld [vmem:[#allocation10 + $0x5f8] sm:$0xff]
    %v2479 = vld [vmem:[#allocation10 + $0x600] sm:$0xff]
    %v2480 = vld [vmem:[#allocation10 + $0x608] sm:$0xff]
    %v2481 = vld [vmem:[#allocation10 + $0x610] sm:$0xff]
    %v2482 = vld [vmem:[#allocation10 + $0x618] sm:$0xff]
    %v2483 = vld [vmem:[#allocation10 + $0x620] sm:$0xff]
    %v2484 = vld [vmem:[#allocation10 + $0x628] sm:$0xff]
    %v2485 = vld [vmem:[#allocation10 + $0x630] sm:$0xff]
    %v2486 = vld [vmem:[#allocation10 + $0x638] sm:$0xff]
    %v2487 = vld [vmem:[#allocation10 + $0x640] sm:$0xff]
    %v2488 = vld [vmem:[#allocation10 + $0x648] sm:$0xff]
    %v2489 = vld [vmem:[#allocation10 + $0x650] sm:$0xff]
    %v2490 = vld [vmem:[#allocation10 + $0x658] sm:$0xff]
    %v2491 = vld [vmem:[#allocation10 + $0x660] sm:$0xff]
    %v2492 = vld [vmem:[#allocation10 + $0x668] sm:$0xff]
    %v2493 = vld [vmem:[#allocation10 + $0x670] sm:$0xff]
    %v2494 = vld [vmem:[#allocation10 + $0x678] sm:$0xff]
    %v2495 = vld [vmem:[#allocation10 + $0x680] sm:$0xff]
    %v2496 = vld [vmem:[#allocation10 + $0x688] sm:$0xff]
    %v2497 = vld [vmem:[#allocation10 + $0x690] sm:$0xff]
    %v2498 = vld [vmem:[#allocation10 + $0x698] sm:$0xff]
    %v2499 = vld [vmem:[#allocation10 + $0x6a0] sm:$0xff]
    %v2500 = vld [vmem:[#allocation10 + $0x6a8] sm:$0xff]
    %v2501 = vld [vmem:[#allocation10 + $0x6b0] sm:$0xff]
    %v2502 = vld [vmem:[#allocation10 + $0x6b8] sm:$0xff]
    %v2503 = vld [vmem:[#allocation10 + $0x6c0] sm:$0xff]
    %v2504 = vld [vmem:[#allocation10 + $0x6c8] sm:$0xff]
    %v2505 = vld [vmem:[#allocation10 + $0x6d0] sm:$0xff]
    %v2506 = vld [vmem:[#allocation10 + $0x6d8] sm:$0xff]
    %v2507 = vld [vmem:[#allocation10 + $0x6e0] sm:$0xff]
    %v2508 = vld [vmem:[#allocation10 + $0x6e8] sm:$0xff]
    %v2509 = vld [vmem:[#allocation10 + $0x6f0] sm:$0xff]
    %v2510 = vld [vmem:[#allocation10 + $0x6f8] sm:$0xff]
    %v2511 = vld [vmem:[#allocation10 + $0x700] sm:$0xff]
    %v2512 = vld [vmem:[#allocation10 + $0x708] sm:$0xff]
    %v2513 = vld [vmem:[#allocation10 + $0x710] sm:$0xff]
    %v2514 = vld [vmem:[#allocation10 + $0x718] sm:$0xff]
    %v2515 = vld [vmem:[#allocation10 + $0x720] sm:$0xff]
    %v2516 = vld [vmem:[#allocation10 + $0x728] sm:$0xff]
    %v2517 = vld [vmem:[#allocation10 + $0x730] sm:$0xff]
    %v2518 = vld [vmem:[#allocation10 + $0x738] sm:$0xff]
    %v2519 = vld [vmem:[#allocation10 + $0x740] sm:$0xff]
    %v2520 = vld [vmem:[#allocation10 + $0x748] sm:$0xff]
    %v2521 = vld [vmem:[#allocation10 + $0x750] sm:$0xff]
    %v2522 = vld [vmem:[#allocation10 + $0x758] sm:$0xff]
    %v2523 = vld [vmem:[#allocation10 + $0x760] sm:$0xff]
    %v2524 = vld [vmem:[#allocation10 + $0x768] sm:$0xff]
    %v2525 = vld [vmem:[#allocation10 + $0x770] sm:$0xff]
    %v2526 = vld [vmem:[#allocation10 + $0x778] sm:$0xff]
    %v2527 = vld [vmem:[#allocation10 + $0x780] sm:$0xff]
    %v2528 = vld [vmem:[#allocation10 + $0x788] sm:$0xff]
    %v2529 = vld [vmem:[#allocation10 + $0x790] sm:$0xff]
    %v2530 = vld [vmem:[#allocation10 + $0x798] sm:$0xff]
    %v2531 = vld [vmem:[#allocation10 + $0x7a0] sm:$0xff]
    %v2532 = vld [vmem:[#allocation10 + $0x7a8] sm:$0xff]
    %v2533 = vld [vmem:[#allocation10 + $0x7b0] sm:$0xff]
    %v2534 = vld [vmem:[#allocation10 + $0x7b8] sm:$0xff]
    %v2535 = vld [vmem:[#allocation10 + $0x7c0] sm:$0xff]
    %v2536 = vld [vmem:[#allocation10 + $0x7c8] sm:$0xff]
    %v2537 = vld [vmem:[#allocation10 + $0x7d0] sm:$0xff]
    %v2538 = vld [vmem:[#allocation10 + $0x7d8] sm:$0xff]
    %v2539 = vld [vmem:[#allocation10 + $0x7e0] sm:$0xff]
    %v2540 = vld [vmem:[#allocation10 + $0x7e8] sm:$0xff]
    %v2541 = vld [vmem:[#allocation10 + $0x7f0] sm:$0xff]
    %v2542 = vld [vmem:[#allocation10 + $0x7f8] sm:$0xff]
    %v2543 = vld [vmem:[#allocation10 + $0x800] sm:$0xff]
    %v2544 = vld [vmem:[#allocation10 + $0x808] sm:$0xff]
    %v2545 = vld [vmem:[#allocation10 + $0x810] sm:$0xff]
    %v2546 = vld [vmem:[#allocation10 + $0x818] sm:$0xff]
    %v2547 = vld [vmem:[#allocation10 + $0x820] sm:$0xff]
    %v2548 = vld [vmem:[#allocation10 + $0x828] sm:$0xff]
    %v2549 = vld [vmem:[#allocation10 + $0x830] sm:$0xff]
    %v2550 = vld [vmem:[#allocation10 + $0x838] sm:$0xff]
    %v2551 = vld [vmem:[#allocation10 + $0x840] sm:$0xff]
    %v2552 = vld [vmem:[#allocation10 + $0x848] sm:$0xff]
    %v2553 = vld [vmem:[#allocation10 + $0x850] sm:$0xff]
    %v2554 = vld [vmem:[#allocation10 + $0x858] sm:$0xff]
    %v2555 = vld [vmem:[#allocation10 + $0x860] sm:$0xff]
    %v2556 = vld [vmem:[#allocation10 + $0x868] sm:$0xff]
    %v2557 = vld [vmem:[#allocation10 + $0x870] sm:$0xff]
    %v2558 = vld [vmem:[#allocation10 + $0x878] sm:$0xff]
    %v2559 = vld [vmem:[#allocation10 + $0x880] sm:$0xff]
    %v2560 = vld [vmem:[#allocation10 + $0x888] sm:$0xff]
    %v2561 = vld [vmem:[#allocation10 + $0x890] sm:$0xff]
    %v2562 = vld [vmem:[#allocation10 + $0x898] sm:$0xff]
    %v2563 = vld [vmem:[#allocation10 + $0x8a0] sm:$0xff]
    %v2564 = vld [vmem:[#allocation10 + $0x8a8] sm:$0xff]
    %v2565 = vld [vmem:[#allocation10 + $0x8b0] sm:$0xff]
    %v2566 = vld [vmem:[#allocation10 + $0x8b8] sm:$0xff]
    %v2567 = vld [vmem:[#allocation10 + $0x8c0] sm:$0xff]
    %v2568 = vld [vmem:[#allocation10 + $0x8c8] sm:$0xff]
    %v2569 = vld [vmem:[#allocation10 + $0x8d0] sm:$0xff]
    %v2570 = vld [vmem:[#allocation10 + $0x8d8] sm:$0xff]
    %v2571 = vld [vmem:[#allocation10 + $0x8e0] sm:$0xff]
    %v2572 = vld [vmem:[#allocation10 + $0x8e8] sm:$0xff]
    %v2573 = vld [vmem:[#allocation10 + $0x8f0] sm:$0xff]
    %v2574 = vld [vmem:[#allocation10 + $0x8f8] sm:$0xff]
    %v2575 = vld [vmem:[#allocation10 + $0x900] sm:$0xff]
    %v2576 = vld [vmem:[#allocation10 + $0x908] sm:$0xff]
    %v2577 = vld [vmem:[#allocation10 + $0x910] sm:$0xff]
    %v2578 = vld [vmem:[#allocation10 + $0x918] sm:$0xff]
    %v2579 = vld [vmem:[#allocation10 + $0x920] sm:$0xff]
    %v2580 = vld [vmem:[#allocation10 + $0x928] sm:$0xff]
    %v2581 = vld [vmem:[#allocation10 + $0x930] sm:$0xff]
    %v2582 = vld [vmem:[#allocation10 + $0x938] sm:$0xff]
    %v2583 = vld [vmem:[#allocation10 + $0x940] sm:$0xff]
    %v2584 = vld [vmem:[#allocation10 + $0x948] sm:$0xff]
    %v2585 = vld [vmem:[#allocation10 + $0x950] sm:$0xff]
    %v2586 = vld [vmem:[#allocation10 + $0x958] sm:$0xff]
    %v2587 = vld [vmem:[#allocation10 + $0x960] sm:$0xff]
    %v2588 = vld [vmem:[#allocation10 + $0x968] sm:$0xff]
    %v2589 = vld [vmem:[#allocation10 + $0x970] sm:$0xff]
    %v2590 = vld [vmem:[#allocation10 + $0x978] sm:$0xff]
    %v2591 = vld [vmem:[#allocation10 + $0x980] sm:$0xff]
    %v2592 = vld [vmem:[#allocation10 + $0x988] sm:$0xff]
    %v2593 = vld [vmem:[#allocation10 + $0x990] sm:$0xff]
    %v2594 = vld [vmem:[#allocation10 + $0x998] sm:$0xff]
    %v2595 = vld [vmem:[#allocation10 + $0x9a0] sm:$0xff]
    %v2596 = vld [vmem:[#allocation10 + $0x9a8] sm:$0xff]
    %v2597 = vld [vmem:[#allocation10 + $0x9b0] sm:$0xff]
    %v2598 = vld [vmem:[#allocation10 + $0x9b8] sm:$0xff]
    %v2599 = vld [vmem:[#allocation10 + $0x9c0] sm:$0xff]
    %v2600 = vld [vmem:[#allocation10 + $0x9c8] sm:$0xff]
    %v2601 = vld [vmem:[#allocation10 + $0x9d0] sm:$0xff]
    %v2602 = vld [vmem:[#allocation10 + $0x9d8] sm:$0xff]
    %v2603 = vld [vmem:[#allocation10 + $0x9e0] sm:$0xff]
    %v2604 = vld [vmem:[#allocation10 + $0x9e8] sm:$0xff]
    %v2605 = vld [vmem:[#allocation10 + $0x9f0] sm:$0xff]
    %v2606 = vld [vmem:[#allocation10 + $0x9f8] sm:$0xff]
    %v2607 = vld [vmem:[#allocation10 + $0xa00] sm:$0xff]
    %v2608 = vld [vmem:[#allocation10 + $0xa08] sm:$0xff]
    %v2609 = vld [vmem:[#allocation10 + $0xa10] sm:$0xff]
    %v2610 = vld [vmem:[#allocation10 + $0xa18] sm:$0xff]
    %v2611 = vld [vmem:[#allocation10 + $0xa20] sm:$0xff]
    %v2612 = vld [vmem:[#allocation10 + $0xa28] sm:$0xff]
    %v2613 = vld [vmem:[#allocation10 + $0xa30] sm:$0xff]
    %v2614 = vld [vmem:[#allocation10 + $0xa38] sm:$0xff]
    %v2615 = vld [vmem:[#allocation10 + $0xa40] sm:$0xff]
    %v2616 = vld [vmem:[#allocation10 + $0xa48] sm:$0xff]
    %v2617 = vld [vmem:[#allocation10 + $0xa50] sm:$0xff]
    %v2618 = vld [vmem:[#allocation10 + $0xa58] sm:$0xff]
    %v2619 = vld [vmem:[#allocation10 + $0xa60] sm:$0xff]
    %v2620 = vld [vmem:[#allocation10 + $0xa68] sm:$0xff]
    %v2621 = vld [vmem:[#allocation10 + $0xa70] sm:$0xff]
    %v2622 = vld [vmem:[#allocation10 + $0xa78] sm:$0xff]
    %v2623 = vld [vmem:[#allocation11] sm:$0x7]
    %v2625 = vlaneseq
    %v2626 = vshrl.u32 %v2625, 7
    %v2627 = vsub.s32 0, %v2626
    %v2628 = vrot.slane %v2623, %v2627
    %v2629 = vlaneseq
    %v2630 = vshrl.u32 %v2629, 7
    %v2631 = vsub.s32 1, %v2630
    %v2632 = vrot.slane %v2623, %v2631
    %v2633 = vlaneseq
    %v2634 = vshrl.u32 %v2633, 7
    %v2635 = vsub.s32 2, %v2634
    %v2636 = vrot.slane %v2623, %v2635
    %2640 = vmatprep.subr.mxu0 %v2333
    %2641 = vmatpush1.msra.mxu0 %v2332
    %2642 = vmatprep.subr.mxu0 %v2330
    %2643 = vmatpush1.msra.mxu0 %v2329
    %2644 = vmatprep.subr.mxu0 %v2327
    %2645 = vmatpush1.msra.mxu0 %v2326
    %2646 = vmatprep.subr.mxu0 %v2324
    %2647 = vmatpush1.msra.mxu0 %v2323
    %2648 = vmatprep.subr.mxu0 %v2321
    %2649 = vmatpush1.msra.mxu0 %v2320
    %2650 = vmatprep.subr.mxu0 %v2318
    %2651 = vmatpush1.msra.mxu0 %v2317
    %2652 = vmatprep.subr.mxu0 %v2315
    %2653 = vmatpush1.msra.mxu0 %v2314
    %2654 = vmatprep.subr.mxu0 %v2312
    %2655 = vmatpush1.msra.mxu0 %v2311
    %2656 = vmatprep.subr.mxu0 %v2309
    %2657 = vmatpush1.msra.mxu0 %v2308
    %2658 = vmatprep.subr.mxu0 %v2306
    %2659 = vmatpush1.msra.mxu0 %v2305
    %2660 = vmatprep.subr.mxu0 %v2303
    %2661 = vmatpush1.msra.mxu0 %v2302
    %2662 = vmatprep.subr.mxu0 %v2300
    %2663 = vmatpush1.msra.mxu0 %v2299
    %2664 = vmatprep.subr.mxu0 %v2297
    %2665 = vmatpush1.msra.mxu0 %v2296
    %2666 = vmatprep.subr.mxu0 %v2294
    %2667 = vmatpush1.msra.mxu0 %v2293
    %2668 = vmatprep.subr.mxu0 %v2291
    %2669 = vmatpush1.msra.mxu0 %v2290
    %2670 = vmatprep.subr.mxu0 %v2288
    %2671 = vmatpush1.msra.mxu0 %v2287
    %2672 = vmatprep.subr.mxu0 %v2381
    %2673 = vmatpush2.msra.mxu0 %v2380
    %2674 = vmatprep.subr.mxu0 %v2378
    %2675 = vmatpush2.msra.mxu0 %v2377
    %2676 = vmatprep.subr.mxu0 %v2375
    %2677 = vmatpush2.msra.mxu0 %v2374
    %2678 = vmatprep.subr.mxu0 %v2372
    %2679 = vmatpush2.msra.mxu0 %v2371
    %2680 = vmatprep.subr.mxu0 %v2369
    %2681 = vmatpush2.msra.mxu0 %v2368
    %2682 = vmatprep.subr.mxu0 %v2366
    %2683 = vmatpush2.msra.mxu0 %v2365
    %2684 = vmatprep.subr.mxu0 %v2363
    %2685 = vmatpush2.msra.mxu0 %v2362
    %2686 = vmatprep.subr.mxu0 %v2360
    %2687 = vmatpush2.msra.mxu0 %v2359
    %2688 = vmatprep.subr.mxu0 %v2357
    %2689 = vmatpush2.msra.mxu0 %v2356
    %2690 = vmatprep.subr.mxu0 %v2354
    %2691 = vmatpush2.msra.mxu0 %v2353
    %2692 = vmatprep.subr.mxu0 %v2351
    %2693 = vmatpush2.msra.mxu0 %v2350
    %2694 = vmatprep.subr.mxu0 %v2348
    %2695 = vmatpush2.msra.mxu0 %v2347
    %2696 = vmatprep.subr.mxu0 %v2345
    %2697 = vmatpush2.msra.mxu0 %v2344
    %2698 = vmatprep.subr.mxu0 %v2342
    %2699 = vmatpush2.msra.mxu0 %v2341
    %2700 = vmatprep.subr.mxu0 %v2339
    %2701 = vmatpush2.msra.mxu0 %v2338
    %2702 = vmatprep.subr.mxu0 %v2336
    %2703 = vmatpush2.msra.mxu0 %v2335
    %2704 = vmatprep.mubr.f32.mxu0 %v2281
    %2705 = vmatmul.mubr.f32.gmra.mxu0 %v2280
    %v2706 = vpop.f32.mrf.mxu0
    %v2707 = vadd.f32 %v2628, %v2706
    %v2708 = vpop.f32.mrf.mxu0
    %v2709 = vadd.f32 %v2632, %v2708
    %2710 = vdwg.mxu0
    %2711 = vmatprep.subr.mxu0 %v2429
    %2712 = vmatpush1.msra.mxu0 %v2428
    %2713 = vmatprep.subr.mxu0 %v2426
    %2714 = vmatpush1.msra.mxu0 %v2425
    %2715 = vmatprep.subr.mxu0 %v2423
    %2716 = vmatpush1.msra.mxu0 %v2422
    %2717 = vmatprep.subr.mxu0 %v2420
    %2718 = vmatpush1.msra.mxu0 %v2419
    %2719 = vmatprep.subr.mxu0 %v2417
    %2720 = vmatpush1.msra.mxu0 %v2416
    %2721 = vmatprep.subr.mxu0 %v2414
    %2722 = vmatpush1.msra.mxu0 %v2413
    %2723 = vmatprep.subr.mxu0 %v2411
    %2724 = vmatpush1.msra.mxu0 %v2410
    %2725 = vmatprep.subr.mxu0 %v2408
    %2726 = vmatpush1.msra.mxu0 %v2407
    %2727 = vmatprep.subr.mxu0 %v2405
    %2728 = vmatpush1.msra.mxu0 %v2404
    %2729 = vmatprep.subr.mxu0 %v2402
    %2730 = vmatpush1.msra.mxu0 %v2401
    %2731 = vmatprep.subr.mxu0 %v2399
    %2732 = vmatpush1.msra.mxu0 %v2398
    %2733 = vmatprep.subr.mxu0 %v2396
    %2734 = vmatpush1.msra.mxu0 %v2395
    %2735 = vmatprep.subr.mxu0 %v2393
    %2736 = vmatpush1.msra.mxu0 %v2392
    %2737 = vmatprep.subr.mxu0 %v2390
    %2738 = vmatpush1.msra.mxu0 %v2389
    %2739 = vmatprep.subr.mxu0 %v2387
    %2740 = vmatpush1.msra.mxu0 %v2386
    %2741 = vmatprep.subr.mxu0 %v2384
    %2742 = vmatpush1.msra.mxu0 %v2383
    %2743 = vmatprep.subr.mxu0 %v2477
    %2744 = vmatpush2.msra.mxu0 %v2476
    %2745 = vmatprep.subr.mxu0 %v2474
    %2746 = vmatpush2.msra.mxu0 %v2473
    %2747 = vmatprep.subr.mxu0 %v2471
    %2748 = vmatpush2.msra.mxu0 %v2470
    %2749 = vmatprep.subr.mxu0 %v2468
    %2750 = vmatpush2.msra.mxu0 %v2467
    %2751 = vmatprep.subr.mxu0 %v2465
    %2752 = vmatpush2.msra.mxu0 %v2464
    %2753 = vmatprep.subr.mxu0 %v2462
    %2754 = vmatpush2.msra.mxu0 %v2461
    %2755 = vmatprep.subr.mxu0 %v2459
    %2756 = vmatpush2.msra.mxu0 %v2458
    %2757 = vmatprep.subr.mxu0 %v2456
    %2758 = vmatpush2.msra.mxu0 %v2455
    %2759 = vmatprep.subr.mxu0 %v2453
    %2760 = vmatpush2.msra.mxu0 %v2452
    %2761 = vmatprep.subr.mxu0 %v2450
    %2762 = vmatpush2.msra.mxu0 %v2449
    %2763 = vmatprep.subr.mxu0 %v2447
    %2764 = vmatpush2.msra.mxu0 %v2446
    %2765 = vmatprep.subr.mxu0 %v2444
    %2766 = vmatpush2.msra.mxu0 %v2443
    %2767 = vmatprep.subr.mxu0 %v2441
    %2768 = vmatpush2.msra.mxu0 %v2440
    %2769 = vmatprep.subr.mxu0 %v2438
    %2770 = vmatpush2.msra.mxu0 %v2437
    %2771 = vmatprep.subr.mxu0 %v2435
    %2772 = vmatpush2.msra.mxu0 %v2434
    %2773 = vmatprep.subr.mxu0 %v2432
    %2774 = vmatpush2.msra.mxu0 %v2431
    %2775 = vmatprep.mubr.f32.mxu0 %v2283
    %2776 = vmatmul.mubr.f32.gmra.mxu0 %v2282
    %v2777 = vpop.f32.mrf.mxu0
    %v2778 = vadd.f32 %v2707, %v2777
    %v2779 = vpop.f32.mrf.mxu0
    %v2780 = vadd.f32 %v2709, %v2779
    %2781 = vdwg.mxu0
    %2782 = vmatprep.subr.mxu0 %v2525
    %2783 = vmatpush1.msra.mxu0 %v2524
    %2784 = vmatprep.subr.mxu0 %v2522
    %2785 = vmatpush1.msra.mxu0 %v2521
    %2786 = vmatprep.subr.mxu0 %v2519
    %2787 = vmatpush1.msra.mxu0 %v2518
    %2788 = vmatprep.subr.mxu0 %v2516
    %2789 = vmatpush1.msra.mxu0 %v2515
    %2790 = vmatprep.subr.mxu0 %v2513
    %2791 = vmatpush1.msra.mxu0 %v2512
    %2792 = vmatprep.subr.mxu0 %v2510
    %2793 = vmatpush1.msra.mxu0 %v2509
    %2794 = vmatprep.subr.mxu0 %v2507
    %2795 = vmatpush1.msra.mxu0 %v2506
    %2796 = vmatprep.subr.mxu0 %v2504
    %2797 = vmatpush1.msra.mxu0 %v2503
    %2798 = vmatprep.subr.mxu0 %v2501
    %2799 = vmatpush1.msra.mxu0 %v2500
    %2800 = vmatprep.subr.mxu0 %v2498
    %2801 = vmatpush1.msra.mxu0 %v2497
    %2802 = vmatprep.subr.mxu0 %v2495
    %2803 = vmatpush1.msra.mxu0 %v2494
    %2804 = vmatprep.subr.mxu0 %v2492
    %2805 = vmatpush1.msra.mxu0 %v2491
    %2806 = vmatprep.subr.mxu0 %v2489
    %2807 = vmatpush1.msra.mxu0 %v2488
    %2808 = vmatprep.subr.mxu0 %v2486
    %2809 = vmatpush1.msra.mxu0 %v2485
    %2810 = vmatprep.subr.mxu0 %v2483
    %2811 = vmatpush1.msra.mxu0 %v2482
    %2812 = vmatprep.subr.mxu0 %v2480
    %2813 = vmatpush1.msra.mxu0 %v2479
    %2814 = vmatprep.subr.mxu0 %v2573
    %2815 = vmatpush2.msra.mxu0 %v2572
    %2816 = vmatprep.subr.mxu0 %v2570
    %2817 = vmatpush2.msra.mxu0 %v2569
    %2818 = vmatprep.subr.mxu0 %v2567
    %2819 = vmatpush2.msra.mxu0 %v2566
    %2820 = vmatprep.subr.mxu0 %v2564
    %2821 = vmatpush2.msra.mxu0 %v2563
    %2822 = vmatprep.subr.mxu0 %v2561
    %2823 = vmatpush2.msra.mxu0 %v2560
    %2824 = vmatprep.subr.mxu0 %v2558
    %2825 = vmatpush2.msra.mxu0 %v2557
    %2826 = vmatprep.subr.mxu0 %v2555
    %2827 = vmatpush2.msra.mxu0 %v2554
    %2828 = vmatprep.subr.mxu0 %v2552
    %2829 = vmatpush2.msra.mxu0 %v2551
    %2830 = vmatprep.subr.mxu0 %v2549
    %2831 = vmatpush2.msra.mxu0 %v2548
    %2832 = vmatprep.subr.mxu0 %v2546
    %2833 = vmatpush2.msra.mxu0 %v2545
    %2834 = vmatprep.subr.mxu0 %v2543
    %2835 = vmatpush2.msra.mxu0 %v2542
    %2836 = vmatprep.subr.mxu0 %v2540
    %2837 = vmatpush2.msra.mxu0 %v2539
    %2838 = vmatprep.subr.mxu0 %v2537
    %2839 = vmatpush2.msra.mxu0 %v2536
    %2840 = vmatprep.subr.mxu0 %v2534
    %2841 = vmatpush2.msra.mxu0 %v2533
    %2842 = vmatprep.subr.mxu0 %v2531
    %2843 = vmatpush2.msra.mxu0 %v2530
    %2844 = vmatprep.subr.mxu0 %v2528
    %2845 = vmatpush2.msra.mxu0 %v2527
    %2846 = vmatprep.mubr.f32.mxu0 %v2285
    %2847 = vmatmul.mubr.f32.gmra.mxu0 %v2284
    %v2848 = vpop.f32.mrf.mxu0
    %v2849 = vadd.f32 %v2778, %v2848
    %v2850 = vpop.f32.mrf.mxu0
    %v2851 = vadd.f32 %v2780, %v2850
    %2852 = vdwg.mxu0
    %2853 = vmatprep.subr.mxu0 %v2621
    %2854 = vmatpush1.msra.mxu0 %v2620
    %2855 = vmatprep.subr.mxu0 %v2618
    %2856 = vmatpush1.msra.mxu0 %v2617
    %2857 = vmatprep.subr.mxu0 %v2615
    %2858 = vmatpush1.msra.mxu0 %v2614
    %2859 = vmatprep.subr.mxu0 %v2612
    %2860 = vmatpush1.msra.mxu0 %v2611
    %2861 = vmatprep.subr.mxu0 %v2609
    %2862 = vmatpush1.msra.mxu0 %v2608
    %2863 = vmatprep.subr.mxu0 %v2606
    %2864 = vmatpush1.msra.mxu0 %v2605
    %2865 = vmatprep.subr.mxu0 %v2603
    %2866 = vmatpush1.msra.mxu0 %v2602
    %2867 = vmatprep.subr.mxu0 %v2600
    %2868 = vmatpush1.msra.mxu0 %v2599
    %2869 = vmatprep.subr.mxu0 %v2597
    %2870 = vmatpush1.msra.mxu0 %v2596
    %2871 = vmatprep.subr.mxu0 %v2594
    %2872 = vmatpush1.msra.mxu0 %v2593
    %2873 = vmatprep.subr.mxu0 %v2591
    %2874 = vmatpush1.msra.mxu0 %v2590
    %2875 = vmatprep.subr.mxu0 %v2588
    %2876 = vmatpush1.msra.mxu0 %v2587
    %2877 = vmatprep.subr.mxu0 %v2585
    %2878 = vmatpush1.msra.mxu0 %v2584
    %2879 = vmatprep.subr.mxu0 %v2582
    %2880 = vmatpush1.msra.mxu0 %v2581
    %2881 = vmatprep.subr.mxu0 %v2579
    %2882 = vmatpush1.msra.mxu0 %v2578
    %2883 = vmatprep.subr.mxu0 %v2576
    %2884 = vmatpush1.msra.mxu0 %v2575
    %2885 = vmatprep.subr.mxu0 0.0
    %2886 = vmatpush2.msra.mxu0 0.0
    %2887 = vmatprep.subr.mxu0 0.0
    %2888 = vmatpush2.msra.mxu0 0.0
    %2889 = vmatprep.subr.mxu0 0.0
    %2890 = vmatpush2.msra.mxu0 0.0
    %2891 = vmatprep.subr.mxu0 0.0
    %2892 = vmatpush2.msra.mxu0 0.0
    %2893 = vmatprep.subr.mxu0 0.0
    %2894 = vmatpush2.msra.mxu0 0.0
    %2895 = vmatprep.subr.mxu0 0.0
    %2896 = vmatpush2.msra.mxu0 0.0
    %2897 = vmatprep.subr.mxu0 0.0
    %2898 = vmatpush2.msra.mxu0 0.0
    %2899 = vmatprep.subr.mxu0 0.0
    %2900 = vmatpush2.msra.mxu0 0.0
    %2901 = vmatprep.subr.mxu0 0.0
    %2902 = vmatpush2.msra.mxu0 0.0
    %2903 = vmatprep.subr.mxu0 0.0
    %2904 = vmatpush2.msra.mxu0 0.0
    %2905 = vmatprep.subr.mxu0 0.0
    %2906 = vmatpush2.msra.mxu0 0.0
    %2907 = vmatprep.subr.mxu0 0.0
    %2908 = vmatpush2.msra.mxu0 0.0
    %2909 = vmatprep.subr.mxu0 0.0
    %2910 = vmatpush2.msra.mxu0 0.0
    %2911 = vmatprep.subr.mxu0 0.0
    %2912 = vmatpush2.msra.mxu0 0.0
    %2913 = vmatprep.subr.mxu0 0.0
    %2914 = vmatpush2.msra.mxu0 0.0
    %2915 = vmatprep.subr.mxu0 0.0
    %2916 = vmatpush2.msra.mxu0 0.0
    %2917 = vmatprep.mubr.f32.mxu0 0.0
    %2918 = vmatmul.mubr.f32.gmra.mxu0 %v2286
    %v2919 = vpop.f32.mrf.mxu0
    %v2920 = vadd.f32 %v2849, %v2919
    %v2921 = vpop.f32.mrf.mxu0
    %v2922 = vadd.f32 %v2851, %v2921
    %2923 = vdwg.mxu0
    %2924 = vmatprep.subr.mxu0 0.0
    %2925 = vmatpush1.msra.mxu0 %v2334
    %2926 = vmatprep.subr.mxu0 0.0
    %2927 = vmatpush1.msra.mxu0 %v2331
    %2928 = vmatprep.subr.mxu0 0.0
    %2929 = vmatpush1.msra.mxu0 %v2328
    %2930 = vmatprep.subr.mxu0 0.0
    %2931 = vmatpush1.msra.mxu0 %v2325
    %2932 = vmatprep.subr.mxu0 0.0
    %2933 = vmatpush1.msra.mxu0 %v2322
    %2934 = vmatprep.subr.mxu0 0.0
    %2935 = vmatpush1.msra.mxu0 %v2319
    %2936 = vmatprep.subr.mxu0 0.0
    %2937 = vmatpush1.msra.mxu0 %v2316
    %2938 = vmatprep.subr.mxu0 0.0
    %2939 = vmatpush1.msra.mxu0 %v2313
    %2940 = vmatprep.subr.mxu0 0.0
    %2941 = vmatpush1.msra.mxu0 %v2310
    %2942 = vmatprep.subr.mxu0 0.0
    %2943 = vmatpush1.msra.mxu0 %v2307
    %2944 = vmatprep.subr.mxu0 0.0
    %2945 = vmatpush1.msra.mxu0 %v2304
    %2946 = vmatprep.subr.mxu0 0.0
    %2947 = vmatpush1.msra.mxu0 %v2301
    %2948 = vmatprep.subr.mxu0 0.0
    %2949 = vmatpush1.msra.mxu0 %v2298
    %2950 = vmatprep.subr.mxu0 0.0
    %2951 = vmatpush1.msra.mxu0 %v2295
    %2952 = vmatprep.subr.mxu0 0.0
    %2953 = vmatpush1.msra.mxu0 %v2292
    %2954 = vmatprep.subr.mxu0 0.0
    %2955 = vmatpush1.msra.mxu0 %v2289
    %2956 = vmatprep.subr.mxu0 0.0
    %2957 = vmatpush2.msra.mxu0 %v2382
    %2958 = vmatprep.subr.mxu0 0.0
    %2959 = vmatpush2.msra.mxu0 %v2379
    %2960 = vmatprep.subr.mxu0 0.0
    %2961 = vmatpush2.msra.mxu0 %v2376
    %2962 = vmatprep.subr.mxu0 0.0
    %2963 = vmatpush2.msra.mxu0 %v2373
    %2964 = vmatprep.subr.mxu0 0.0
    %2965 = vmatpush2.msra.mxu0 %v2370
    %2966 = vmatprep.subr.mxu0 0.0
    %2967 = vmatpush2.msra.mxu0 %v2367
    %2968 = vmatprep.subr.mxu0 0.0
    %2969 = vmatpush2.msra.mxu0 %v2364
    %2970 = vmatprep.subr.mxu0 0.0
    %2971 = vmatpush2.msra.mxu0 %v2361
    %2972 = vmatprep.subr.mxu0 0.0
    %2973 = vmatpush2.msra.mxu0 %v2358
    %2974 = vmatprep.subr.mxu0 0.0
    %2975 = vmatpush2.msra.mxu0 %v2355
    %2976 = vmatprep.subr.mxu0 0.0
    %2977 = vmatpush2.msra.mxu0 %v2352
    %2978 = vmatprep.subr.mxu0 0.0
    %2979 = vmatpush2.msra.mxu0 %v2349
    %2980 = vmatprep.subr.mxu0 0.0
    %2981 = vmatpush2.msra.mxu0 %v2346
    %2982 = vmatprep.subr.mxu0 0.0
    %2983 = vmatpush2.msra.mxu0 %v2343
    %2984 = vmatprep.subr.mxu0 0.0
    %2985 = vmatpush2.msra.mxu0 %v2340
    %2986 = vmatprep.subr.mxu0 0.0
    %2987 = vmatpush2.msra.mxu0 %v2337
    %2988 = vmatprep.mubr.f32.mxu0 %v2281
    %2989 = vmatmul.mubr.f32.gmra.mxu0 %v2280
    %v2990 = vpop.f32.mrf.mxu0
    %v2991 = vadd.f32 %v2636, %v2990
    %v2992 = vpop.f32.mrf.mxu0
    %2993 = vdwg.mxu0
    %2994 = vmatprep.subr.mxu0 0.0
    %2995 = vmatpush1.msra.mxu0 %v2430
    %2996 = vmatprep.subr.mxu0 0.0
    %2997 = vmatpush1.msra.mxu0 %v2427
    %2998 = vmatprep.subr.mxu0 0.0
    %2999 = vmatpush1.msra.mxu0 %v2424
    %3000 = vmatprep.subr.mxu0 0.0
    %3001 = vmatpush1.msra.mxu0 %v2421
    %3002 = vmatprep.subr.mxu0 0.0
    %3003 = vmatpush1.msra.mxu0 %v2418
    %3004 = vmatprep.subr.mxu0 0.0
    %3005 = vmatpush1.msra.mxu0 %v2415
    %3006 = vmatprep.subr.mxu0 0.0
    %3007 = vmatpush1.msra.mxu0 %v2412
    %3008 = vmatprep.subr.mxu0 0.0
    %3009 = vmatpush1.msra.mxu0 %v2409
    %3010 = vmatprep.subr.mxu0 0.0
    %3011 = vmatpush1.msra.mxu0 %v2406
    %3012 = vmatprep.subr.mxu0 0.0
    %3013 = vmatpush1.msra.mxu0 %v2403
    %3014 = vmatprep.subr.mxu0 0.0
    %3015 = vmatpush1.msra.mxu0 %v2400
    %3016 = vmatprep.subr.mxu0 0.0
    %3017 = vmatpush1.msra.mxu0 %v2397
    %3018 = vmatprep.subr.mxu0 0.0
    %3019 = vmatpush1.msra.mxu0 %v2394
    %3020 = vmatprep.subr.mxu0 0.0
    %3021 = vmatpush1.msra.mxu0 %v2391
    %3022 = vmatprep.subr.mxu0 0.0
    %3023 = vmatpush1.msra.mxu0 %v2388
    %3024 = vmatprep.subr.mxu0 0.0
    %3025 = vmatpush1.msra.mxu0 %v2385
    %3026 = vmatprep.subr.mxu0 0.0
    %3027 = vmatpush2.msra.mxu0 %v2478
    %3028 = vmatprep.subr.mxu0 0.0
    %3029 = vmatpush2.msra.mxu0 %v2475
    %3030 = vmatprep.subr.mxu0 0.0
    %3031 = vmatpush2.msra.mxu0 %v2472
    %3032 = vmatprep.subr.mxu0 0.0
    %3033 = vmatpush2.msra.mxu0 %v2469
    %3034 = vmatprep.subr.mxu0 0.0
    %3035 = vmatpush2.msra.mxu0 %v2466
    %3036 = vmatprep.subr.mxu0 0.0
    %3037 = vmatpush2.msra.mxu0 %v2463
    %3038 = vmatprep.subr.mxu0 0.0
    %3039 = vmatpush2.msra.mxu0 %v2460
    %3040 = vmatprep.subr.mxu0 0.0
    %3041 = vmatpush2.msra.mxu0 %v2457
    %3042 = vmatprep.subr.mxu0 0.0
    %3043 = vmatpush2.msra.mxu0 %v2454
    %3044 = vmatprep.subr.mxu0 0.0
    %3045 = vmatpush2.msra.mxu0 %v2451
    %3046 = vmatprep.subr.mxu0 0.0
    %3047 = vmatpush2.msra.mxu0 %v2448
    %3048 = vmatprep.subr.mxu0 0.0
    %3049 = vmatpush2.msra.mxu0 %v2445
    %3050 = vmatprep.subr.mxu0 0.0
    %3051 = vmatpush2.msra.mxu0 %v2442
    %3052 = vmatprep.subr.mxu0 0.0
    %3053 = vmatpush2.msra.mxu0 %v2439
    %3054 = vmatprep.subr.mxu0 0.0
    %3055 = vmatpush2.msra.mxu0 %v2436
    %3056 = vmatprep.subr.mxu0 0.0
    %3057 = vmatpush2.msra.mxu0 %v2433
    %3058 = vmatprep.mubr.f32.mxu0 %v2283
    %3059 = vmatmul.mubr.f32.gmra.mxu0 %v2282
    %v3060 = vpop.f32.mrf.mxu0
    %v3061 = vadd.f32 %v2991, %v3060
    %v3062 = vpop.f32.mrf.mxu0
    %3063 = vdwg.mxu0
    %3064 = vmatprep.subr.mxu0 0.0
    %3065 = vmatpush1.msra.mxu0 %v2526
    %3066 = vmatprep.subr.mxu0 0.0
    %3067 = vmatpush1.msra.mxu0 %v2523
    %3068 = vmatprep.subr.mxu0 0.0
    %3069 = vmatpush1.msra.mxu0 %v2520
    %3070 = vmatprep.subr.mxu0 0.0
    %3071 = vmatpush1.msra.mxu0 %v2517
    %3072 = vmatprep.subr.mxu0 0.0
    %3073 = vmatpush1.msra.mxu0 %v2514
    %3074 = vmatprep.subr.mxu0 0.0
    %3075 = vmatpush1.msra.mxu0 %v2511
    %3076 = vmatprep.subr.mxu0 0.0
    %3077 = vmatpush1.msra.mxu0 %v2508
    %3078 = vmatprep.subr.mxu0 0.0
    %3079 = vmatpush1.msra.mxu0 %v2505
    %3080 = vmatprep.subr.mxu0 0.0
    %3081 = vmatpush1.msra.mxu0 %v2502
    %3082 = vmatprep.subr.mxu0 0.0
    %3083 = vmatpush1.msra.mxu0 %v2499
    %3084 = vmatprep.subr.mxu0 0.0
    %3085 = vmatpush1.msra.mxu0 %v2496
    %3086 = vmatprep.subr.mxu0 0.0
    %3087 = vmatpush1.msra.mxu0 %v2493
    %3088 = vmatprep.subr.mxu0 0.0
    %3089 = vmatpush1.msra.mxu0 %v2490
    %3090 = vmatprep.subr.mxu0 0.0
    %3091 = vmatpush1.msra.mxu0 %v2487
    %3092 = vmatprep.subr.mxu0 0.0
    %3093 = vmatpush1.msra.mxu0 %v2484
    %3094 = vmatprep.subr.mxu0 0.0
    %3095 = vmatpush1.msra.mxu0 %v2481
    %3096 = vmatprep.subr.mxu0 0.0
    %3097 = vmatpush2.msra.mxu0 %v2574
    %3098 = vmatprep.subr.mxu0 0.0
    %3099 = vmatpush2.msra.mxu0 %v2571
    %3100 = vmatprep.subr.mxu0 0.0
    %3101 = vmatpush2.msra.mxu0 %v2568
    %3102 = vmatprep.subr.mxu0 0.0
    %3103 = vmatpush2.msra.mxu0 %v2565
    %3104 = vmatprep.subr.mxu0 0.0
    %3105 = vmatpush2.msra.mxu0 %v2562
    %3106 = vmatprep.subr.mxu0 0.0
    %3107 = vmatpush2.msra.mxu0 %v2559
    %3108 = vmatprep.subr.mxu0 0.0
    %3109 = vmatpush2.msra.mxu0 %v2556
    %3110 = vmatprep.subr.mxu0 0.0
    %3111 = vmatpush2.msra.mxu0 %v2553
    %3112 = vmatprep.subr.mxu0 0.0
    %3113 = vmatpush2.msra.mxu0 %v2550
    %3114 = vmatprep.subr.mxu0 0.0
    %3115 = vmatpush2.msra.mxu0 %v2547
    %3116 = vmatprep.subr.mxu0 0.0
    %3117 = vmatpush2.msra.mxu0 %v2544
    %3118 = vmatprep.subr.mxu0 0.0
    %3119 = vmatpush2.msra.mxu0 %v2541
    %3120 = vmatprep.subr.mxu0 0.0
    %3121 = vmatpush2.msra.mxu0 %v2538
    %3122 = vmatprep.subr.mxu0 0.0
    %3123 = vmatpush2.msra.mxu0 %v2535
    %3124 = vmatprep.subr.mxu0 0.0
    %3125 = vmatpush2.msra.mxu0 %v2532
    %3126 = vmatprep.subr.mxu0 0.0
    %3127 = vmatpush2.msra.mxu0 %v2529
    %3128 = vmatprep.mubr.f32.mxu0 %v2285
    %3129 = vmatmul.mubr.f32.gmra.mxu0 %v2284
    %v3130 = vpop.f32.mrf.mxu0
    %v3131 = vadd.f32 %v3061, %v3130
    %v3132 = vpop.f32.mrf.mxu0
    %3133 = vdwg.mxu0
    %3134 = vmatprep.subr.mxu0 0.0
    %3135 = vmatpush1.msra.mxu0 %v2622
    %3136 = vmatprep.subr.mxu0 0.0
    %3137 = vmatpush1.msra.mxu0 %v2619
    %3138 = vmatprep.subr.mxu0 0.0
    %3139 = vmatpush1.msra.mxu0 %v2616
    %3140 = vmatprep.subr.mxu0 0.0
    %3141 = vmatpush1.msra.mxu0 %v2613
    %3142 = vmatprep.subr.mxu0 0.0
    %3143 = vmatpush1.msra.mxu0 %v2610
    %3144 = vmatprep.subr.mxu0 0.0
    %3145 = vmatpush1.msra.mxu0 %v2607
    %3146 = vmatprep.subr.mxu0 0.0
    %3147 = vmatpush1.msra.mxu0 %v2604
    %3148 = vmatprep.subr.mxu0 0.0
    %3149 = vmatpush1.msra.mxu0 %v2601
    %3150 = vmatprep.subr.mxu0 0.0
    %3151 = vmatpush1.msra.mxu0 %v2598
    %3152 = vmatprep.subr.mxu0 0.0
    %3153 = vmatpush1.msra.mxu0 %v2595
    %3154 = vmatprep.subr.mxu0 0.0
    %3155 = vmatpush1.msra.mxu0 %v2592
    %3156 = vmatprep.subr.mxu0 0.0
    %3157 = vmatpush1.msra.mxu0 %v2589
    %3158 = vmatprep.subr.mxu0 0.0
    %3159 = vmatpush1.msra.mxu0 %v2586
    %3160 = vmatprep.subr.mxu0 0.0
    %3161 = vmatpush1.msra.mxu0 %v2583
    %3162 = vmatprep.subr.mxu0 0.0
    %3163 = vmatpush1.msra.mxu0 %v2580
    %3164 = vmatprep.subr.mxu0 0.0
    %3165 = vmatpush1.msra.mxu0 %v2577
    %3166 = vmatprep.subr.mxu0 0.0
    %3167 = vmatpush2.msra.mxu0 0.0
    %3168 = vmatprep.subr.mxu0 0.0
    %3169 = vmatpush2.msra.mxu0 0.0
    %3170 = vmatprep.subr.mxu0 0.0
    %3171 = vmatpush2.msra.mxu0 0.0
    %3172 = vmatprep.subr.mxu0 0.0
    %3173 = vmatpush2.msra.mxu0 0.0
    %3174 = vmatprep.subr.mxu0 0.0
    %3175 = vmatpush2.msra.mxu0 0.0
    %3176 = vmatprep.subr.mxu0 0.0
    %3177 = vmatpush2.msra.mxu0 0.0
    %3178 = vmatprep.subr.mxu0 0.0
    %3179 = vmatpush2.msra.mxu0 0.0
    %3180 = vmatprep.subr.mxu0 0.0
    %3181 = vmatpush2.msra.mxu0 0.0
    %3182 = vmatprep.subr.mxu0 0.0
    %3183 = vmatpush2.msra.mxu0 0.0
    %3184 = vmatprep.subr.mxu0 0.0
    %3185 = vmatpush2.msra.mxu0 0.0
    %3186 = vmatprep.subr.mxu0 0.0
    %3187 = vmatpush2.msra.mxu0 0.0
    %3188 = vmatprep.subr.mxu0 0.0
    %3189 = vmatpush2.msra.mxu0 0.0
    %3190 = vmatprep.subr.mxu0 0.0
    %3191 = vmatpush2.msra.mxu0 0.0
    %3192 = vmatprep.subr.mxu0 0.0
    %3193 = vmatpush2.msra.mxu0 0.0
    %3194 = vmatprep.subr.mxu0 0.0
    %3195 = vmatpush2.msra.mxu0 0.0
    %3196 = vmatprep.subr.mxu0 0.0
    %3197 = vmatpush2.msra.mxu0 0.0
    %3198 = vmatprep.mubr.f32.mxu0 0.0
    %3199 = vmatmul.mubr.f32.gmra.mxu0 %v2286
    %v3200 = vpop.f32.mrf.mxu0
    %v3201 = vadd.f32 %v3131, %v3200
    %v3202 = vpop.f32.mrf.mxu0
    %3203 = vdwg.mxu0
    %v3204 = vmax.f32 %v2920, 0.0
    %v3205 = vmax.f32 %v2922, 0.0
    %v3206 = vmax.f32 %v3201, 0.0
    %v3207 = vld [vmem:[#allocation13] sm:$0xff]
    %v3208 = vld [vmem:[#allocation13 + $0x8] sm:$0xff]
    %v3209 = vld [vmem:[#allocation13 + $0x10] sm:$0xff]
    %v3210 = vld [vmem:[#allocation13 + $0x18] sm:$0xff]
    %v3211 = vld [vmem:[#allocation13 + $0x20] sm:$0xff]
    %v3212 = vld [vmem:[#allocation13 + $0x28] sm:$0xff]
    %v3213 = vld [vmem:[#allocation13 + $0x30] sm:$0xff]
    %v3214 = vld [vmem:[#allocation13 + $0x38] sm:$0xff]
    %v3215 = vld [vmem:[#allocation13 + $0x40] sm:$0xff]
    %v3216 = vld [vmem:[#allocation13 + $0x48] sm:$0xff]
    %v3217 = vld [vmem:[#allocation13 + $0x50] sm:$0xff]
    %v3218 = vld [vmem:[#allocation13 + $0x58] sm:$0xff]
    %v3219 = vld [vmem:[#allocation13 + $0x60] sm:$0xff]
    %v3220 = vld [vmem:[#allocation13 + $0x68] sm:$0xff]
    %v3221 = vld [vmem:[#allocation13 + $0x70] sm:$0xff]
    %v3222 = vld [vmem:[#allocation13 + $0x78] sm:$0xff]
    %v3223 = vld [vmem:[#allocation13 + $0x80] sm:$0xff]
    %v3224 = vld [vmem:[#allocation13 + $0x88] sm:$0xff]
    %v3225 = vld [vmem:[#allocation13 + $0x90] sm:$0xff]
    %v3226 = vld [vmem:[#allocation13 + $0x98] sm:$0xff]
    %v3227 = vld [vmem:[#allocation13 + $0xa0] sm:$0xff]
    %v3228 = vld [vmem:[#allocation13 + $0xa8] sm:$0xff]
    %v3229 = vld [vmem:[#allocation13 + $0xb0] sm:$0xff]
    %v3230 = vld [vmem:[#allocation13 + $0xb8] sm:$0xff]
    %v3231 = vld [vmem:[#allocation13 + $0xc0] sm:$0xff]
    %v3232 = vld [vmem:[#allocation13 + $0xc8] sm:$0xff]
    %v3233 = vld [vmem:[#allocation13 + $0xd0] sm:$0xff]
    %v3234 = vld [vmem:[#allocation13 + $0xd8] sm:$0xff]
    %v3235 = vld [vmem:[#allocation13 + $0xe0] sm:$0xff]
    %v3236 = vld [vmem:[#allocation13 + $0xe8] sm:$0xff]
    %v3237 = vld [vmem:[#allocation13 + $0xf0] sm:$0xff]
    %v3238 = vld [vmem:[#allocation13 + $0xf8] sm:$0xff]
    %v3239 = vld [vmem:[#allocation13 + $0x100] sm:$0xff]
    %v3240 = vld [vmem:[#allocation13 + $0x108] sm:$0xff]
    %v3241 = vld [vmem:[#allocation13 + $0x110] sm:$0xff]
    %v3242 = vld [vmem:[#allocation13 + $0x118] sm:$0xff]
    %v3243 = vld [vmem:[#allocation13 + $0x120] sm:$0xff]
    %v3244 = vld [vmem:[#allocation13 + $0x128] sm:$0xff]
    %v3245 = vld [vmem:[#allocation13 + $0x130] sm:$0xff]
    %v3246 = vld [vmem:[#allocation13 + $0x138] sm:$0xff]
    %v3247 = vld [vmem:[#allocation13 + $0x140] sm:$0xff]
    %v3248 = vld [vmem:[#allocation13 + $0x148] sm:$0xff]
    %v3249 = vld [vmem:[#allocation13 + $0x150] sm:$0xff]
    %v3250 = vld [vmem:[#allocation13 + $0x158] sm:$0xff]
    %v3251 = vld [vmem:[#allocation13 + $0x160] sm:$0xff]
    %v3252 = vld [vmem:[#allocation13 + $0x168] sm:$0xff]
    %v3253 = vld [vmem:[#allocation13 + $0x170] sm:$0xff]
    %v3254 = vld [vmem:[#allocation13 + $0x178] sm:$0xff]
    %v3255 = vld [vmem:[#allocation14] sm:$0x1]
    %v3257 = vlaneseq
    %v3258 = vshrl.u32 %v3257, 7
    %v3259 = vsub.s32 0, %v3258
    %v3260 = vrot.slane %v3255, %v3259
    %3262 = vmatprep.subr.mxu0 0.0
    %3263 = vmatpush1.msra.mxu0 %v3222
    %3264 = vmatprep.subr.mxu0 0.0
    %3265 = vmatpush1.msra.mxu0 %v3221
    %3266 = vmatprep.subr.mxu0 0.0
    %3267 = vmatpush1.msra.mxu0 %v3220
    %3268 = vmatprep.subr.mxu0 0.0
    %3269 = vmatpush1.msra.mxu0 %v3219
    %3270 = vmatprep.subr.mxu0 0.0
    %3271 = vmatpush1.msra.mxu0 %v3218
    %3272 = vmatprep.subr.mxu0 0.0
    %3273 = vmatpush1.msra.mxu0 %v3217
    %3274 = vmatprep.subr.mxu0 0.0
    %3275 = vmatpush1.msra.mxu0 %v3216
    %3276 = vmatprep.subr.mxu0 0.0
    %3277 = vmatpush1.msra.mxu0 %v3215
    %3278 = vmatprep.subr.mxu0 0.0
    %3279 = vmatpush1.msra.mxu0 %v3214
    %3280 = vmatprep.subr.mxu0 0.0
    %3281 = vmatpush1.msra.mxu0 %v3213
    %3282 = vmatprep.subr.mxu0 0.0
    %3283 = vmatpush1.msra.mxu0 %v3212
    %3284 = vmatprep.subr.mxu0 0.0
    %3285 = vmatpush1.msra.mxu0 %v3211
    %3286 = vmatprep.subr.mxu0 0.0
    %3287 = vmatpush1.msra.mxu0 %v3210
    %3288 = vmatprep.subr.mxu0 0.0
    %3289 = vmatpush1.msra.mxu0 %v3209
    %3290 = vmatprep.subr.mxu0 0.0
    %3291 = vmatpush1.msra.mxu0 %v3208
    %3292 = vmatprep.subr.mxu0 0.0
    %3293 = vmatpush1.msra.mxu0 %v3207
    %3294 = vmatprep.subr.mxu0 0.0
    %3295 = vmatpush2.msra.mxu0 %v3238
    %3296 = vmatprep.subr.mxu0 0.0
    %3297 = vmatpush2.msra.mxu0 %v3237
    %3298 = vmatprep.subr.mxu0 0.0
    %3299 = vmatpush2.msra.mxu0 %v3236
    %3300 = vmatprep.subr.mxu0 0.0
    %3301 = vmatpush2.msra.mxu0 %v3235
    %3302 = vmatprep.subr.mxu0 0.0
    %3303 = vmatpush2.msra.mxu0 %v3234
    %3304 = vmatprep.subr.mxu0 0.0
    %3305 = vmatpush2.msra.mxu0 %v3233
    %3306 = vmatprep.subr.mxu0 0.0
    %3307 = vmatpush2.msra.mxu0 %v3232
    %3308 = vmatprep.subr.mxu0 0.0
    %3309 = vmatpush2.msra.mxu0 %v3231
    %3310 = vmatprep.subr.mxu0 0.0
    %3311 = vmatpush2.msra.mxu0 %v3230
    %3312 = vmatprep.subr.mxu0 0.0
    %3313 = vmatpush2.msra.mxu0 %v3229
    %3314 = vmatprep.subr.mxu0 0.0
    %3315 = vmatpush2.msra.mxu0 %v3228
    %3316 = vmatprep.subr.mxu0 0.0
    %3317 = vmatpush2.msra.mxu0 %v3227
    %3318 = vmatprep.subr.mxu0 0.0
    %3319 = vmatpush2.msra.mxu0 %v3226
    %3320 = vmatprep.subr.mxu0 0.0
    %3321 = vmatpush2.msra.mxu0 %v3225
    %3322 = vmatprep.subr.mxu0 0.0
    %3323 = vmatpush2.msra.mxu0 %v3224
    %3324 = vmatprep.subr.mxu0 0.0
    %3325 = vmatpush2.msra.mxu0 %v3223
    %3326 = vmatprep.mubr.f32.mxu0 %v3205
    %3327 = vmatmul.mubr.f32.gmra.mxu0 %v3204
    %v3328 = vpop.f32.mrf.mxu0
    %v3329 = vadd.f32 %v3260, %v3328
    %v3330 = vpop.f32.mrf.mxu0
    %3331 = vdwg.mxu0
    %3332 = vmatprep.subr.mxu0 0.0
    %3333 = vmatpush1.msra.mxu0 %v3254
    %3334 = vmatprep.subr.mxu0 0.0
    %3335 = vmatpush1.msra.mxu0 %v3253
    %3336 = vmatprep.subr.mxu0 0.0
    %3337 = vmatpush1.msra.mxu0 %v3252
    %3338 = vmatprep.subr.mxu0 0.0
    %3339 = vmatpush1.msra.mxu0 %v3251
    %3340 = vmatprep.subr.mxu0 0.0
    %3341 = vmatpush1.msra.mxu0 %v3250
    %3342 = vmatprep.subr.mxu0 0.0
    %3343 = vmatpush1.msra.mxu0 %v3249
    %3344 = vmatprep.subr.mxu0 0.0
    %3345 = vmatpush1.msra.mxu0 %v3248
    %3346 = vmatprep.subr.mxu0 0.0
    %3347 = vmatpush1.msra.mxu0 %v3247
    %3348 = vmatprep.subr.mxu0 0.0
    %3349 = vmatpush1.msra.mxu0 %v3246
    %3350 = vmatprep.subr.mxu0 0.0
    %3351 = vmatpush1.msra.mxu0 %v3245
    %3352 = vmatprep.subr.mxu0 0.0
    %3353 = vmatpush1.msra.mxu0 %v3244
    %3354 = vmatprep.subr.mxu0 0.0
    %3355 = vmatpush1.msra.mxu0 %v3243
    %3356 = vmatprep.subr.mxu0 0.0
    %3357 = vmatpush1.msra.mxu0 %v3242
    %3358 = vmatprep.subr.mxu0 0.0
    %3359 = vmatpush1.msra.mxu0 %v3241
    %3360 = vmatprep.subr.mxu0 0.0
    %3361 = vmatpush1.msra.mxu0 %v3240
    %3362 = vmatprep.subr.mxu0 0.0
    %3363 = vmatpush1.msra.mxu0 %v3239
    %3364 = vmatprep.subr.mxu0 0.0
    %3365 = vmatpush2.msra.mxu0 0.0
    %3366 = vmatprep.subr.mxu0 0.0
    %3367 = vmatpush2.msra.mxu0 0.0
    %3368 = vmatprep.subr.mxu0 0.0
    %3369 = vmatpush2.msra.mxu0 0.0
    %3370 = vmatprep.subr.mxu0 0.0
    %3371 = vmatpush2.msra.mxu0 0.0
    %3372 = vmatprep.subr.mxu0 0.0
    %3373 = vmatpush2.msra.mxu0 0.0
    %3374 = vmatprep.subr.mxu0 0.0
    %3375 = vmatpush2.msra.mxu0 0.0
    %3376 = vmatprep.subr.mxu0 0.0
    %3377 = vmatpush2.msra.mxu0 0.0
    %3378 = vmatprep.subr.mxu0 0.0
    %3379 = vmatpush2.msra.mxu0 0.0
    %3380 = vmatprep.subr.mxu0 0.0
    %3381 = vmatpush2.msra.mxu0 0.0
    %3382 = vmatprep.subr.mxu0 0.0
    %3383 = vmatpush2.msra.mxu0 0.0
    %3384 = vmatprep.subr.mxu0 0.0
    %3385 = vmatpush2.msra.mxu0 0.0
    %3386 = vmatprep.subr.mxu0 0.0
    %3387 = vmatpush2.msra.mxu0 0.0
    %3388 = vmatprep.subr.mxu0 0.0
    %3389 = vmatpush2.msra.mxu0 0.0
    %3390 = vmatprep.subr.mxu0 0.0
    %3391 = vmatpush2.msra.mxu0 0.0
    %3392 = vmatprep.subr.mxu0 0.0
    %3393 = vmatpush2.msra.mxu0 0.0
    %3394 = vmatprep.subr.mxu0 0.0
    %3395 = vmatpush2.msra.mxu0 0.0
    %3396 = vmatprep.mubr.f32.mxu0 0.0
    %3397 = vmatmul.mubr.f32.gmra.mxu0 %v3206
    %v3398 = vpop.f32.mrf.mxu0
    %v3399 = vadd.f32 %v3329, %v3398
    %v3400 = vpop.f32.mrf.mxu0
    %3401 = vdwg.mxu0
    %v3402 = vld [vmem:[#allocation16] sm:$0xff]
    %v3403 = vld [vmem:[#allocation16 + $0x8] sm:$0xff]
    %v3404 = vld [vmem:[#allocation16 + $0x10] sm:$0xff]
    %v3405 = vld [vmem:[#allocation16 + $0x18] sm:$0xff]
    %v3406 = vld [vmem:[#allocation16 + $0x20] sm:$0xff]
    %v3407 = vld [vmem:[#allocation16 + $0x28] sm:$0xff]
    %v3408 = vld [vmem:[#allocation16 + $0x30] sm:$0xff]
    %v3409 = vld [vmem:[#allocation16 + $0x38] sm:$0xff]
    %v3410 = vld [vmem:[#allocation16 + $0x40] sm:$0xff]
    %v3411 = vld [vmem:[#allocation16 + $0x48] sm:$0xff]
    %v3412 = vld [vmem:[#allocation16 + $0x50] sm:$0xff]
    %v3413 = vld [vmem:[#allocation16 + $0x58] sm:$0xff]
    %v3414 = vld [vmem:[#allocation16 + $0x60] sm:$0xff]
    %v3415 = vld [vmem:[#allocation16 + $0x68] sm:$0xff]
    %v3416 = vld [vmem:[#allocation16 + $0x70] sm:$0xff]
    %v3417 = vld [vmem:[#allocation16 + $0x78] sm:$0xff]
    %v3418 = vld [vmem:[#allocation16 + $0x80] sm:$0xff]
    %v3419 = vld [vmem:[#allocation16 + $0x88] sm:$0xff]
    %v3420 = vld [vmem:[#allocation16 + $0x90] sm:$0xff]
    %v3421 = vld [vmem:[#allocation16 + $0x98] sm:$0xff]
    %v3422 = vld [vmem:[#allocation16 + $0xa0] sm:$0xff]
    %v3423 = vld [vmem:[#allocation16 + $0xa8] sm:$0xff]
    %v3424 = vld [vmem:[#allocation16 + $0xb0] sm:$0xff]
    %v3425 = vld [vmem:[#allocation16 + $0xb8] sm:$0xff]
    %v3426 = vld [vmem:[#allocation16 + $0xc0] sm:$0xff]
    %v3427 = vld [vmem:[#allocation16 + $0xc8] sm:$0xff]
    %v3428 = vld [vmem:[#allocation16 + $0xd0] sm:$0xff]
    %v3429 = vld [vmem:[#allocation16 + $0xd8] sm:$0xff]
    %v3430 = vld [vmem:[#allocation16 + $0xe0] sm:$0xff]
    %v3431 = vld [vmem:[#allocation16 + $0xe8] sm:$0xff]
    %v3432 = vld [vmem:[#allocation16 + $0xf0] sm:$0xff]
    %v3433 = vld [vmem:[#allocation16 + $0xf8] sm:$0xff]
    %v3434 = vld [vmem:[#allocation16 + $0x100] sm:$0xff]
    %v3435 = vld [vmem:[#allocation16 + $0x108] sm:$0xff]
    %v3436 = vld [vmem:[#allocation16 + $0x110] sm:$0xff]
    %v3437 = vld [vmem:[#allocation16 + $0x118] sm:$0xff]
    %v3438 = vld [vmem:[#allocation16 + $0x120] sm:$0xff]
    %v3439 = vld [vmem:[#allocation16 + $0x128] sm:$0xff]
    %v3440 = vld [vmem:[#allocation16 + $0x130] sm:$0xff]
    %v3441 = vld [vmem:[#allocation16 + $0x138] sm:$0xff]
    %v3442 = vld [vmem:[#allocation16 + $0x140] sm:$0xff]
    %v3443 = vld [vmem:[#allocation16 + $0x148] sm:$0xff]
    %v3444 = vld [vmem:[#allocation16 + $0x150] sm:$0xff]
    %v3445 = vld [vmem:[#allocation16 + $0x158] sm:$0xff]
    %v3446 = vld [vmem:[#allocation16 + $0x160] sm:$0xff]
    %v3447 = vld [vmem:[#allocation16 + $0x168] sm:$0xff]
    %v3448 = vld [vmem:[#allocation16 + $0x170] sm:$0xff]
    %v3449 = vld [vmem:[#allocation16 + $0x178] sm:$0xff]
    %v3450 = vld [vmem:[#allocation16 + $0x180] sm:$0xff]
    %v3451 = vld [vmem:[#allocation16 + $0x188] sm:$0xff]
    %v3452 = vld [vmem:[#allocation16 + $0x190] sm:$0xff]
    %v3453 = vld [vmem:[#allocation16 + $0x198] sm:$0xff]
    %v3454 = vld [vmem:[#allocation16 + $0x1a0] sm:$0xff]
    %v3455 = vld [vmem:[#allocation16 + $0x1a8] sm:$0xff]
    %v3456 = vld [vmem:[#allocation16 + $0x1b0] sm:$0xff]
    %v3457 = vld [vmem:[#allocation16 + $0x1b8] sm:$0xff]
    %v3458 = vld [vmem:[#allocation16 + $0x1c0] sm:$0xff]
    %v3459 = vld [vmem:[#allocation16 + $0x1c8] sm:$0xff]
    %v3460 = vld [vmem:[#allocation16 + $0x1d0] sm:$0xff]
    %v3461 = vld [vmem:[#allocation16 + $0x1d8] sm:$0xff]
    %v3462 = vld [vmem:[#allocation16 + $0x1e0] sm:$0xff]
    %v3463 = vld [vmem:[#allocation16 + $0x1e8] sm:$0xff]
    %v3464 = vld [vmem:[#allocation16 + $0x1f0] sm:$0xff]
    %v3465 = vld [vmem:[#allocation16 + $0x1f8] sm:$0xff]
    %v3466 = vld [vmem:[#allocation5] sm:$0xff]
    %v3467 = vld [vmem:[#allocation17] sm:$0xff]
    %v3468 = vld [vmem:[#allocation17 + $0x8] sm:$0xff]
    %v3469 = vld [vmem:[#allocation17 + $0x10] sm:$0xff]
    %v3470 = vld [vmem:[#allocation17 + $0x18] sm:$0xff]
    %v3471 = vld [vmem:[#allocation17 + $0x20] sm:$0xff]
    %v3472 = vld [vmem:[#allocation17 + $0x28] sm:$0xff]
    %v3473 = vld [vmem:[#allocation17 + $0x30] sm:$0xff]
    %v3474 = vld [vmem:[#allocation17 + $0x38] sm:$0xff]
    %v3475 = vld [vmem:[#allocation17 + $0x40] sm:$0xff]
    %v3476 = vld [vmem:[#allocation17 + $0x48] sm:$0xff]
    %v3477 = vld [vmem:[#allocation17 + $0x50] sm:$0xff]
    %v3478 = vld [vmem:[#allocation17 + $0x58] sm:$0xff]
    %v3479 = vld [vmem:[#allocation17 + $0x60] sm:$0xff]
    %v3480 = vld [vmem:[#allocation17 + $0x68] sm:$0xff]
    %v3481 = vld [vmem:[#allocation17 + $0x70] sm:$0xff]
    %v3482 = vld [vmem:[#allocation17 + $0x78] sm:$0xff]
    %v3483 = vld [vmem:[#allocation17 + $0x80] sm:$0xff]
    %v3484 = vld [vmem:[#allocation17 + $0x88] sm:$0xff]
    %v3485 = vld [vmem:[#allocation17 + $0x90] sm:$0xff]
    %v3486 = vld [vmem:[#allocation17 + $0x98] sm:$0xff]
    %v3487 = vld [vmem:[#allocation17 + $0xa0] sm:$0xff]
    %v3488 = vld [vmem:[#allocation17 + $0xa8] sm:$0xff]
    %v3489 = vld [vmem:[#allocation17 + $0xb0] sm:$0xff]
    %v3490 = vld [vmem:[#allocation17 + $0xb8] sm:$0xff]
    %v3491 = vld [vmem:[#allocation17 + $0xc0] sm:$0xff]
    %v3492 = vld [vmem:[#allocation17 + $0xc8] sm:$0xff]
    %v3493 = vld [vmem:[#allocation17 + $0xd0] sm:$0xff]
    %v3494 = vld [vmem:[#allocation17 + $0xd8] sm:$0xff]
    %v3495 = vld [vmem:[#allocation17 + $0xe0] sm:$0xff]
    %v3496 = vld [vmem:[#allocation17 + $0xe8] sm:$0xff]
    %v3497 = vld [vmem:[#allocation17 + $0xf0] sm:$0xff]
    %v3498 = vld [vmem:[#allocation17 + $0xf8] sm:$0xff]
    %v3499 = vld [vmem:[#allocation17 + $0x100] sm:$0xff]
    %v3500 = vld [vmem:[#allocation17 + $0x108] sm:$0xff]
    %v3501 = vld [vmem:[#allocation17 + $0x110] sm:$0xff]
    %v3502 = vld [vmem:[#allocation17 + $0x118] sm:$0xff]
    %v3503 = vld [vmem:[#allocation17 + $0x120] sm:$0xff]
    %v3504 = vld [vmem:[#allocation17 + $0x128] sm:$0xff]
    %v3505 = vld [vmem:[#allocation17 + $0x130] sm:$0xff]
    %v3506 = vld [vmem:[#allocation17 + $0x138] sm:$0xff]
    %v3507 = vld [vmem:[#allocation17 + $0x140] sm:$0xff]
    %v3508 = vld [vmem:[#allocation17 + $0x148] sm:$0xff]
    %v3509 = vld [vmem:[#allocation17 + $0x150] sm:$0xff]
    %v3510 = vld [vmem:[#allocation17 + $0x158] sm:$0xff]
    %v3511 = vld [vmem:[#allocation17 + $0x160] sm:$0xff]
    %v3512 = vld [vmem:[#allocation17 + $0x168] sm:$0xff]
    %v3513 = vld [vmem:[#allocation17 + $0x170] sm:$0xff]
    %v3514 = vld [vmem:[#allocation17 + $0x178] sm:$0xff]
    %v3515 = vld [vmem:[#allocation17 + $0x180] sm:$0xff]
    %v3516 = vld [vmem:[#allocation17 + $0x188] sm:$0xff]
    %v3517 = vld [vmem:[#allocation17 + $0x190] sm:$0xff]
    %v3518 = vld [vmem:[#allocation17 + $0x198] sm:$0xff]
    %v3519 = vld [vmem:[#allocation17 + $0x1a0] sm:$0xff]
    %v3520 = vld [vmem:[#allocation17 + $0x1a8] sm:$0xff]
    %v3521 = vld [vmem:[#allocation17 + $0x1b0] sm:$0xff]
    %v3522 = vld [vmem:[#allocation17 + $0x1b8] sm:$0xff]
    %v3523 = vld [vmem:[#allocation17 + $0x1c0] sm:$0xff]
    %v3524 = vld [vmem:[#allocation17 + $0x1c8] sm:$0xff]
    %v3525 = vld [vmem:[#allocation17 + $0x1d0] sm:$0xff]
    %v3526 = vld [vmem:[#allocation17 + $0x1d8] sm:$0xff]
    %v3527 = vld [vmem:[#allocation17 + $0x1e0] sm:$0xff]
    %v3528 = vld [vmem:[#allocation17 + $0x1e8] sm:$0xff]
    %v3529 = vld [vmem:[#allocation17 + $0x1f0] sm:$0xff]
    %v3530 = vld [vmem:[#allocation17 + $0x1f8] sm:$0xff]
    %3531 = vmatprep.subr.mxu0 %v3528
    %3532 = vmatpush1.msra.mxu0 %v3527
    %3533 = vmatprep.subr.mxu0 %v3524
    %3534 = vmatpush1.msra.mxu0 %v3523
    %3535 = vmatprep.subr.mxu0 %v3520
    %3536 = vmatpush1.msra.mxu0 %v3519
    %3537 = vmatprep.subr.mxu0 %v3516
    %3538 = vmatpush1.msra.mxu0 %v3515
    %3539 = vmatprep.subr.mxu0 %v3512
    %3540 = vmatpush1.msra.mxu0 %v3511
    %3541 = vmatprep.subr.mxu0 %v3508
    %3542 = vmatpush1.msra.mxu0 %v3507
    %3543 = vmatprep.subr.mxu0 %v3504
    %3544 = vmatpush1.msra.mxu0 %v3503
    %3545 = vmatprep.subr.mxu0 %v3500
    %3546 = vmatpush1.msra.mxu0 %v3499
    %3547 = vmatprep.subr.mxu0 %v3496
    %3548 = vmatpush1.msra.mxu0 %v3495
    %3549 = vmatprep.subr.mxu0 %v3492
    %3550 = vmatpush1.msra.mxu0 %v3491
    %3551 = vmatprep.subr.mxu0 %v3488
    %3552 = vmatpush1.msra.mxu0 %v3487
    %3553 = vmatprep.subr.mxu0 %v3484
    %3554 = vmatpush1.msra.mxu0 %v3483
    %3555 = vmatprep.subr.mxu0 %v3480
    %3556 = vmatpush1.msra.mxu0 %v3479
    %3557 = vmatprep.subr.mxu0 %v3476
    %3558 = vmatpush1.msra.mxu0 %v3475
    %3559 = vmatprep.subr.mxu0 %v3472
    %3560 = vmatpush1.msra.mxu0 %v3471
    %3561 = vmatprep.subr.mxu0 %v3468
    %3562 = vmatpush1.msra.mxu0 %v3467
    %3563 = vmatprep.subr.mxu0 0.0
    %3564 = vmatpush2.msra.mxu0 0.0
    %3565 = vmatprep.subr.mxu0 0.0
    %3566 = vmatpush2.msra.mxu0 0.0
    %3567 = vmatprep.subr.mxu0 0.0
    %3568 = vmatpush2.msra.mxu0 0.0
    %3569 = vmatprep.subr.mxu0 0.0
    %3570 = vmatpush2.msra.mxu0 0.0
    %3571 = vmatprep.subr.mxu0 0.0
    %3572 = vmatpush2.msra.mxu0 0.0
    %3573 = vmatprep.subr.mxu0 0.0
    %3574 = vmatpush2.msra.mxu0 0.0
    %3575 = vmatprep.subr.mxu0 0.0
    %3576 = vmatpush2.msra.mxu0 0.0
    %3577 = vmatprep.subr.mxu0 0.0
    %3578 = vmatpush2.msra.mxu0 0.0
    %3579 = vmatprep.subr.mxu0 0.0
    %3580 = vmatpush2.msra.mxu0 0.0
    %3581 = vmatprep.subr.mxu0 0.0
    %3582 = vmatpush2.msra.mxu0 0.0
    %3583 = vmatprep.subr.mxu0 0.0
    %3584 = vmatpush2.msra.mxu0 0.0
    %3585 = vmatprep.subr.mxu0 0.0
    %3586 = vmatpush2.msra.mxu0 0.0
    %3587 = vmatprep.subr.mxu0 0.0
    %3588 = vmatpush2.msra.mxu0 0.0
    %3589 = vmatprep.subr.mxu0 0.0
    %3590 = vmatpush2.msra.mxu0 0.0
    %3591 = vmatprep.subr.mxu0 0.0
    %3592 = vmatpush2.msra.mxu0 0.0
    %3593 = vmatprep.subr.mxu0 0.0
    %3594 = vmatpush2.msra.mxu0 0.0
    %3595 = vmatprep.mubr.f32.mxu0 0.0
    %3596 = vmatmul.mubr.f32.gmra.mxu0 %v3466
    %v3597 = vpop.f32.mrf.mxu0
    %v3598 = vadd.f32 0.0, %v3597
    %v3599 = vpop.f32.mrf.mxu0
    %v3600 = vadd.f32 0.0, %v3599
    %3601 = vdwg.mxu0
    %3602 = vmatprep.subr.mxu0 %v3530
    %3603 = vmatpush1.msra.mxu0 %v3529
    %3604 = vmatprep.subr.mxu0 %v3526
    %3605 = vmatpush1.msra.mxu0 %v3525
    %3606 = vmatprep.subr.mxu0 %v3522
    %3607 = vmatpush1.msra.mxu0 %v3521
    %3608 = vmatprep.subr.mxu0 %v3518
    %3609 = vmatpush1.msra.mxu0 %v3517
    %3610 = vmatprep.subr.mxu0 %v3514
    %3611 = vmatpush1.msra.mxu0 %v3513
    %3612 = vmatprep.subr.mxu0 %v3510
    %3613 = vmatpush1.msra.mxu0 %v3509
    %3614 = vmatprep.subr.mxu0 %v3506
    %3615 = vmatpush1.msra.mxu0 %v3505
    %3616 = vmatprep.subr.mxu0 %v3502
    %3617 = vmatpush1.msra.mxu0 %v3501
    %3618 = vmatprep.subr.mxu0 %v3498
    %3619 = vmatpush1.msra.mxu0 %v3497
    %3620 = vmatprep.subr.mxu0 %v3494
    %3621 = vmatpush1.msra.mxu0 %v3493
    %3622 = vmatprep.subr.mxu0 %v3490
    %3623 = vmatpush1.msra.mxu0 %v3489
    %3624 = vmatprep.subr.mxu0 %v3486
    %3625 = vmatpush1.msra.mxu0 %v3485
    %3626 = vmatprep.subr.mxu0 %v3482
    %3627 = vmatpush1.msra.mxu0 %v3481
    %3628 = vmatprep.subr.mxu0 %v3478
    %3629 = vmatpush1.msra.mxu0 %v3477
    %3630 = vmatprep.subr.mxu0 %v3474
    %3631 = vmatpush1.msra.mxu0 %v3473
    %3632 = vmatprep.subr.mxu0 %v3470
    %3633 = vmatpush1.msra.mxu0 %v3469
    %3634 = vmatprep.subr.mxu0 0.0
    %3635 = vmatpush2.msra.mxu0 0.0
    %3636 = vmatprep.subr.mxu0 0.0
    %3637 = vmatpush2.msra.mxu0 0.0
    %3638 = vmatprep.subr.mxu0 0.0
    %3639 = vmatpush2.msra.mxu0 0.0
    %3640 = vmatprep.subr.mxu0 0.0
    %3641 = vmatpush2.msra.mxu0 0.0
    %3642 = vmatprep.subr.mxu0 0.0
    %3643 = vmatpush2.msra.mxu0 0.0
    %3644 = vmatprep.subr.mxu0 0.0
    %3645 = vmatpush2.msra.mxu0 0.0
    %3646 = vmatprep.subr.mxu0 0.0
    %3647 = vmatpush2.msra.mxu0 0.0
    %3648 = vmatprep.subr.mxu0 0.0
    %3649 = vmatpush2.msra.mxu0 0.0
    %3650 = vmatprep.subr.mxu0 0.0
    %3651 = vmatpush2.msra.mxu0 0.0
    %3652 = vmatprep.subr.mxu0 0.0
    %3653 = vmatpush2.msra.mxu0 0.0
    %3654 = vmatprep.subr.mxu0 0.0
    %3655 = vmatpush2.msra.mxu0 0.0
    %3656 = vmatprep.subr.mxu0 0.0
    %3657 = vmatpush2.msra.mxu0 0.0
    %3658 = vmatprep.subr.mxu0 0.0
    %3659 = vmatpush2.msra.mxu0 0.0
    %3660 = vmatprep.subr.mxu0 0.0
    %3661 = vmatpush2.msra.mxu0 0.0
    %3662 = vmatprep.subr.mxu0 0.0
    %3663 = vmatpush2.msra.mxu0 0.0
    %3664 = vmatprep.subr.mxu0 0.0
    %3665 = vmatpush2.msra.mxu0 0.0
    %3666 = vmatprep.mubr.f32.mxu0 0.0
    %3667 = vmatmul.mubr.f32.gmra.mxu0 %v3466
    %v3668 = vpop.f32.mrf.mxu0
    %v3669 = vadd.f32 0.0, %v3668
    %v3670 = vpop.f32.mrf.mxu0
    %v3671 = vadd.f32 0.0, %v3670
    %3672 = vdwg.mxu0
    %3673 = vmatprep.subr.mxu0 %v3463
    %3674 = vmatpush1.msra.mxu0 %v3462
    %3675 = vmatprep.subr.mxu0 %v3459
    %3676 = vmatpush1.msra.mxu0 %v3458
    %3677 = vmatprep.subr.mxu0 %v3455
    %3678 = vmatpush1.msra.mxu0 %v3454
    %3679 = vmatprep.subr.mxu0 %v3451
    %3680 = vmatpush1.msra.mxu0 %v3450
    %3681 = vmatprep.subr.mxu0 %v3447
    %3682 = vmatpush1.msra.mxu0 %v3446
    %3683 = vmatprep.subr.mxu0 %v3443
    %3684 = vmatpush1.msra.mxu0 %v3442
    %3685 = vmatprep.subr.mxu0 %v3439
    %3686 = vmatpush1.msra.mxu0 %v3438
    %3687 = vmatprep.subr.mxu0 %v3435
    %3688 = vmatpush1.msra.mxu0 %v3434
    %3689 = vmatprep.subr.mxu0 %v3431
    %3690 = vmatpush1.msra.mxu0 %v3430
    %3691 = vmatprep.subr.mxu0 %v3427
    %3692 = vmatpush1.msra.mxu0 %v3426
    %3693 = vmatprep.subr.mxu0 %v3423
    %3694 = vmatpush1.msra.mxu0 %v3422
    %3695 = vmatprep.subr.mxu0 %v3419
    %3696 = vmatpush1.msra.mxu0 %v3418
    %3697 = vmatprep.subr.mxu0 %v3415
    %3698 = vmatpush1.msra.mxu0 %v3414
    %3699 = vmatprep.subr.mxu0 %v3411
    %3700 = vmatpush1.msra.mxu0 %v3410
    %3701 = vmatprep.subr.mxu0 %v3407
    %3702 = vmatpush1.msra.mxu0 %v3406
    %3703 = vmatprep.subr.mxu0 %v3403
    %3704 = vmatpush1.msra.mxu0 %v3402
    %3705 = vmatprep.subr.mxu0 0.0
    %3706 = vmatpush2.msra.mxu0 0.0
    %3707 = vmatprep.subr.mxu0 0.0
    %3708 = vmatpush2.msra.mxu0 0.0
    %3709 = vmatprep.subr.mxu0 0.0
    %3710 = vmatpush2.msra.mxu0 0.0
    %3711 = vmatprep.subr.mxu0 0.0
    %3712 = vmatpush2.msra.mxu0 0.0
    %3713 = vmatprep.subr.mxu0 0.0
    %3714 = vmatpush2.msra.mxu0 0.0
    %3715 = vmatprep.subr.mxu0 0.0
    %3716 = vmatpush2.msra.mxu0 0.0
    %3717 = vmatprep.subr.mxu0 0.0
    %3718 = vmatpush2.msra.mxu0 0.0
    %3719 = vmatprep.subr.mxu0 0.0
    %3720 = vmatpush2.msra.mxu0 0.0
    %3721 = vmatprep.subr.mxu0 0.0
    %3722 = vmatpush2.msra.mxu0 0.0
    %3723 = vmatprep.subr.mxu0 0.0
    %3724 = vmatpush2.msra.mxu0 0.0
    %3725 = vmatprep.subr.mxu0 0.0
    %3726 = vmatpush2.msra.mxu0 0.0
    %3727 = vmatprep.subr.mxu0 0.0
    %3728 = vmatpush2.msra.mxu0 0.0
    %3729 = vmatprep.subr.mxu0 0.0
    %3730 = vmatpush2.msra.mxu0 0.0
    %3731 = vmatprep.subr.mxu0 0.0
    %3732 = vmatpush2.msra.mxu0 0.0
    %3733 = vmatprep.subr.mxu0 0.0
    %3734 = vmatpush2.msra.mxu0 0.0
    %3735 = vmatprep.subr.mxu0 0.0
    %3736 = vmatpush2.msra.mxu0 0.0
    %3737 = vmatprep.mubr.f32.mxu0 0.0
    %3738 = vmatmul.mubr.f32.gmra.mxu0 %v3399
    %v3739 = vpop.f32.mrf.mxu0
    %v3740 = vadd.f32 %v3598, %v3739
    %v3741 = vpop.f32.mrf.mxu0
    %v3742 = vadd.f32 %v3600, %v3741
    %3743 = vdwg.mxu0
    %3744 = vmatprep.subr.mxu0 %v3465
    %3745 = vmatpush1.msra.mxu0 %v3464
    %3746 = vmatprep.subr.mxu0 %v3461
    %3747 = vmatpush1.msra.mxu0 %v3460
    %3748 = vmatprep.subr.mxu0 %v3457
    %3749 = vmatpush1.msra.mxu0 %v3456
    %3750 = vmatprep.subr.mxu0 %v3453
    %3751 = vmatpush1.msra.mxu0 %v3452
    %3752 = vmatprep.subr.mxu0 %v3449
    %3753 = vmatpush1.msra.mxu0 %v3448
    %3754 = vmatprep.subr.mxu0 %v3445
    %3755 = vmatpush1.msra.mxu0 %v3444
    %3756 = vmatprep.subr.mxu0 %v3441
    %3757 = vmatpush1.msra.mxu0 %v3440
    %3758 = vmatprep.subr.mxu0 %v3437
    %3759 = vmatpush1.msra.mxu0 %v3436
    %3760 = vmatprep.subr.mxu0 %v3433
    %3761 = vmatpush1.msra.mxu0 %v3432
    %3762 = vmatprep.subr.mxu0 %v3429
    %3763 = vmatpush1.msra.mxu0 %v3428
    %3764 = vmatprep.subr.mxu0 %v3425
    %3765 = vmatpush1.msra.mxu0 %v3424
    %3766 = vmatprep.subr.mxu0 %v3421
    %3767 = vmatpush1.msra.mxu0 %v3420
    %3768 = vmatprep.subr.mxu0 %v3417
    %3769 = vmatpush1.msra.mxu0 %v3416
    %3770 = vmatprep.subr.mxu0 %v3413
    %3771 = vmatpush1.msra.mxu0 %v3412
    %3772 = vmatprep.subr.mxu0 %v3409
    %3773 = vmatpush1.msra.mxu0 %v3408
    %3774 = vmatprep.subr.mxu0 %v3405
    %3775 = vmatpush1.msra.mxu0 %v3404
    %3776 = vmatprep.subr.mxu0 0.0
    %3777 = vmatpush2.msra.mxu0 0.0
    %3778 = vmatprep.subr.mxu0 0.0
    %3779 = vmatpush2.msra.mxu0 0.0
    %3780 = vmatprep.subr.mxu0 0.0
    %3781 = vmatpush2.msra.mxu0 0.0
    %3782 = vmatprep.subr.mxu0 0.0
    %3783 = vmatpush2.msra.mxu0 0.0
    %3784 = vmatprep.subr.mxu0 0.0
    %3785 = vmatpush2.msra.mxu0 0.0
    %3786 = vmatprep.subr.mxu0 0.0
    %3787 = vmatpush2.msra.mxu0 0.0
    %3788 = vmatprep.subr.mxu0 0.0
    %3789 = vmatpush2.msra.mxu0 0.0
    %3790 = vmatprep.subr.mxu0 0.0
    %3791 = vmatpush2.msra.mxu0 0.0
    %3792 = vmatprep.subr.mxu0 0.0
    %3793 = vmatpush2.msra.mxu0 0.0
    %3794 = vmatprep.subr.mxu0 0.0
    %3795 = vmatpush2.msra.mxu0 0.0
    %3796 = vmatprep.subr.mxu0 0.0
    %3797 = vmatpush2.msra.mxu0 0.0
    %3798 = vmatprep.subr.mxu0 0.0
    %3799 = vmatpush2.msra.mxu0 0.0
    %3800 = vmatprep.subr.mxu0 0.0
    %3801 = vmatpush2.msra.mxu0 0.0
    %3802 = vmatprep.subr.mxu0 0.0
    %3803 = vmatpush2.msra.mxu0 0.0
    %3804 = vmatprep.subr.mxu0 0.0
    %3805 = vmatpush2.msra.mxu0 0.0
    %3806 = vmatprep.subr.mxu0 0.0
    %3807 = vmatpush2.msra.mxu0 0.0
    %3808 = vmatprep.mubr.f32.mxu0 0.0
    %3809 = vmatmul.mubr.f32.gmra.mxu0 %v3399
    %v3810 = vpop.f32.mrf.mxu0
    %v3811 = vadd.f32 %v3669, %v3810
    %v3812 = vpop.f32.mrf.mxu0
    %v3813 = vadd.f32 %v3671, %v3812
    %3814 = vdwg.mxu0
    %v3815 = vld [vmem:[#allocation19] sm:$0xf]
    %v3817 = vlaneseq
    %v3818 = vshrl.u32 %v3817, 7
    %v3819 = vsub.s32 0, %v3818
    %v3820 = vrot.slane %v3815, %v3819
    %v3821 = vlaneseq
    %v3822 = vshrl.u32 %v3821, 7
    %v3823 = vsub.s32 1, %v3822
    %v3824 = vrot.slane %v3815, %v3823
    %v3825 = vlaneseq
    %v3826 = vshrl.u32 %v3825, 7
    %v3827 = vsub.s32 2, %v3826
    %v3828 = vrot.slane %v3815, %v3827
    %v3829 = vlaneseq
    %v3830 = vshrl.u32 %v3829, 7
    %v3831 = vsub.s32 3, %v3830
    %v3832 = vrot.slane %v3815, %v3831
    %v3837 = vadd.f32 %v3740, %v3820
    %v3838 = vadd.f32 %v3742, %v3824
    %v3839 = vadd.f32 %v3811, %v3828
    %v3840 = vadd.f32 %v3813, %v3832
    %v3841 = vmax.f32 %v3837, 0.0
    %v3842 = vmax.f32 %v3838, 0.0
    %v3843 = vmax.f32 %v3839, 0.0
    %v3844 = vmax.f32 %v3840, 0.0
    %v3845 = vld [vmem:[#allocation20] sm:$0xff]
    %v3846 = vld [vmem:[#allocation20 + $0x8] sm:$0xff]
    %v3847 = vld [vmem:[#allocation20 + $0x10] sm:$0xff]
    %v3848 = vld [vmem:[#allocation20 + $0x18] sm:$0xff]
    %v3849 = vld [vmem:[#allocation20 + $0x20] sm:$0xff]
    %v3850 = vld [vmem:[#allocation20 + $0x28] sm:$0xff]
    %v3851 = vld [vmem:[#allocation20 + $0x30] sm:$0xff]
    %v3852 = vld [vmem:[#allocation20 + $0x38] sm:$0xff]
    %v3853 = vld [vmem:[#allocation20 + $0x40] sm:$0xff]
    %v3854 = vld [vmem:[#allocation20 + $0x48] sm:$0xff]
    %v3855 = vld [vmem:[#allocation20 + $0x50] sm:$0xff]
    %v3856 = vld [vmem:[#allocation20 + $0x58] sm:$0xff]
    %v3857 = vld [vmem:[#allocation20 + $0x60] sm:$0xff]
    %v3858 = vld [vmem:[#allocation20 + $0x68] sm:$0xff]
    %v3859 = vld [vmem:[#allocation20 + $0x70] sm:$0xff]
    %v3860 = vld [vmem:[#allocation20 + $0x78] sm:$0xff]
    %v3861 = vld [vmem:[#allocation20 + $0x80] sm:$0xff]
    %v3862 = vld [vmem:[#allocation20 + $0x88] sm:$0xff]
    %v3863 = vld [vmem:[#allocation20 + $0x90] sm:$0xff]
    %v3864 = vld [vmem:[#allocation20 + $0x98] sm:$0xff]
    %v3865 = vld [vmem:[#allocation20 + $0xa0] sm:$0xff]
    %v3866 = vld [vmem:[#allocation20 + $0xa8] sm:$0xff]
    %v3867 = vld [vmem:[#allocation20 + $0xb0] sm:$0xff]
    %v3868 = vld [vmem:[#allocation20 + $0xb8] sm:$0xff]
    %v3869 = vld [vmem:[#allocation20 + $0xc0] sm:$0xff]
    %v3870 = vld [vmem:[#allocation20 + $0xc8] sm:$0xff]
    %v3871 = vld [vmem:[#allocation20 + $0xd0] sm:$0xff]
    %v3872 = vld [vmem:[#allocation20 + $0xd8] sm:$0xff]
    %v3873 = vld [vmem:[#allocation20 + $0xe0] sm:$0xff]
    %v3874 = vld [vmem:[#allocation20 + $0xe8] sm:$0xff]
    %v3875 = vld [vmem:[#allocation20 + $0xf0] sm:$0xff]
    %v3876 = vld [vmem:[#allocation20 + $0xf8] sm:$0xff]
    %v3877 = vld [vmem:[#allocation20 + $0x100] sm:$0xff]
    %v3878 = vld [vmem:[#allocation20 + $0x108] sm:$0xff]
    %v3879 = vld [vmem:[#allocation20 + $0x110] sm:$0xff]
    %v3880 = vld [vmem:[#allocation20 + $0x118] sm:$0xff]
    %v3881 = vld [vmem:[#allocation20 + $0x120] sm:$0xff]
    %v3882 = vld [vmem:[#allocation20 + $0x128] sm:$0xff]
    %v3883 = vld [vmem:[#allocation20 + $0x130] sm:$0xff]
    %v3884 = vld [vmem:[#allocation20 + $0x138] sm:$0xff]
    %v3885 = vld [vmem:[#allocation20 + $0x140] sm:$0xff]
    %v3886 = vld [vmem:[#allocation20 + $0x148] sm:$0xff]
    %v3887 = vld [vmem:[#allocation20 + $0x150] sm:$0xff]
    %v3888 = vld [vmem:[#allocation20 + $0x158] sm:$0xff]
    %v3889 = vld [vmem:[#allocation20 + $0x160] sm:$0xff]
    %v3890 = vld [vmem:[#allocation20 + $0x168] sm:$0xff]
    %v3891 = vld [vmem:[#allocation20 + $0x170] sm:$0xff]
    %v3892 = vld [vmem:[#allocation20 + $0x178] sm:$0xff]
    %v3893 = vld [vmem:[#allocation20 + $0x180] sm:$0xff]
    %v3894 = vld [vmem:[#allocation20 + $0x188] sm:$0xff]
    %v3895 = vld [vmem:[#allocation20 + $0x190] sm:$0xff]
    %v3896 = vld [vmem:[#allocation20 + $0x198] sm:$0xff]
    %v3897 = vld [vmem:[#allocation20 + $0x1a0] sm:$0xff]
    %v3898 = vld [vmem:[#allocation20 + $0x1a8] sm:$0xff]
    %v3899 = vld [vmem:[#allocation20 + $0x1b0] sm:$0xff]
    %v3900 = vld [vmem:[#allocation20 + $0x1b8] sm:$0xff]
    %v3901 = vld [vmem:[#allocation20 + $0x1c0] sm:$0xff]
    %v3902 = vld [vmem:[#allocation20 + $0x1c8] sm:$0xff]
    %v3903 = vld [vmem:[#allocation20 + $0x1d0] sm:$0xff]
    %v3904 = vld [vmem:[#allocation20 + $0x1d8] sm:$0xff]
    %v3905 = vld [vmem:[#allocation20 + $0x1e0] sm:$0xff]
    %v3906 = vld [vmem:[#allocation20 + $0x1e8] sm:$0xff]
    %v3907 = vld [vmem:[#allocation20 + $0x1f0] sm:$0xff]
    %v3908 = vld [vmem:[#allocation20 + $0x1f8] sm:$0xff]
    %v3909 = vld [vmem:[#allocation22] sm:$0x1]
    %v3911 = vlaneseq
    %v3912 = vshrl.u32 %v3911, 7
    %v3913 = vsub.s32 0, %v3912
    %v3914 = vrot.slane %v3909, %v3913
    %3916 = vmatprep.subr.mxu0 0.0
    %3917 = vmatpush1.msra.mxu0 %v3860
    %3918 = vmatprep.subr.mxu0 0.0
    %3919 = vmatpush1.msra.mxu0 %v3859
    %3920 = vmatprep.subr.mxu0 0.0
    %3921 = vmatpush1.msra.mxu0 %v3858
    %3922 = vmatprep.subr.mxu0 0.0
    %3923 = vmatpush1.msra.mxu0 %v3857
    %3924 = vmatprep.subr.mxu0 0.0
    %3925 = vmatpush1.msra.mxu0 %v3856
    %3926 = vmatprep.subr.mxu0 0.0
    %3927 = vmatpush1.msra.mxu0 %v3855
    %3928 = vmatprep.subr.mxu0 0.0
    %3929 = vmatpush1.msra.mxu0 %v3854
    %3930 = vmatprep.subr.mxu0 0.0
    %3931 = vmatpush1.msra.mxu0 %v3853
    %3932 = vmatprep.subr.mxu0 0.0
    %3933 = vmatpush1.msra.mxu0 %v3852
    %3934 = vmatprep.subr.mxu0 0.0
    %3935 = vmatpush1.msra.mxu0 %v3851
    %3936 = vmatprep.subr.mxu0 0.0
    %3937 = vmatpush1.msra.mxu0 %v3850
    %3938 = vmatprep.subr.mxu0 0.0
    %3939 = vmatpush1.msra.mxu0 %v3849
    %3940 = vmatprep.subr.mxu0 0.0
    %3941 = vmatpush1.msra.mxu0 %v3848
    %3942 = vmatprep.subr.mxu0 0.0
    %3943 = vmatpush1.msra.mxu0 %v3847
    %3944 = vmatprep.subr.mxu0 0.0
    %3945 = vmatpush1.msra.mxu0 %v3846
    %3946 = vmatprep.subr.mxu0 0.0
    %3947 = vmatpush1.msra.mxu0 %v3845
    %3948 = vmatprep.subr.mxu0 0.0
    %3949 = vmatpush2.msra.mxu0 %v3876
    %3950 = vmatprep.subr.mxu0 0.0
    %3951 = vmatpush2.msra.mxu0 %v3875
    %3952 = vmatprep.subr.mxu0 0.0
    %3953 = vmatpush2.msra.mxu0 %v3874
    %3954 = vmatprep.subr.mxu0 0.0
    %3955 = vmatpush2.msra.mxu0 %v3873
    %3956 = vmatprep.subr.mxu0 0.0
    %3957 = vmatpush2.msra.mxu0 %v3872
    %3958 = vmatprep.subr.mxu0 0.0
    %3959 = vmatpush2.msra.mxu0 %v3871
    %3960 = vmatprep.subr.mxu0 0.0
    %3961 = vmatpush2.msra.mxu0 %v3870
    %3962 = vmatprep.subr.mxu0 0.0
    %3963 = vmatpush2.msra.mxu0 %v3869
    %3964 = vmatprep.subr.mxu0 0.0
    %3965 = vmatpush2.msra.mxu0 %v3868
    %3966 = vmatprep.subr.mxu0 0.0
    %3967 = vmatpush2.msra.mxu0 %v3867
    %3968 = vmatprep.subr.mxu0 0.0
    %3969 = vmatpush2.msra.mxu0 %v3866
    %3970 = vmatprep.subr.mxu0 0.0
    %3971 = vmatpush2.msra.mxu0 %v3865
    %3972 = vmatprep.subr.mxu0 0.0
    %3973 = vmatpush2.msra.mxu0 %v3864
    %3974 = vmatprep.subr.mxu0 0.0
    %3975 = vmatpush2.msra.mxu0 %v3863
    %3976 = vmatprep.subr.mxu0 0.0
    %3977 = vmatpush2.msra.mxu0 %v3862
    %3978 = vmatprep.subr.mxu0 0.0
    %3979 = vmatpush2.msra.mxu0 %v3861
    %3980 = vmatprep.mubr.f32.mxu0 %v3842
    %3981 = vmatmul.mubr.f32.gmra.mxu0 %v3841
    %v3982 = vpop.f32.mrf.mxu0
    %v3983 = vadd.f32 %v3914, %v3982
    %v3984 = vpop.f32.mrf.mxu0
    %3985 = vdwg.mxu0
    %3986 = vmatprep.subr.mxu0 0.0
    %3987 = vmatpush1.msra.mxu0 %v3892
    %3988 = vmatprep.subr.mxu0 0.0
    %3989 = vmatpush1.msra.mxu0 %v3891
    %3990 = vmatprep.subr.mxu0 0.0
    %3991 = vmatpush1.msra.mxu0 %v3890
    %3992 = vmatprep.subr.mxu0 0.0
    %3993 = vmatpush1.msra.mxu0 %v3889
    %3994 = vmatprep.subr.mxu0 0.0
    %3995 = vmatpush1.msra.mxu0 %v3888
    %3996 = vmatprep.subr.mxu0 0.0
    %3997 = vmatpush1.msra.mxu0 %v3887
    %3998 = vmatprep.subr.mxu0 0.0
    %3999 = vmatpush1.msra.mxu0 %v3886
    %4000 = vmatprep.subr.mxu0 0.0
    %4001 = vmatpush1.msra.mxu0 %v3885
    %4002 = vmatprep.subr.mxu0 0.0
    %4003 = vmatpush1.msra.mxu0 %v3884
    %4004 = vmatprep.subr.mxu0 0.0
    %4005 = vmatpush1.msra.mxu0 %v3883
    %4006 = vmatprep.subr.mxu0 0.0
    %4007 = vmatpush1.msra.mxu0 %v3882
    %4008 = vmatprep.subr.mxu0 0.0
    %4009 = vmatpush1.msra.mxu0 %v3881
    %4010 = vmatprep.subr.mxu0 0.0
    %4011 = vmatpush1.msra.mxu0 %v3880
    %4012 = vmatprep.subr.mxu0 0.0
    %4013 = vmatpush1.msra.mxu0 %v3879
    %4014 = vmatprep.subr.mxu0 0.0
    %4015 = vmatpush1.msra.mxu0 %v3878
    %4016 = vmatprep.subr.mxu0 0.0
    %4017 = vmatpush1.msra.mxu0 %v3877
    %4018 = vmatprep.subr.mxu0 0.0
    %4019 = vmatpush2.msra.mxu0 %v3908
    %4020 = vmatprep.subr.mxu0 0.0
    %4021 = vmatpush2.msra.mxu0 %v3907
    %4022 = vmatprep.subr.mxu0 0.0
    %4023 = vmatpush2.msra.mxu0 %v3906
    %4024 = vmatprep.subr.mxu0 0.0
    %4025 = vmatpush2.msra.mxu0 %v3905
    %4026 = vmatprep.subr.mxu0 0.0
    %4027 = vmatpush2.msra.mxu0 %v3904
    %4028 = vmatprep.subr.mxu0 0.0
    %4029 = vmatpush2.msra.mxu0 %v3903
    %4030 = vmatprep.subr.mxu0 0.0
    %4031 = vmatpush2.msra.mxu0 %v3902
    %4032 = vmatprep.subr.mxu0 0.0
    %4033 = vmatpush2.msra.mxu0 %v3901
    %4034 = vmatprep.subr.mxu0 0.0
    %4035 = vmatpush2.msra.mxu0 %v3900
    %4036 = vmatprep.subr.mxu0 0.0
    %4037 = vmatpush2.msra.mxu0 %v3899
    %4038 = vmatprep.subr.mxu0 0.0
    %4039 = vmatpush2.msra.mxu0 %v3898
    %4040 = vmatprep.subr.mxu0 0.0
    %4041 = vmatpush2.msra.mxu0 %v3897
    %4042 = vmatprep.subr.mxu0 0.0
    %4043 = vmatpush2.msra.mxu0 %v3896
    %4044 = vmatprep.subr.mxu0 0.0
    %4045 = vmatpush2.msra.mxu0 %v3895
    %4046 = vmatprep.subr.mxu0 0.0
    %4047 = vmatpush2.msra.mxu0 %v3894
    %4048 = vmatprep.subr.mxu0 0.0
    %4049 = vmatpush2.msra.mxu0 %v3893
    %4050 = vmatprep.mubr.f32.mxu0 %v3844
    %4051 = vmatmul.mubr.f32.gmra.mxu0 %v3843
    %v4052 = vpop.f32.mrf.mxu0
    %v4053 = vadd.f32 %v3983, %v4052
    %v4054 = vpop.f32.mrf.mxu0
    %4055 = vdwg.mxu0
    %4056 = vst [vmem:[#allocation23] sm:$0xff] %v4053
    // Predicated region
    $region106: #{tpu_custom_call.1} parent=1 // pred_check
      _
    $region107: #{tpu_custom_call.1} parent=1 // pred_check_branch
      %4058 = sbr.rel (0) target = $region109
    $region108: #{tpu_custom_call.1} parent=1 // pred_region
      %s4060 = ssub.s32 128, 128
      %4061 = vsyncadd [#allocation4], %s4060
      %s4063 = sshll.u32 [#allocation23], 4
      %s4064 = int_to_ptr.vmem [resolvable:$true] %s4063
      %4066 = dma.vmem_to_hbm [thread:$0]  %s4064, 128, %s13, [#allocation4]
    $region109: #{tpu_custom_call.1} parent=1 // pred_fallthru
      _
    // Predicated region
    $region110: #{tpu_custom_call.1} parent=1 // pred_check
      _
    $region111: #{tpu_custom_call.1} parent=1 // pred_check_branch
      %4068 = sbr.rel (0) target = $region113
    $region112: #{tpu_custom_call.1} parent=1 // pred_region
      %4069 = dma.done [#allocation4], 128
    $region113: #{tpu_custom_call.1} parent=1 // pred_fallthru
      _
    %4070 = vsyncpa [#allocation3], 1
    %4071 = vsyncpa [#allocation6], 1
    %4072 = vsyncpa [#allocation9], 1
    %4073 = vsyncpa [#allocation12], 1
    %4074 = vsyncpa [#allocation15], 1
    %4075 = vsyncpa [#allocation18], 1
    %4076 = vsyncpa [#allocation21], 1
    %4077 = vsyncpa [#allocation4], 1

</llo_original>
